<compile_context>
chip_gen: v6e
topology: v6e:2x2x1
jax: 0.10.0
libtpu: 0.0.40
codegen_flags: <defaults>
</compile_context>

<pallas_src>
import functools

import jax
import jax.numpy as jnp
from jax.experimental import pallas as pl
from jax.experimental.pallas import tpu as pltpu


def _default_vmem_limit():
    """Per-generation scoped-VMEM budget: ~3/4 of physical, capped at 96 MiB."""
    try:
        cap = int(pltpu.get_tpu_info().vmem_capacity_bytes)
    except Exception:
        cap = 64 * 1024 * 1024          # conservative fallback (v7x physical)
    return max(32 * 1024 * 1024, min((cap * 3) // 4, 96 * 1024 * 1024))


_VMEM_LIMIT = _default_vmem_limit()


# ----------------------------------------------------------------------------
# Pallas kernels
# ----------------------------------------------------------------------------
def _conv_block_kernel(p_ref, w_ref, shift_ref, o_ref):
    """One row-tile of fused conv3x3('same') + folded-BN + ReLU + maxpool2x2.

    p_ref:     (4, TM, 9*Cin) bf16 im2col patches; leading dim = pooling phase,
               the 9 conv taps are folded into the K dim.
    w_ref:     (9*Cin, Cout) bf16 conv weights with the BN scale pre-folded in.
    shift_ref: (1, Cout) f32 folded BN shift (beta - mean * scale).
    o_ref:     (TM, Cout) f32 pooled output rows (ordered (n, i, j)).
    """
    w = w_ref[...]
    y = jnp.dot(p_ref[0], w, preferred_element_type=jnp.float32)
    y = jnp.maximum(y, jnp.dot(p_ref[1], w, preferred_element_type=jnp.float32))
    y = jnp.maximum(y, jnp.dot(p_ref[2], w, preferred_element_type=jnp.float32))
    y = jnp.maximum(y, jnp.dot(p_ref[3], w, preferred_element_type=jnp.float32))
    # Pool first, affine + ReLU second (exact: relu(z + shift) monotone in z).
    o_ref[...] = jnp.maximum(y + shift_ref[...], 0.0)


def _final_block_head_kernel(p_ref, w_ref, shift_ref, fcw_ref, fcb_ref, o_ref,
                             *, s_valid):
    """Last conv block + AdaptiveAvgPool(1) + Flatten + Dropout(eval) + FC,
    one sample per grid step.

    p_ref:     (4, Sp, 9*Cin) bf16 patches for this sample (rows >= s_valid are
               zero padding added so the block shape is sublane-aligned).
    w_ref:     (9*Cin, Cout) bf16 conv weights with BN scale folded in.
    shift_ref: (1, Cout) f32 folded BN shift.
    fcw_ref:   (Cout, KP) f32 fc weight zero-padded to lane-dense KP.
    fcb_ref:   (1, KP)   f32 fc bias (zero-padded).
    o_ref:     (1, 1, KP) f32 logits row for this sample (lane-dense store).
    """
    w = w_ref[...]
    y = jnp.dot(p_ref[0], w, preferred_element_type=jnp.float32)
    y = jnp.maximum(y, jnp.dot(p_ref[1], w, preferred_element_type=jnp.float32))
    y = jnp.maximum(y, jnp.dot(p_ref[2], w, preferred_element_type=jnp.float32))
    y = jnp.maximum(y, jnp.dot(p_ref[3], w, preferred_element_type=jnp.float32))
    pooled = jnp.maximum(y + shift_ref[...], 0.0)                  # (Sp, Cout)
    # Adaptive average pool over the s_valid real rows (dropout = identity in eval).
    feat = jnp.sum(pooled[:s_valid, :], axis=0, keepdims=True) * (1.0 / s_valid)
    o_ref[0] = jnp.dot(feat, fcw_ref[...],
                       preferred_element_type=jnp.float32) + fcb_ref[...]


# ----------------------------------------------------------------------------
# Wrappers (glue: padding, phase/tap patch extraction, weight folding)
# ----------------------------------------------------------------------------
def _pool_phase_patches(x_nhwc):
    """(N, H, W, Cin) -> (4, M, 9*Cin) bf16 patch bank.

    patches[a*2+b, m, tap*Cin + c] = x_pad[n, 2i + a + ky, 2j + b + kx, c]
    with tap = ky*3 + kx and m = (n*Hh + i)*Wh + j (pooled output index).
    Cast to bf16 BEFORE pad/slice so all im2col traffic is half-width.
    """
    N, H, W, Cin = x_nhwc.shape
    Hh, Wh = H // 2, W // 2
    M = N * Hh * Wh
    xb = x_nhwc.astype(jnp.bfloat16)
    xp = jnp.pad(xb, ((0, 0), (1, 1), (1, 1), (0, 0)))      # 'same' padding
    phases = []
    for a in range(2):
        for b in range(2):
            taps = [xp[:, a + ky:a + ky + 2 * Hh:2, b + kx:b + kx + 2 * Wh:2, :]
                    for ky in range(3) for kx in range(3)]
            t = jnp.stack(taps, axis=3)                      # (N, Hh, Wh, 9, Cin)
            phases.append(t.reshape(M, 9 * Cin))
    return jnp.stack(phases, axis=0), M, Hh, Wh              # (4, M, 9*Cin) bf16


def _fold_weights(w_hwio, scale):
    """Fold BN scale into the conv weights: (3,3,Cin,Cout) -> (9*Cin, Cout) bf16."""
    cout = w_hwio.shape[-1]
    k9 = w_hwio.shape[0] * w_hwio.shape[1] * w_hwio.shape[2]
    return (w_hwio.reshape(k9, cout) * scale.reshape(1, cout)).astype(jnp.bfloat16)


def _num_row_tiles(m, min_rows=128, max_tiles=8):
    """Largest tile count <= max_tiles with tiles that are >= min_rows and 8-aligned."""
    best = 1
    for t in range(2, max_tiles + 1):
        if m % t == 0 and (m // t) % 8 == 0 and (m // t) >= min_rows:
            best = t
    return best


def conv_block(x_nhwc, w_hwio, scale, shift):
    """(N, H, W, Cin) -> (N, H//2, W//2, Cout)."""
    N, H, W, Cin = x_nhwc.shape
    Cout = w_hwio.shape[-1]
    p, M, Hh, Wh = _pool_phase_patches(x_nhwc)
    K9 = 9 * Cin
    w2 = _fold_weights(w_hwio, scale)

    T = _num_row_tiles(M)
    tm = M // T

    flops = 2 * 4 * M * K9 * Cout
    bytes_accessed = p.size * 2 + w2.size * 2 + Cout * 4 + M * Cout * 4

    # Conv-block output minor dim is kept at Cout (16/32/64) rather than padded
    # to 128: padding would inflate HBM store traffic up to 8x for early blocks.
    # TODO(synk): benchmark the (tm/f, 128) lane-dense relayout store on v5e.
    out = pl.pallas_call(
        _conv_block_kernel,
        out_shape=jax.ShapeDtypeStruct((M, Cout), jnp.float32),
        grid=(T,),
        in_specs=[
            pl.BlockSpec((4, tm, K9), lambda i: (0, i, 0)),
            pl.BlockSpec((K9, Cout), lambda i: (0, 0)),
            pl.BlockSpec((1, Cout), lambda i: (0, 0)),
        ],
        out_specs=pl.BlockSpec((tm, Cout), lambda i: (i, 0)),
        compiler_params=pltpu.CompilerParams(
            dimension_semantics=("parallel",),
            vmem_limit_bytes=_VMEM_LIMIT),
        cost_estimate=pl.CostEstimate(flops=flops, transcendentals=0,
                                      bytes_accessed=bytes_accessed),
    )(p, w2, shift.reshape(1, Cout))
    return out.reshape(N, Hh, Wh, Cout)


def final_block_and_head(x_nhwc, w_hwio, scale, shift, fc_w, fc_b):
    """Last conv block + avgpool + dropout(eval) + fc: (N,H,W,Cin) -> (N, K)."""
    N, H, W, Cin = x_nhwc.shape
    Cout = w_hwio.shape[-1]
    K = fc_w.shape[-1]
    KP = max(128, ((K + 127) // 128) * 128)          # lane-dense fc output width
    p, M, Hh, Wh = _pool_phase_patches(x_nhwc)
    K9 = 9 * Cin
    S = Hh * Wh
    Sp = ((S + 7) // 8) * 8                          # sublane-aligned rows/sample

    # Per-sample patch bank: (4, N*Sp, K9); rows s >= S within each sample are zero.
    p4 = p.reshape(4, N, S, K9)
    if Sp != S:
        p4 = jnp.pad(p4, ((0, 0), (0, 0), (0, Sp - S), (0, 0)))
    pg = p4.reshape(4, N * Sp, K9)

    w2 = _fold_weights(w_hwio, scale)
    fcw = jnp.zeros((Cout, KP), jnp.float32).at[:, :K].set(fc_w)
    fcb = jnp.zeros((1, KP), jnp.float32).at[:, :K].set(fc_b.reshape(1, K))

    flops = 2 * 4 * N * Sp * K9 * Cout + 2 * N * Cout * KP
    bytes_accessed = (pg.size * 2 + w2.size * 2
                      + (Cout + Cout * KP + KP + N * KP) * 4)

    kernel = functools.partial(_final_block_head_kernel, s_valid=S)
    out = pl.pallas_call(
        kernel,
        out_shape=jax.ShapeDtypeStruct((N, 1, KP), jnp.float32),
        grid=(N,),
        in_specs=[
            pl.BlockSpec((4, Sp, K9), lambda n: (0, n, 0)),
            pl.BlockSpec((K9, Cout), lambda n: (0, 0)),
            pl.BlockSpec((1, Cout), lambda n: (0, 0)),
            pl.BlockSpec((Cout, KP), lambda n: (0, 0)),
            pl.BlockSpec((1, KP), lambda n: (0, 0)),
        ],
        out_specs=pl.BlockSpec((1, 1, KP), lambda n: (n, 0, 0)),
        compiler_params=pltpu.CompilerParams(
            dimension_semantics=("parallel",),
            vmem_limit_bytes=_VMEM_LIMIT),
        cost_estimate=pl.CostEstimate(flops=flops, transcendentals=0,
                                      bytes_accessed=bytes_accessed),
    )(pg, w2, shift.reshape(1, Cout), fcw, fcb)
    return out.reshape(N, KP)[:, :K]


@jax.jit
def custom_cnn_forward(x_nchw, params):
    # layout: input is NCHW (PyTorch); transpose once to NHWC for the kernels.
    x = jnp.transpose(x_nchw, (0, 2, 3, 1)).astype(jnp.float32)
    blocks = params["blocks"]
    for (w, scale, shift) in blocks[:-1]:
        x = conv_block(x, w, scale, shift)
    w, scale, shift = blocks[-1]
    return final_block_and_head(x, w, scale, shift, params["fc_w"], params["fc_b"])


# ----------------------------------------------------------------------------
# Deterministic parameter initialization (mirrors CustomCNN._initialize_weights)
# ----------------------------------------------------------------------------
def init_params(key, num_conv_blocks=4, first_layer_filters=16,
                filter_increase_factor=2.0, num_classes=1):
    eps = 1e-5
    blocks = []
    cin, cout = 3, int(first_layer_filters)
    for i in range(int(num_conv_blocks)):
        key, kw = jax.random.split(key)
        # kaiming_normal_, mode='fan_out', nonlinearity='relu': std = sqrt(2/(Cout*kh*kw))
        std = (2.0 / (cout * 3 * 3)) ** 0.5
        w = std * jax.random.normal(kw, (3, 3, cin, cout), jnp.float32)      # HWIO
        gamma = jnp.ones((cout,), jnp.float32)
        beta = jnp.zeros((cout,), jnp.float32)
        running_mean = jnp.zeros((cout,), jnp.float32)
        running_var = jnp.ones((cout,), jnp.float32)
        scale = gamma / jnp.sqrt(running_var + eps)                           # folded BN (eval)
        shift = beta - running_mean * scale
        blocks.append((w, scale, shift))
        cin = cout
        if i < int(num_conv_blocks) - 1:
            cout = max(int(cout * filter_increase_factor), 1)
    key, kf = jax.random.split(key)
    fc_w = 0.01 * jax.random.normal(kf, (cin, num_classes), jnp.float32)      # normal(0, 0.01)
    fc_b = jnp.zeros((num_classes,), jnp.float32)
    return {"blocks": blocks, "fc_w": fc_w, "fc_b": fc_b}


# ----------------------------------------------------------------------------
# Pure-JAX reference (matches the kernel's scale-folded bf16 / f32-accum convs)
# ----------------------------------------------------------------------------
def reference_forward(x_nchw, params):
    x = jnp.transpose(x_nchw, (0, 2, 3, 1)).astype(jnp.float32)
    for (w, scale, shift) in params["blocks"]:
        wf = (w * scale.reshape(1, 1, 1, -1)).astype(jnp.bfloat16)
        y = jax.lax.conv_general_dilated(
            x.astype(jnp.bfloat16), wf,
            window_strides=(1, 1), padding="SAME",
            dimension_numbers=("NHWC", "HWIO", "NHWC"),
            preferred_element_type=jnp.float32)
        y = jnp.maximum(y + shift.reshape(1, 1, 1, -1), 0.0)
        x = jax.lax.reduce_window(y, -jnp.inf, jax.lax.max,
                                  (1, 2, 2, 1), (1, 2, 2, 1), "VALID")
    feat = jnp.mean(x, axis=(1, 2))
    return jnp.dot(feat, params["fc_w"],
                   preferred_element_type=jnp.float32) + params["fc_b"].reshape(1, -1)


# ----------------------------------------------------------------------------
if __name__ == "__main__":
    key = jax.random.PRNGKey(0)
    pkey, xkey = jax.random.split(key)

    # Small shapes: batch=2, in_channels=3 (required by the module), spatial=32
    # so 4 pooling stages leave a 2x2 map and the avg-pool is a real reduction.
    params = init_params(pkey, num_conv_blocks=4, first_layer_filters=16,
                         filter_increase_factor=2.0, num_classes=1)
    x = jax.random.normal(xkey, (2, 3, 32, 32), jnp.float32)

    out = jax.block_until_ready(custom_cnn_forward(x, params))
    assert out.shape == (2, 1), out.shape

    ref = reference_forward(x, params)
    if not bool(jnp.allclose(out, ref, rtol=2e-2, atol=1e-2)):
        raise AssertionError(f"kernel/reference mismatch:\n{out}\nvs\n{ref}")

    print("KERNEL_OK")
</pallas_src>

<mosaic_0001>
module attributes {stable_mosaic.version = 11 : i64} {
  func.func @_conv_block_kernel(%arg0: i32, %arg1: memref<4x128x27xbf16, #tpu.memory_space<vmem>>, %arg2: memref<27x16xbf16, #tpu.memory_space<vmem>>, %arg3: memref<1x16xf32, #tpu.memory_space<vmem>>, %arg4: memref<128x16xf32, #tpu.memory_space<vmem>>) attributes {dimension_semantics = [#tpu.dimension_semantics<parallel>], iteration_bounds = array<i64: 4>, scalar_prefetch = 0 : i64, scratch_operands = 0 : i64, tpu.core_type = #tpu.core_type<tc>, window_params = [{transform_indices = @transform_0, window_bounds = array<i64: 4, 128, 27>}, {pipeline_mode = #tpu.pipeline_mode<synchronous>, transform_indices = @transform_1, window_bounds = array<i64: 27, 16>}, {pipeline_mode = #tpu.pipeline_mode<synchronous>, transform_indices = @transform_2, window_bounds = array<i64: 1, 16>}, {transform_indices = @transform_3, window_bounds = array<i64: 128, 16>}]} {
    %c0 = arith.constant 0 : index
    %c0_0 = arith.constant 0 : index
    %0 = vector.load %arg2[%c0, %c0_0] : memref<27x16xbf16, #tpu.memory_space<vmem>>, vector<27x16xbf16>
    %c0_1 = arith.constant 0 : index
    %c0_2 = arith.constant 0 : index
    %c0_3 = arith.constant 0 : index
    %1 = vector.load %arg1[%c0_1, %c0_2, %c0_3] : memref<4x128x27xbf16, #tpu.memory_space<vmem>>, vector<1x128x27xbf16>
    %2 = vector.shape_cast %1 : vector<1x128x27xbf16> to vector<128x27xbf16>
    %cst = arith.constant dense<0.000000e+00> : vector<128x16xf32>
    %3 = tpu.matmul %2, %0, %cst {dimension_numbers = #tpu.dot_dimension_numbers<[1], [0], [0], [1], [0, 0, 1, 1], [], []>} : vector<128x27xbf16>, vector<27x16xbf16>, vector<128x16xf32> -> vector<128x16xf32>
    %c1 = arith.constant 1 : index
    %c0_4 = arith.constant 0 : index
    %c0_5 = arith.constant 0 : index
    %4 = vector.load %arg1[%c1, %c0_4, %c0_5] : memref<4x128x27xbf16, #tpu.memory_space<vmem>>, vector<1x128x27xbf16>
    %5 = vector.shape_cast %4 : vector<1x128x27xbf16> to vector<128x27xbf16>
    %cst_6 = arith.constant dense<0.000000e+00> : vector<128x16xf32>
    %6 = tpu.matmul %5, %0, %cst_6 {dimension_numbers = #tpu.dot_dimension_numbers<[1], [0], [0], [1], [0, 0, 1, 1], [], []>} : vector<128x27xbf16>, vector<27x16xbf16>, vector<128x16xf32> -> vector<128x16xf32>
    %7 = arith.maximumf %3, %6 : vector<128x16xf32>
    %c2 = arith.constant 2 : index
    %c0_7 = arith.constant 0 : index
    %c0_8 = arith.constant 0 : index
    %8 = vector.load %arg1[%c2, %c0_7, %c0_8] : memref<4x128x27xbf16, #tpu.memory_space<vmem>>, vector<1x128x27xbf16>
    %9 = vector.shape_cast %8 : vector<1x128x27xbf16> to vector<128x27xbf16>
    %cst_9 = arith.constant dense<0.000000e+00> : vector<128x16xf32>
    %10 = tpu.matmul %9, %0, %cst_9 {dimension_numbers = #tpu.dot_dimension_numbers<[1], [0], [0], [1], [0, 0, 1, 1], [], []>} : vector<128x27xbf16>, vector<27x16xbf16>, vector<128x16xf32> -> vector<128x16xf32>
    %11 = arith.maximumf %7, %10 : vector<128x16xf32>
    %c3 = arith.constant 3 : index
    %c0_10 = arith.constant 0 : index
    %c0_11 = arith.constant 0 : index
    %12 = vector.load %arg1[%c3, %c0_10, %c0_11] : memref<4x128x27xbf16, #tpu.memory_space<vmem>>, vector<1x128x27xbf16>
    %13 = vector.shape_cast %12 : vector<1x128x27xbf16> to vector<128x27xbf16>
    %cst_12 = arith.constant dense<0.000000e+00> : vector<128x16xf32>
    %14 = tpu.matmul %13, %0, %cst_12 {dimension_numbers = #tpu.dot_dimension_numbers<[1], [0], [0], [1], [0, 0, 1, 1], [], []>} : vector<128x27xbf16>, vector<27x16xbf16>, vector<128x16xf32> -> vector<128x16xf32>
    %15 = arith.maximumf %11, %14 : vector<128x16xf32>
    %c0_13 = arith.constant 0 : index
    %c0_14 = arith.constant 0 : index
    %16 = vector.load %arg3[%c0_13, %c0_14] : memref<1x16xf32, #tpu.memory_space<vmem>>, vector<1x16xf32>
    %17 = vector.broadcast %16 : vector<1x16xf32> to vector<128x16xf32>
    %18 = arith.addf %15, %17 : vector<128x16xf32>
    %cst_15 = arith.constant 0.000000e+00 : f32
    %19 = vector.broadcast %cst_15 : f32 to vector<128x16xf32>
    %20 = arith.maximumf %18, %19 : vector<128x16xf32>
    %c0_16 = arith.constant 0 : index
    %c0_17 = arith.constant 0 : index
    %21 = vector.load %arg4[%c0_16, %c0_17] : memref<128x16xf32, #tpu.memory_space<vmem>>, vector<128x16xf32>
    tpu.vector_store %arg4[%c0_16, %c0_17], %20 {strides = array<i32>} : memref<128x16xf32, #tpu.memory_space<vmem>>, vector<128x16xf32>,
    return
  }
  func.func @transform_0(%arg0: i32) -> (i32, i32, i32) {
    %c0_i32 = arith.constant 0 : i32
    %c0_i32_0 = arith.constant 0 : i32
    %c0_i32_1 = arith.constant 0 : i32
    return %c0_i32, %arg0, %c0_i32_0 : i32, i32, i32
  }
  func.func @transform_1(%arg0: i32) -> (i32, i32) {
    %c0_i32 = arith.constant 0 : i32
    %c0_i32_0 = arith.constant 0 : i32
    %c0_i32_1 = arith.constant 0 : i32
    return %c0_i32, %c0_i32_0 : i32, i32
  }
  func.func @transform_2(%arg0: i32) -> (i32, i32) {
    %c0_i32 = arith.constant 0 : i32
    %c0_i32_0 = arith.constant 0 : i32
    %c0_i32_1 = arith.constant 0 : i32
    return %c0_i32, %c0_i32_0 : i32, i32
  }
  func.func @transform_3(%arg0: i32) -> (i32, i32) {
    %c0_i32 = arith.constant 0 : i32
    %c0_i32_0 = arith.constant 0 : i32
    return %arg0, %c0_i32 : i32, i32
  }
}

module attributes {stable_mosaic.version = 11 : i64} {
  func.func @_conv_block_kernel(%arg0: i32, %arg1: memref<4x128x144xbf16, #tpu.memory_space<vmem>>, %arg2: memref<144x32xbf16, #tpu.memory_space<vmem>>, %arg3: memref<1x32xf32, #tpu.memory_space<vmem>>, %arg4: memref<128x32xf32, #tpu.memory_space<vmem>>) attributes {dimension_semantics = [#tpu.dimension_semantics<parallel>], iteration_bounds = array<i64: 1>, scalar_prefetch = 0 : i64, scratch_operands = 0 : i64, tpu.core_type = #tpu.core_type<tc>, window_params = [{transform_indices = @transform_0, window_bounds = array<i64: 4, 128, 144>}, {pipeline_mode = #tpu.pipeline_mode<synchronous>, transform_indices = @transform_1, window_bounds = array<i64: 144, 32>}, {pipeline_mode = #tpu.pipeline_mode<synchronous>, transform_indices = @transform_2, window_bounds = array<i64: 1, 32>}, {transform_indices = @transform_3, window_bounds = array<i64: 128, 32>}]} {
    %c0 = arith.constant 0 : index
    %c0_0 = arith.constant 0 : index
    %0 = vector.load %arg2[%c0, %c0_0] : memref<144x32xbf16, #tpu.memory_space<vmem>>, vector<144x32xbf16>
    %c0_1 = arith.constant 0 : index
    %c0_2 = arith.constant 0 : index
    %c0_3 = arith.constant 0 : index
    %1 = vector.load %arg1[%c0_1, %c0_2, %c0_3] : memref<4x128x144xbf16, #tpu.memory_space<vmem>>, vector<1x128x144xbf16>
    %2 = vector.shape_cast %1 : vector<1x128x144xbf16> to vector<128x144xbf16>
    %cst = arith.constant dense<0.000000e+00> : vector<128x32xf32>
    %3 = tpu.matmul %2, %0, %cst {dimension_numbers = #tpu.dot_dimension_numbers<[1], [0], [0], [1], [0, 0, 1, 1], [], []>} : vector<128x144xbf16>, vector<144x32xbf16>, vector<128x32xf32> -> vector<128x32xf32>
    %c1 = arith.constant 1 : index
    %c0_4 = arith.constant 0 : index
    %c0_5 = arith.constant 0 : index
    %4 = vector.load %arg1[%c1, %c0_4, %c0_5] : memref<4x128x144xbf16, #tpu.memory_space<vmem>>, vector<1x128x144xbf16>
    %5 = vector.shape_cast %4 : vector<1x128x144xbf16> to vector<128x144xbf16>
    %cst_6 = arith.constant dense<0.000000e+00> : vector<128x32xf32>
    %6 = tpu.matmul %5, %0, %cst_6 {dimension_numbers = #tpu.dot_dimension_numbers<[1], [0], [0], [1], [0, 0, 1, 1], [], []>} : vector<128x144xbf16>, vector<144x32xbf16>, vector<128x32xf32> -> vector<128x32xf32>
    %7 = arith.maximumf %3, %6 : vector<128x32xf32>
    %c2 = arith.constant 2 : index
    %c0_7 = arith.constant 0 : index
    %c0_8 = arith.constant 0 : index
    %8 = vector.load %arg1[%c2, %c0_7, %c0_8] : memref<4x128x144xbf16, #tpu.memory_space<vmem>>, vector<1x128x144xbf16>
    %9 = vector.shape_cast %8 : vector<1x128x144xbf16> to vector<128x144xbf16>
    %cst_9 = arith.constant dense<0.000000e+00> : vector<128x32xf32>
    %10 = tpu.matmul %9, %0, %cst_9 {dimension_numbers = #tpu.dot_dimension_numbers<[1], [0], [0], [1], [0, 0, 1, 1], [], []>} : vector<128x144xbf16>, vector<144x32xbf16>, vector<128x32xf32> -> vector<128x32xf32>
    %11 = arith.maximumf %7, %10 : vector<128x32xf32>
    %c3 = arith.constant 3 : index
    %c0_10 = arith.constant 0 : index
    %c0_11 = arith.constant 0 : index
    %12 = vector.load %arg1[%c3, %c0_10, %c0_11] : memref<4x128x144xbf16, #tpu.memory_space<vmem>>, vector<1x128x144xbf16>
    %13 = vector.shape_cast %12 : vector<1x128x144xbf16> to vector<128x144xbf16>
    %cst_12 = arith.constant dense<0.000000e+00> : vector<128x32xf32>
    %14 = tpu.matmul %13, %0, %cst_12 {dimension_numbers = #tpu.dot_dimension_numbers<[1], [0], [0], [1], [0, 0, 1, 1], [], []>} : vector<128x144xbf16>, vector<144x32xbf16>, vector<128x32xf32> -> vector<128x32xf32>
    %15 = arith.maximumf %11, %14 : vector<128x32xf32>
    %c0_13 = arith.constant 0 : index
    %c0_14 = arith.constant 0 : index
    %16 = vector.load %arg3[%c0_13, %c0_14] : memref<1x32xf32, #tpu.memory_space<vmem>>, vector<1x32xf32>
    %17 = vector.broadcast %16 : vector<1x32xf32> to vector<128x32xf32>
    %18 = arith.addf %15, %17 : vector<128x32xf32>
    %cst_15 = arith.constant 0.000000e+00 : f32
    %19 = vector.broadcast %cst_15 : f32 to vector<128x32xf32>
    %20 = arith.maximumf %18, %19 : vector<128x32xf32>
    %c0_16 = arith.constant 0 : index
    %c0_17 = arith.constant 0 : index
    %21 = vector.load %arg4[%c0_16, %c0_17] : memref<128x32xf32, #tpu.memory_space<vmem>>, vector<128x32xf32>
    tpu.vector_store %arg4[%c0_16, %c0_17], %20 {strides = array<i32>} : memref<128x32xf32, #tpu.memory_space<vmem>>, vector<128x32xf32>,
    return
  }
  func.func @transform_0(%arg0: i32) -> (i32, i32, i32) {
    %c0_i32 = arith.constant 0 : i32
    %c0_i32_0 = arith.constant 0 : i32
    %c0_i32_1 = arith.constant 0 : i32
    return %c0_i32, %arg0, %c0_i32_0 : i32, i32, i32
  }
  func.func @transform_1(%arg0: i32) -> (i32, i32) {
    %c0_i32 = arith.constant 0 : i32
    %c0_i32_0 = arith.constant 0 : i32
    %c0_i32_1 = arith.constant 0 : i32
    return %c0_i32, %c0_i32_0 : i32, i32
  }
  func.func @transform_2(%arg0: i32) -> (i32, i32) {
    %c0_i32 = arith.constant 0 : i32
    %c0_i32_0 = arith.constant 0 : i32
    %c0_i32_1 = arith.constant 0 : i32
    return %c0_i32, %c0_i32_0 : i32, i32
  }
  func.func @transform_3(%arg0: i32) -> (i32, i32) {
    %c0_i32 = arith.constant 0 : i32
    %c0_i32_0 = arith.constant 0 : i32
    return %arg0, %c0_i32 : i32, i32
  }
}

module attributes {stable_mosaic.version = 11 : i64} {
  func.func @_conv_block_kernel(%arg0: i32, %arg1: memref<4x32x288xbf16, #tpu.memory_space<vmem>>, %arg2: memref<288x64xbf16, #tpu.memory_space<vmem>>, %arg3: memref<1x64xf32, #tpu.memory_space<vmem>>, %arg4: memref<32x64xf32, #tpu.memory_space<vmem>>) attributes {dimension_semantics = [#tpu.dimension_semantics<parallel>], iteration_bounds = array<i64: 1>, scalar_prefetch = 0 : i64, scratch_operands = 0 : i64, tpu.core_type = #tpu.core_type<tc>, window_params = [{transform_indices = @transform_0, window_bounds = array<i64: 4, 32, 288>}, {pipeline_mode = #tpu.pipeline_mode<synchronous>, transform_indices = @transform_1, window_bounds = array<i64: 288, 64>}, {pipeline_mode = #tpu.pipeline_mode<synchronous>, transform_indices = @transform_2, window_bounds = array<i64: 1, 64>}, {transform_indices = @transform_3, window_bounds = array<i64: 32, 64>}]} {
    %c0 = arith.constant 0 : index
    %c0_0 = arith.constant 0 : index
    %0 = vector.load %arg2[%c0, %c0_0] : memref<288x64xbf16, #tpu.memory_space<vmem>>, vector<288x64xbf16>
    %c0_1 = arith.constant 0 : index
    %c0_2 = arith.constant 0 : index
    %c0_3 = arith.constant 0 : index
    %1 = vector.load %arg1[%c0_1, %c0_2, %c0_3] : memref<4x32x288xbf16, #tpu.memory_space<vmem>>, vector<1x32x288xbf16>
    %2 = vector.shape_cast %1 : vector<1x32x288xbf16> to vector<32x288xbf16>
    %cst = arith.constant dense<0.000000e+00> : vector<32x64xf32>
    %3 = tpu.matmul %2, %0, %cst {dimension_numbers = #tpu.dot_dimension_numbers<[1], [0], [0], [1], [0, 0, 1, 1], [], []>} : vector<32x288xbf16>, vector<288x64xbf16>, vector<32x64xf32> -> vector<32x64xf32>
    %c1 = arith.constant 1 : index
    %c0_4 = arith.constant 0 : index
    %c0_5 = arith.constant 0 : index
    %4 = vector.load %arg1[%c1, %c0_4, %c0_5] : memref<4x32x288xbf16, #tpu.memory_space<vmem>>, vector<1x32x288xbf16>
    %5 = vector.shape_cast %4 : vector<1x32x288xbf16> to vector<32x288xbf16>
    %cst_6 = arith.constant dense<0.000000e+00> : vector<32x64xf32>
    %6 = tpu.matmul %5, %0, %cst_6 {dimension_numbers = #tpu.dot_dimension_numbers<[1], [0], [0], [1], [0, 0, 1, 1], [], []>} : vector<32x288xbf16>, vector<288x64xbf16>, vector<32x64xf32> -> vector<32x64xf32>
    %7 = arith.maximumf %3, %6 : vector<32x64xf32>
    %c2 = arith.constant 2 : index
    %c0_7 = arith.constant 0 : index
    %c0_8 = arith.constant 0 : index
    %8 = vector.load %arg1[%c2, %c0_7, %c0_8] : memref<4x32x288xbf16, #tpu.memory_space<vmem>>, vector<1x32x288xbf16>
    %9 = vector.shape_cast %8 : vector<1x32x288xbf16> to vector<32x288xbf16>
    %cst_9 = arith.constant dense<0.000000e+00> : vector<32x64xf32>
    %10 = tpu.matmul %9, %0, %cst_9 {dimension_numbers = #tpu.dot_dimension_numbers<[1], [0], [0], [1], [0, 0, 1, 1], [], []>} : vector<32x288xbf16>, vector<288x64xbf16>, vector<32x64xf32> -> vector<32x64xf32>
    %11 = arith.maximumf %7, %10 : vector<32x64xf32>
    %c3 = arith.constant 3 : index
    %c0_10 = arith.constant 0 : index
    %c0_11 = arith.constant 0 : index
    %12 = vector.load %arg1[%c3, %c0_10, %c0_11] : memref<4x32x288xbf16, #tpu.memory_space<vmem>>, vector<1x32x288xbf16>
    %13 = vector.shape_cast %12 : vector<1x32x288xbf16> to vector<32x288xbf16>
    %cst_12 = arith.constant dense<0.000000e+00> : vector<32x64xf32>
    %14 = tpu.matmul %13, %0, %cst_12 {dimension_numbers = #tpu.dot_dimension_numbers<[1], [0], [0], [1], [0, 0, 1, 1], [], []>} : vector<32x288xbf16>, vector<288x64xbf16>, vector<32x64xf32> -> vector<32x64xf32>
    %15 = arith.maximumf %11, %14 : vector<32x64xf32>
    %c0_13 = arith.constant 0 : index
    %c0_14 = arith.constant 0 : index
    %16 = vector.load %arg3[%c0_13, %c0_14] : memref<1x64xf32, #tpu.memory_space<vmem>>, vector<1x64xf32>
    %17 = vector.broadcast %16 : vector<1x64xf32> to vector<32x64xf32>
    %18 = arith.addf %15, %17 : vector<32x64xf32>
    %cst_15 = arith.constant 0.000000e+00 : f32
    %19 = vector.broadcast %cst_15 : f32 to vector<32x64xf32>
    %20 = arith.maximumf %18, %19 : vector<32x64xf32>
    %c0_16 = arith.constant 0 : index
    %c0_17 = arith.constant 0 : index
    %21 = vector.load %arg4[%c0_16, %c0_17] : memref<32x64xf32, #tpu.memory_space<vmem>>, vector<32x64xf32>
    tpu.vector_store %arg4[%c0_16, %c0_17], %20 {strides = array<i32>} : memref<32x64xf32, #tpu.memory_space<vmem>>, vector<32x64xf32>,
    return
  }
  func.func @transform_0(%arg0: i32) -> (i32, i32, i32) {
    %c0_i32 = arith.constant 0 : i32
    %c0_i32_0 = arith.constant 0 : i32
    %c0_i32_1 = arith.constant 0 : i32
    return %c0_i32, %arg0, %c0_i32_0 : i32, i32, i32
  }
  func.func @transform_1(%arg0: i32) -> (i32, i32) {
    %c0_i32 = arith.constant 0 : i32
    %c0_i32_0 = arith.constant 0 : i32
    %c0_i32_1 = arith.constant 0 : i32
    return %c0_i32, %c0_i32_0 : i32, i32
  }
  func.func @transform_2(%arg0: i32) -> (i32, i32) {
    %c0_i32 = arith.constant 0 : i32
    %c0_i32_0 = arith.constant 0 : i32
    %c0_i32_1 = arith.constant 0 : i32
    return %c0_i32, %c0_i32_0 : i32, i32
  }
  func.func @transform_3(%arg0: i32) -> (i32, i32) {
    %c0_i32 = arith.constant 0 : i32
    %c0_i32_0 = arith.constant 0 : i32
    return %arg0, %c0_i32 : i32, i32
  }
}

module attributes {stable_mosaic.version = 11 : i64} {
  func.func @_final_block_head_kernel(%arg0: i32, %arg1: memref<4x8x576xbf16, #tpu.memory_space<vmem>>, %arg2: memref<576x128xbf16, #tpu.memory_space<vmem>>, %arg3: memref<1x128xf32, #tpu.memory_space<vmem>>, %arg4: memref<128x128xf32, #tpu.memory_space<vmem>>, %arg5: memref<1x128xf32, #tpu.memory_space<vmem>>, %arg6: memref<1x1x128xf32, #tpu.memory_space<vmem>>) attributes {dimension_semantics = [#tpu.dimension_semantics<parallel>], iteration_bounds = array<i64: 2>, scalar_prefetch = 0 : i64, scratch_operands = 0 : i64, tpu.core_type = #tpu.core_type<tc>, window_params = [{transform_indices = @transform_0, window_bounds = array<i64: 4, 8, 576>}, {pipeline_mode = #tpu.pipeline_mode<synchronous>, transform_indices = @transform_1, window_bounds = array<i64: 576, 128>}, {pipeline_mode = #tpu.pipeline_mode<synchronous>, transform_indices = @transform_2, window_bounds = array<i64: 1, 128>}, {pipeline_mode = #tpu.pipeline_mode<synchronous>, transform_indices = @transform_3, window_bounds = array<i64: 128, 128>}, {pipeline_mode = #tpu.pipeline_mode<synchronous>, transform_indices = @transform_4, window_bounds = array<i64: 1, 128>}, {transform_indices = @transform_5, window_bounds = array<i64: 1, 1, 128>}]} {
    %c0 = arith.constant 0 : index
    %c0_0 = arith.constant 0 : index
    %0 = vector.load %arg2[%c0, %c0_0] : memref<576x128xbf16, #tpu.memory_space<vmem>>, vector<576x128xbf16>
    %c0_1 = arith.constant 0 : index
    %c0_2 = arith.constant 0 : index
    %c0_3 = arith.constant 0 : index
    %1 = vector.load %arg1[%c0_1, %c0_2, %c0_3] : memref<4x8x576xbf16, #tpu.memory_space<vmem>>, vector<1x8x576xbf16>
    %2 = vector.shape_cast %1 : vector<1x8x576xbf16> to vector<8x576xbf16>
    %cst = arith.constant dense<0.000000e+00> : vector<8x128xf32>
    %3 = tpu.matmul %2, %0, %cst {dimension_numbers = #tpu.dot_dimension_numbers<[1], [0], [0], [1], [0, 0, 1, 1], [], []>} : vector<8x576xbf16>, vector<576x128xbf16>, vector<8x128xf32> -> vector<8x128xf32>
    %c1 = arith.constant 1 : index
    %c0_4 = arith.constant 0 : index
    %c0_5 = arith.constant 0 : index
    %4 = vector.load %arg1[%c1, %c0_4, %c0_5] : memref<4x8x576xbf16, #tpu.memory_space<vmem>>, vector<1x8x576xbf16>
    %5 = vector.shape_cast %4 : vector<1x8x576xbf16> to vector<8x576xbf16>
    %cst_6 = arith.constant dense<0.000000e+00> : vector<8x128xf32>
    %6 = tpu.matmul %5, %0, %cst_6 {dimension_numbers = #tpu.dot_dimension_numbers<[1], [0], [0], [1], [0, 0, 1, 1], [], []>} : vector<8x576xbf16>, vector<576x128xbf16>, vector<8x128xf32> -> vector<8x128xf32>
    %7 = arith.maximumf %3, %6 : vector<8x128xf32>
    %c2 = arith.constant 2 : index
    %c0_7 = arith.constant 0 : index
    %c0_8 = arith.constant 0 : index
    %8 = vector.load %arg1[%c2, %c0_7, %c0_8] : memref<4x8x576xbf16, #tpu.memory_space<vmem>>, vector<1x8x576xbf16>
    %9 = vector.shape_cast %8 : vector<1x8x576xbf16> to vector<8x576xbf16>
    %cst_9 = arith.constant dense<0.000000e+00> : vector<8x128xf32>
    %10 = tpu.matmul %9, %0, %cst_9 {dimension_numbers = #tpu.dot_dimension_numbers<[1], [0], [0], [1], [0, 0, 1, 1], [], []>} : vector<8x576xbf16>, vector<576x128xbf16>, vector<8x128xf32> -> vector<8x128xf32>
    %11 = arith.maximumf %7, %10 : vector<8x128xf32>
    %c3 = arith.constant 3 : index
    %c0_10 = arith.constant 0 : index
    %c0_11 = arith.constant 0 : index
    %12 = vector.load %arg1[%c3, %c0_10, %c0_11] : memref<4x8x576xbf16, #tpu.memory_space<vmem>>, vector<1x8x576xbf16>
    %13 = vector.shape_cast %12 : vector<1x8x576xbf16> to vector<8x576xbf16>
    %cst_12 = arith.constant dense<0.000000e+00> : vector<8x128xf32>
    %14 = tpu.matmul %13, %0, %cst_12 {dimension_numbers = #tpu.dot_dimension_numbers<[1], [0], [0], [1], [0, 0, 1, 1], [], []>} : vector<8x576xbf16>, vector<576x128xbf16>, vector<8x128xf32> -> vector<8x128xf32>
    %15 = arith.maximumf %11, %14 : vector<8x128xf32>
    %c0_13 = arith.constant 0 : index
    %c0_14 = arith.constant 0 : index
    %16 = vector.load %arg3[%c0_13, %c0_14] : memref<1x128xf32, #tpu.memory_space<vmem>>, vector<1x128xf32>
    %17 = vector.broadcast %16 : vector<1x128xf32> to vector<8x128xf32>
    %18 = arith.addf %15, %17 : vector<8x128xf32>
    %cst_15 = arith.constant 0.000000e+00 : f32
    %19 = vector.broadcast %cst_15 : f32 to vector<8x128xf32>
    %20 = arith.maximumf %18, %19 : vector<8x128xf32>
    %21 = vector.extract_strided_slice %20 {offsets = [0, 0], sizes = [4, 128], strides = [1, 1]} : vector<8x128xf32> to vector<4x128xf32>
    %cst_16 = arith.constant dense<0.000000e+00> : vector<128xf32>
    %22 = vector.multi_reduction <add>, %21, %cst_16 [0] : vector<4x128xf32> to vector<128xf32>
    %23 = vector.shape_cast %22 : vector<128xf32> to vector<1x128xf32>
    %cst_17 = arith.constant 2.500000e-01 : f32
    %24 = vector.broadcast %cst_17 : f32 to vector<1x128xf32>
    %25 = arith.mulf %23, %24 : vector<1x128xf32>
    %c0_18 = arith.constant 0 : index
    %c0_19 = arith.constant 0 : index
    %26 = vector.load %arg4[%c0_18, %c0_19] : memref<128x128xf32, #tpu.memory_space<vmem>>, vector<128x128xf32>
    %cst_20 = arith.constant dense<0.000000e+00> : vector<1x128xf32>
    %27 = tpu.matmul %25, %26, %cst_20 {dimension_numbers = #tpu.dot_dimension_numbers<[1], [0], [0], [1], [0, 0, 1, 1], [], []>} : vector<1x128xf32>, vector<128x128xf32>, vector<1x128xf32> -> vector<1x128xf32>
    %c0_21 = arith.constant 0 : index
    %c0_22 = arith.constant 0 : index
    %28 = vector.load %arg5[%c0_21, %c0_22] : memref<1x128xf32, #tpu.memory_space<vmem>>, vector<1x128xf32>
    %29 = arith.addf %27, %28 : vector<1x128xf32>
    %c0_23 = arith.constant 0 : index
    %c0_24 = arith.constant 0 : index
    %c0_25 = arith.constant 0 : index
    %30 = vector.load %arg6[%c0_23, %c0_24, %c0_25] : memref<1x1x128xf32, #tpu.memory_space<vmem>>, vector<1x1x128xf32>
    %31 = vector.shape_cast %30 : vector<1x1x128xf32> to vector<1x128xf32>
    %32 = vector.shape_cast %29 : vector<1x128xf32> to vector<1x1x128xf32>
    tpu.vector_store %arg6[%c0_23, %c0_24, %c0_25], %32 {strides = array<i32>} : memref<1x1x128xf32, #tpu.memory_space<vmem>>, vector<1x1x128xf32>,
    return
  }
  func.func @transform_0(%arg0: i32) -> (i32, i32, i32) {
    %c0_i32 = arith.constant 0 : i32
    %c0_i32_0 = arith.constant 0 : i32
    %c0_i32_1 = arith.constant 0 : i32
    return %c0_i32, %arg0, %c0_i32_0 : i32, i32, i32
  }
  func.func @transform_1(%arg0: i32) -> (i32, i32) {
    %c0_i32 = arith.constant 0 : i32
    %c0_i32_0 = arith.constant 0 : i32
    %c0_i32_1 = arith.constant 0 : i32
    return %c0_i32, %c0_i32_0 : i32, i32
  }
  func.func @transform_2(%arg0: i32) -> (i32, i32) {
    %c0_i32 = arith.constant 0 : i32
    %c0_i32_0 = arith.constant 0 : i32
    %c0_i32_1 = arith.constant 0 : i32
    return %c0_i32, %c0_i32_0 : i32, i32
  }
  func.func @transform_3(%arg0: i32) -> (i32, i32) {
    %c0_i32 = arith.constant 0 : i32
    %c0_i32_0 = arith.constant 0 : i32
    %c0_i32_1 = arith.constant 0 : i32
    return %c0_i32, %c0_i32_0 : i32, i32
  }
  func.func @transform_4(%arg0: i32) -> (i32, i32) {
    %c0_i32 = arith.constant 0 : i32
    %c0_i32_0 = arith.constant 0 : i32
    %c0_i32_1 = arith.constant 0 : i32
    return %c0_i32, %c0_i32_0 : i32, i32
  }
  func.func @transform_5(%arg0: i32) -> (i32, i32, i32) {
    %c0_i32 = arith.constant 0 : i32
    %c0_i32_0 = arith.constant 0 : i32
    %c0_i32_1 = arith.constant 0 : i32
    return %arg0, %c0_i32, %c0_i32_0 : i32, i32, i32
  }
}

</mosaic_0001>

<llo_original>
// kernel: custom_cnn_forward.4
$region0: #{custom_cnn_forward.4}
  #allocation0 [shape = 'u32[]', space=smem, size = 0x4, offset = 0x4, fixed_abs, tag = 'smem constant byte address 0x4 - core index']
  #allocation1 [shape = 'u32[144,128]{1,0:T(1,128)}', space=vmem, size = 0x12000, scoped, tag = 'internal scratch']
  %s0 = inlined_call_operand.vmem [shape: bf16[4,512,27], index: 0, kind: input, shape index: {}]
  %s1 = inlined_call_operand.vmem [shape: bf16[27,16], index: 1, kind: input, shape index: {}]
  %s2 = inlined_call_operand.vmem [shape: f32[1,16], index: 2, kind: input, shape index: {}]
  %s3 = inlined_call_operand.vmem [shape: f32[512,16], index: 3, kind: output, shape index: {}]
  %s4 = sld [smem:[#allocation0]]
  $region86: #{custom_cnn_forward.4} parent=0
    _
  %s6 = ssub.s32 1, %s4
  %s7 = scalar_select 0, %s6, %s4
  $region1: #{custom_cnn_forward.4} parent=0
    #allocation2 [shape = 'u8[262144]{0}', space=vmem, size = 0x40000, scoped, tag = 'input window, operand 0']
    loop: start=0, step=1, limit=6
    $region2: #{custom_cnn_forward.4} parent=1 // loop_pre_header
      _
    $region3: #{custom_cnn_forward.4} parent=1 // loop_header
      %s9 = sphi 0, %s13
      %p10 = scmp.ge.s32.totalorder %s9, 6
      %s19 = sphi 0, %s21
      %s22 = sphi 0, %s19
      %s23 = sphi 0, %s22
      %s39 = sphi 0, %s23
      %s43 = sphi 0, %s43
      %s45 = sphi 0, %s43
      %s46 = sphi 0, %s45
      %s60 = sphi 0, %s46
      %s64 = sphi 0, %s64
      %s66 = sphi 0, %s64
      %s67 = sphi 0, %s66
      %s81 = sphi 0, %s67
      %s87 = sphi 0, %s89
      %s90 = sphi 0, %s87
      %s91 = sphi 0, %s90
      %s107 = sphi 0, %s91
    $region4: #{custom_cnn_forward.4} parent=1 // loop_header_branch
      %12 = sbr.rel (%p10) target = $region8
    $region5: #{custom_cnn_forward.4} parent=1 // loop_body
      %s14 = ssub.s32 %s9, 1
      %s15 = ssub.s32 %s9, 2
      %s16 = sadd.s32 %s9, 1
      %s17 = ssub.s32 %s9, %s16
      %p18 = scmp.eq.s32.totalorder %s17, 0
      %s20 = sadd.s32 %s19, 1
      %s21 = scalar_select %p18, %s19, %s20
      %p24 = pneg %p18
      %p25 = scmp.eq.s32.totalorder %s9, 3
      %p26 = por %p24, %p25
      %p27 = scmp.ne.s32.totalorder %s19, %s22
      %p28 = scmp.eq.s32.totalorder %s9, 0
      %p29 = por %p27, %p28
      %p30 = scmp.ne.s32.totalorder %s19, %s22
      %p31 = scmp.eq.s32.totalorder %s14, 3
      %p32 = por %p30, %p31
      %p33 = scmp.ne.s32.totalorder %s22, %s23
      %p34 = scmp.eq.s32.totalorder %s14, 0
      %p35 = por %p33, %p34
      %p36 = scmp.ne.s32.totalorder %s22, %s23
      %p37 = scmp.eq.s32.totalorder %s15, 3
      %p38 = por %p36, %p37
      %p40 = scmp.ne.s32.totalorder %s23, %s39
      %p41 = scmp.eq.s32.totalorder %s15, 0
      %p42 = por %p40, %p41
      %s44 = sadd.s32 %s43, 1
      %p47 = scmp.eq.s32.totalorder %s9, 3
      %p48 = scmp.ne.s32.totalorder %s43, %s45
      %p49 = scmp.eq.s32.totalorder %s9, 0
      %p50 = por %p48, %p49
      %p51 = scmp.ne.s32.totalorder %s43, %s45
      %p52 = scmp.eq.s32.totalorder %s14, 3
      %p53 = por %p51, %p52
      %p54 = scmp.ne.s32.totalorder %s45, %s46
      %p55 = scmp.eq.s32.totalorder %s14, 0
      %p56 = por %p54, %p55
      %p57 = scmp.ne.s32.totalorder %s45, %s46
      %p58 = scmp.eq.s32.totalorder %s15, 3
      %p59 = por %p57, %p58
      %p61 = scmp.ne.s32.totalorder %s46, %s60
      %p62 = scmp.eq.s32.totalorder %s15, 0
      %p63 = por %p61, %p62
      %s65 = sadd.s32 %s64, 1
      %p68 = scmp.eq.s32.totalorder %s9, 3
      %p69 = scmp.ne.s32.totalorder %s64, %s66
      %p70 = scmp.eq.s32.totalorder %s9, 0
      %p71 = por %p69, %p70
      %p72 = scmp.ne.s32.totalorder %s64, %s66
      %p73 = scmp.eq.s32.totalorder %s14, 3
      %p74 = por %p72, %p73
      %p75 = scmp.ne.s32.totalorder %s66, %s67
      %p76 = scmp.eq.s32.totalorder %s14, 0
      %p77 = por %p75, %p76
      %p78 = scmp.ne.s32.totalorder %s66, %s67
      %p79 = scmp.eq.s32.totalorder %s15, 3
      %p80 = por %p78, %p79
      %p82 = scmp.ne.s32.totalorder %s67, %s81
      %p83 = scmp.eq.s32.totalorder %s15, 0
      %p84 = por %p82, %p83
      %s85 = ssub.s32 %s9, %s16
      %p86 = scmp.eq.s32.totalorder %s85, 0
      %s88 = sadd.s32 %s87, 1
      %s89 = scalar_select %p86, %s87, %s88
      %p92 = pneg %p86
      %p93 = scmp.eq.s32.totalorder %s9, 3
      %p94 = por %p92, %p93
      %p95 = scmp.ne.s32.totalorder %s87, %s90
      %p96 = scmp.eq.s32.totalorder %s9, 0
      %p97 = por %p95, %p96
      %p98 = scmp.ne.s32.totalorder %s87, %s90
      %p99 = scmp.eq.s32.totalorder %s14, 3
      %p100 = por %p98, %p99
      %p101 = scmp.ne.s32.totalorder %s90, %s91
      %p102 = scmp.eq.s32.totalorder %s14, 0
      %p103 = por %p101, %p102
      %p104 = scmp.ne.s32.totalorder %s90, %s91
      %p105 = scmp.eq.s32.totalorder %s15, 3
      %p106 = por %p104, %p105
      %p108 = scmp.ne.s32.totalorder %s91, %s107
      %p109 = scmp.eq.s32.totalorder %s15, 0
      %p110 = por %p108, %p109
      %p111 = scmp.le.s32.totalorder 1, %s9
      %p112 = scmp.lt.s32.totalorder %s9, 5
      %p113 = pnand %p111, %p112
      %p114 = pneg %p113
      // Predicated region
      $region9: #{custom_cnn_forward.4} parent=5 // pred_check
        _
      $region10: #{custom_cnn_forward.4} parent=5 // pred_check_branch
        %116 = sbr.rel (%p113) target = $region12
      $region11: #{custom_cnn_forward.4} parent=5 // pred_region
        %s117 = ssub.s32 %s9, 1
        // Predicated region
        $region13: #{custom_cnn_forward.4} parent=11 // pred_check
          %p118 = pneg %p56
        $region14: #{custom_cnn_forward.4} parent=11 // pred_check_branch
          %120 = sbr.rel (%p118) target = $region16
        $region15: #{custom_cnn_forward.4} parent=11 // pred_region
          _
        $region16: #{custom_cnn_forward.4} parent=11 // pred_fallthru
          _
        // Predicated region
        $region17: #{custom_cnn_forward.4} parent=11 // pred_check
          %p121 = pneg %p77
        $region18: #{custom_cnn_forward.4} parent=11 // pred_check_branch
          %123 = sbr.rel (%p121) target = $region20
        $region19: #{custom_cnn_forward.4} parent=11 // pred_region
          _
        $region20: #{custom_cnn_forward.4} parent=11 // pred_fallthru
          _
      $region12: #{custom_cnn_forward.4} parent=5 // pred_fallthru
        _
      %p124 = scmp.lt.s32.totalorder %s9, 4
      // Predicated region
      $region21: #{custom_cnn_forward.4} parent=5 // pred_check
        %p125 = pneg %p124
      $region22: #{custom_cnn_forward.4} parent=5 // pred_check_branch
        %127 = sbr.rel (%p125) target = $region24
      $region23: #{custom_cnn_forward.4} parent=5 // pred_region
        // Predicated region
        $region25: #{custom_cnn_forward.4} parent=23 // pred_check
          %p128 = pneg %p29
        $region26: #{custom_cnn_forward.4} parent=23 // pred_check_branch
          %130 = sbr.rel (%p128) target = $region28
        $region27: #{custom_cnn_forward.4} parent=23 // pred_region
          %s131 = sand.u32 %s19, 1
          %s132 = sand.u32 %s19, 1
          %s133 = smul.addr %s132, 256
          %s134 = scalar_lea.vmem [#allocation2], %s133
          %s135 = smul.u32 16, %s9
          %s136 = smul.addr %s135, 4
          %s137 = scalar_lea.vmem %s0, %s136
          // Predicated region
          $region29: #{custom_cnn_forward.4} parent=27 // pred_check
            _
          $region30: #{custom_cnn_forward.4} parent=27 // pred_check_branch
            %139 = sbr.rel (0) target = $region32
          $region31: #{custom_cnn_forward.4} parent=27 // pred_region
            // Predicated region
            $region33: #{custom_cnn_forward.4} parent=31 // pred_check
              _
            $region34: #{custom_cnn_forward.4} parent=31 // pred_check_branch
              %141 = sbr.rel target = $region36
            $region35: #{custom_cnn_forward.4} parent=31 // pred_region
              // Predicated region
              $region48: #{custom_cnn_forward.4} parent=35 // pred_check
                _
              $region49: #{custom_cnn_forward.4} parent=35 // pred_check_branch
                %283 = sbr.rel (0) target = $region51
              $region50: #{custom_cnn_forward.4} parent=35 // pred_region
                loop: start=0, step=1, limit=1
                $region52: #{custom_cnn_forward.4} parent=50 // loop_pre_header
                  _
                $region53: #{custom_cnn_forward.4} parent=50 // loop_header
                  %s285 = sphi 0, %s289
                  %p286 = scmp.ge.s32.totalorder %s285, 1
                  %s290 = sphi %s137, %s137
                  %s291 = sphi %s134, %s134
                $region54: #{custom_cnn_forward.4} parent=50 // loop_header_branch
                  %288 = sbr.rel (%p286) target = $region58
                $region55: #{custom_cnn_forward.4} parent=50 // loop_body
                  _
                $region56: #{custom_cnn_forward.4} parent=50 // loop_footer
                  %s289 = sadd.s32 1, %s285
                $region57: #{custom_cnn_forward.4} parent=50 // loop_footer_branch
                  %284 = sbr.rel target = $region53
                $region58: #{custom_cnn_forward.4} parent=50 // loop_exit
                  _
                %s293 = ssub.s32 16, 1
                loop: start=0, step=1, limit=1
                $region59: #{custom_cnn_forward.4} parent=50 // loop_pre_header
                  _
                $region60: #{custom_cnn_forward.4} parent=50 // loop_header
                  %s295 = sphi 0, %s299
                  %p296 = scmp.ge.s32.totalorder %s295, 1
                  %s300 = sphi %s137, %s137
                  %s301 = sphi %s134, %s134
                $region61: #{custom_cnn_forward.4} parent=50 // loop_header_branch
                  %298 = sbr.rel (%p296) target = $region65
                $region62: #{custom_cnn_forward.4} parent=50 // loop_body
                  %v302 = vld [vmem:[%s300] sm:%s293]
                  %303 = vst [vmem:[%s301] sm:%s293] %v302
                  %v304 = vld [vmem:[%s300 + $0x4] sm:%s293]
                  %305 = vst [vmem:[%s301 + $0x4] sm:%s293] %v304
                  %v306 = vld [vmem:[%s300 + $0x8] sm:%s293]
                  %307 = vst [vmem:[%s301 + $0x8] sm:%s293] %v306
                  %v308 = vld [vmem:[%s300 + $0xc] sm:%s293]
                  %309 = vst [vmem:[%s301 + $0xc] sm:%s293] %v308
                  %v310 = vld [vmem:[%s300 + $0x10] sm:%s293]
                  %311 = vst [vmem:[%s301 + $0x10] sm:%s293] %v310
                  %v312 = vld [vmem:[%s300 + $0x14] sm:%s293]
                  %313 = vst [vmem:[%s301 + $0x14] sm:%s293] %v312
                  %v314 = vld [vmem:[%s300 + $0x18] sm:%s293]
                  %315 = vst [vmem:[%s301 + $0x18] sm:%s293] %v314
                  %v316 = vld [vmem:[%s300 + $0x1c] sm:%s293]
                  %317 = vst [vmem:[%s301 + $0x1c] sm:%s293] %v316
                  %v318 = vld [vmem:[%s300 + $0x20] sm:%s293]
                  %319 = vst [vmem:[%s301 + $0x20] sm:%s293] %v318
                  %v320 = vld [vmem:[%s300 + $0x24] sm:%s293]
                  %321 = vst [vmem:[%s301 + $0x24] sm:%s293] %v320
                  %v322 = vld [vmem:[%s300 + $0x28] sm:%s293]
                  %323 = vst [vmem:[%s301 + $0x28] sm:%s293] %v322
                  %v324 = vld [vmem:[%s300 + $0x2c] sm:%s293]
                  %325 = vst [vmem:[%s301 + $0x2c] sm:%s293] %v324
                  %v326 = vld [vmem:[%s300 + $0x30] sm:%s293]
                  %327 = vst [vmem:[%s301 + $0x30] sm:%s293] %v326
                  %v328 = vld [vmem:[%s300 + $0x34] sm:%s293]
                  %329 = vst [vmem:[%s301 + $0x34] sm:%s293] %v328
                  %v330 = vld [vmem:[%s300 + $0x38] sm:%s293]
                  %331 = vst [vmem:[%s301 + $0x38] sm:%s293] %v330
                  %v332 = vld [vmem:[%s300 + $0x3c] sm:%s293]
                  %333 = vst [vmem:[%s301 + $0x3c] sm:%s293] %v332
                  %v334 = vld [vmem:[%s300 + $0x100] sm:%s293]
                  %335 = vst [vmem:[%s301 + $0x40] sm:%s293] %v334
                  %v336 = vld [vmem:[%s300 + $0x104] sm:%s293]
                  %337 = vst [vmem:[%s301 + $0x44] sm:%s293] %v336
                  %v338 = vld [vmem:[%s300 + $0x108] sm:%s293]
                  %339 = vst [vmem:[%s301 + $0x48] sm:%s293] %v338
                  %v340 = vld [vmem:[%s300 + $0x10c] sm:%s293]
                  %341 = vst [vmem:[%s301 + $0x4c] sm:%s293] %v340
                  %v342 = vld [vmem:[%s300 + $0x110] sm:%s293]
                  %343 = vst [vmem:[%s301 + $0x50] sm:%s293] %v342
                  %v344 = vld [vmem:[%s300 + $0x114] sm:%s293]
                  %345 = vst [vmem:[%s301 + $0x54] sm:%s293] %v344
                  %v346 = vld [vmem:[%s300 + $0x118] sm:%s293]
                  %347 = vst [vmem:[%s301 + $0x58] sm:%s293] %v346
                  %v348 = vld [vmem:[%s300 + $0x11c] sm:%s293]
                  %349 = vst [vmem:[%s301 + $0x5c] sm:%s293] %v348
                  %v350 = vld [vmem:[%s300 + $0x120] sm:%s293]
                  %351 = vst [vmem:[%s301 + $0x60] sm:%s293] %v350
                  %v352 = vld [vmem:[%s300 + $0x124] sm:%s293]
                  %353 = vst [vmem:[%s301 + $0x64] sm:%s293] %v352
                  %v354 = vld [vmem:[%s300 + $0x128] sm:%s293]
                  %355 = vst [vmem:[%s301 + $0x68] sm:%s293] %v354
                  %v356 = vld [vmem:[%s300 + $0x12c] sm:%s293]
                  %357 = vst [vmem:[%s301 + $0x6c] sm:%s293] %v356
                  %v358 = vld [vmem:[%s300 + $0x130] sm:%s293]
                  %359 = vst [vmem:[%s301 + $0x70] sm:%s293] %v358
                  %v360 = vld [vmem:[%s300 + $0x134] sm:%s293]
                  %361 = vst [vmem:[%s301 + $0x74] sm:%s293] %v360
                  %v362 = vld [vmem:[%s300 + $0x138] sm:%s293]
                  %363 = vst [vmem:[%s301 + $0x78] sm:%s293] %v362
                  %v364 = vld [vmem:[%s300 + $0x13c] sm:%s293]
                  %365 = vst [vmem:[%s301 + $0x7c] sm:%s293] %v364
                  %v366 = vld [vmem:[%s300 + $0x200] sm:%s293]
                  %367 = vst [vmem:[%s301 + $0x80] sm:%s293] %v366
                  %v368 = vld [vmem:[%s300 + $0x204] sm:%s293]
                  %369 = vst [vmem:[%s301 + $0x84] sm:%s293] %v368
                  %v370 = vld [vmem:[%s300 + $0x208] sm:%s293]
                  %371 = vst [vmem:[%s301 + $0x88] sm:%s293] %v370
                  %v372 = vld [vmem:[%s300 + $0x20c] sm:%s293]
                  %373 = vst [vmem:[%s301 + $0x8c] sm:%s293] %v372
                  %v374 = vld [vmem:[%s300 + $0x210] sm:%s293]
                  %375 = vst [vmem:[%s301 + $0x90] sm:%s293] %v374
                  %v376 = vld [vmem:[%s300 + $0x214] sm:%s293]
                  %377 = vst [vmem:[%s301 + $0x94] sm:%s293] %v376
                  %v378 = vld [vmem:[%s300 + $0x218] sm:%s293]
                  %379 = vst [vmem:[%s301 + $0x98] sm:%s293] %v378
                  %v380 = vld [vmem:[%s300 + $0x21c] sm:%s293]
                  %381 = vst [vmem:[%s301 + $0x9c] sm:%s293] %v380
                  %v382 = vld [vmem:[%s300 + $0x220] sm:%s293]
                  %383 = vst [vmem:[%s301 + $0xa0] sm:%s293] %v382
                  %v384 = vld [vmem:[%s300 + $0x224] sm:%s293]
                  %385 = vst [vmem:[%s301 + $0xa4] sm:%s293] %v384
                  %v386 = vld [vmem:[%s300 + $0x228] sm:%s293]
                  %387 = vst [vmem:[%s301 + $0xa8] sm:%s293] %v386
                  %v388 = vld [vmem:[%s300 + $0x22c] sm:%s293]
                  %389 = vst [vmem:[%s301 + $0xac] sm:%s293] %v388
                  %v390 = vld [vmem:[%s300 + $0x230] sm:%s293]
                  %391 = vst [vmem:[%s301 + $0xb0] sm:%s293] %v390
                  %v392 = vld [vmem:[%s300 + $0x234] sm:%s293]
                  %393 = vst [vmem:[%s301 + $0xb4] sm:%s293] %v392
                  %v394 = vld [vmem:[%s300 + $0x238] sm:%s293]
                  %395 = vst [vmem:[%s301 + $0xb8] sm:%s293] %v394
                  %v396 = vld [vmem:[%s300 + $0x23c] sm:%s293]
                  %397 = vst [vmem:[%s301 + $0xbc] sm:%s293] %v396
                  %v398 = vld [vmem:[%s300 + $0x300] sm:%s293]
                  %399 = vst [vmem:[%s301 + $0xc0] sm:%s293] %v398
                  %v400 = vld [vmem:[%s300 + $0x304] sm:%s293]
                  %401 = vst [vmem:[%s301 + $0xc4] sm:%s293] %v400
                  %v402 = vld [vmem:[%s300 + $0x308] sm:%s293]
                  %403 = vst [vmem:[%s301 + $0xc8] sm:%s293] %v402
                  %v404 = vld [vmem:[%s300 + $0x30c] sm:%s293]
                  %405 = vst [vmem:[%s301 + $0xcc] sm:%s293] %v404
                  %v406 = vld [vmem:[%s300 + $0x310] sm:%s293]
                  %407 = vst [vmem:[%s301 + $0xd0] sm:%s293] %v406
                  %v408 = vld [vmem:[%s300 + $0x314] sm:%s293]
                  %409 = vst [vmem:[%s301 + $0xd4] sm:%s293] %v408
                  %v410 = vld [vmem:[%s300 + $0x318] sm:%s293]
                  %411 = vst [vmem:[%s301 + $0xd8] sm:%s293] %v410
                  %v412 = vld [vmem:[%s300 + $0x31c] sm:%s293]
                  %413 = vst [vmem:[%s301 + $0xdc] sm:%s293] %v412
                  %v414 = vld [vmem:[%s300 + $0x320] sm:%s293]
                  %415 = vst [vmem:[%s301 + $0xe0] sm:%s293] %v414
                  %v416 = vld [vmem:[%s300 + $0x324] sm:%s293]
                  %417 = vst [vmem:[%s301 + $0xe4] sm:%s293] %v416
                  %v418 = vld [vmem:[%s300 + $0x328] sm:%s293]
                  %419 = vst [vmem:[%s301 + $0xe8] sm:%s293] %v418
                  %v420 = vld [vmem:[%s300 + $0x32c] sm:%s293]
                  %421 = vst [vmem:[%s301 + $0xec] sm:%s293] %v420
                  %v422 = vld [vmem:[%s300 + $0x330] sm:%s293]
                  %423 = vst [vmem:[%s301 + $0xf0] sm:%s293] %v422
                  %v424 = vld [vmem:[%s300 + $0x334] sm:%s293]
                  %425 = vst [vmem:[%s301 + $0xf4] sm:%s293] %v424
                  %v426 = vld [vmem:[%s300 + $0x338] sm:%s293]
                  %427 = vst [vmem:[%s301 + $0xf8] sm:%s293] %v426
                  %v428 = vld [vmem:[%s300 + $0x33c] sm:%s293]
                  %429 = vst [vmem:[%s301 + $0xfc] sm:%s293] %v428
                $region63: #{custom_cnn_forward.4} parent=50 // loop_footer
                  %s299 = sadd.s32 1, %s295
                $region64: #{custom_cnn_forward.4} parent=50 // loop_footer_branch
                  %294 = sbr.rel target = $region60
                $region65: #{custom_cnn_forward.4} parent=50 // loop_exit
                  _
              $region51: #{custom_cnn_forward.4} parent=35 // pred_fallthru
                _
            $region36: #{custom_cnn_forward.4} parent=31 // pred_fallthru
              _
            // Predicated region
            $region37: #{custom_cnn_forward.4} parent=31 // pred_check
              _
            $region38: #{custom_cnn_forward.4} parent=31 // pred_check_branch
              %143 = sbr.rel (0) target = $region40
            $region39: #{custom_cnn_forward.4} parent=31 // pred_region
              %s145 = ssub.s32 16, 1
              loop: start=0, step=1, limit=1
              $region41: #{custom_cnn_forward.4} parent=39 // loop_pre_header
                _
              $region42: #{custom_cnn_forward.4} parent=39 // loop_header
                %s147 = sphi 0, %s151
                %p148 = scmp.ge.s32.totalorder %s147, 1
                %s152 = sphi %s137, %s137
                %s153 = sphi %s134, %s134
              $region43: #{custom_cnn_forward.4} parent=39 // loop_header_branch
                %150 = sbr.rel (%p148) target = $region47
              $region44: #{custom_cnn_forward.4} parent=39 // loop_body
                %v154 = vld [vmem:[%s152] sm:%s145]
                %155 = vst [vmem:[%s153] sm:%s145] %v154
                %v156 = vld [vmem:[%s152 + $0x4] sm:%s145]
                %157 = vst [vmem:[%s153 + $0x4] sm:%s145] %v156
                %v158 = vld [vmem:[%s152 + $0x8] sm:%s145]
                %159 = vst [vmem:[%s153 + $0x8] sm:%s145] %v158
                %v160 = vld [vmem:[%s152 + $0xc] sm:%s145]
                %161 = vst [vmem:[%s153 + $0xc] sm:%s145] %v160
                %v162 = vld [vmem:[%s152 + $0x10] sm:%s145]
                %163 = vst [vmem:[%s153 + $0x10] sm:%s145] %v162
                %v164 = vld [vmem:[%s152 + $0x14] sm:%s145]
                %165 = vst [vmem:[%s153 + $0x14] sm:%s145] %v164
                %v166 = vld [vmem:[%s152 + $0x18] sm:%s145]
                %167 = vst [vmem:[%s153 + $0x18] sm:%s145] %v166
                %v168 = vld [vmem:[%s152 + $0x1c] sm:%s145]
                %169 = vst [vmem:[%s153 + $0x1c] sm:%s145] %v168
                %v170 = vld [vmem:[%s152 + $0x20] sm:%s145]
                %171 = vst [vmem:[%s153 + $0x20] sm:%s145] %v170
                %v172 = vld [vmem:[%s152 + $0x24] sm:%s145]
                %173 = vst [vmem:[%s153 + $0x24] sm:%s145] %v172
                %v174 = vld [vmem:[%s152 + $0x28] sm:%s145]
                %175 = vst [vmem:[%s153 + $0x28] sm:%s145] %v174
                %v176 = vld [vmem:[%s152 + $0x2c] sm:%s145]
                %177 = vst [vmem:[%s153 + $0x2c] sm:%s145] %v176
                %v178 = vld [vmem:[%s152 + $0x30] sm:%s145]
                %179 = vst [vmem:[%s153 + $0x30] sm:%s145] %v178
                %v180 = vld [vmem:[%s152 + $0x34] sm:%s145]
                %181 = vst [vmem:[%s153 + $0x34] sm:%s145] %v180
                %v182 = vld [vmem:[%s152 + $0x38] sm:%s145]
                %183 = vst [vmem:[%s153 + $0x38] sm:%s145] %v182
                %v184 = vld [vmem:[%s152 + $0x3c] sm:%s145]
                %185 = vst [vmem:[%s153 + $0x3c] sm:%s145] %v184
                %v186 = vld [vmem:[%s152 + $0x100] sm:%s145]
                %187 = vst [vmem:[%s153 + $0x40] sm:%s145] %v186
                %v188 = vld [vmem:[%s152 + $0x104] sm:%s145]
                %189 = vst [vmem:[%s153 + $0x44] sm:%s145] %v188
                %v190 = vld [vmem:[%s152 + $0x108] sm:%s145]
                %191 = vst [vmem:[%s153 + $0x48] sm:%s145] %v190
                %v192 = vld [vmem:[%s152 + $0x10c] sm:%s145]
                %193 = vst [vmem:[%s153 + $0x4c] sm:%s145] %v192
                %v194 = vld [vmem:[%s152 + $0x110] sm:%s145]
                %195 = vst [vmem:[%s153 + $0x50] sm:%s145] %v194
                %v196 = vld [vmem:[%s152 + $0x114] sm:%s145]
                %197 = vst [vmem:[%s153 + $0x54] sm:%s145] %v196
                %v198 = vld [vmem:[%s152 + $0x118] sm:%s145]
                %199 = vst [vmem:[%s153 + $0x58] sm:%s145] %v198
                %v200 = vld [vmem:[%s152 + $0x11c] sm:%s145]
                %201 = vst [vmem:[%s153 + $0x5c] sm:%s145] %v200
                %v202 = vld [vmem:[%s152 + $0x120] sm:%s145]
                %203 = vst [vmem:[%s153 + $0x60] sm:%s145] %v202
                %v204 = vld [vmem:[%s152 + $0x124] sm:%s145]
                %205 = vst [vmem:[%s153 + $0x64] sm:%s145] %v204
                %v206 = vld [vmem:[%s152 + $0x128] sm:%s145]
                %207 = vst [vmem:[%s153 + $0x68] sm:%s145] %v206
                %v208 = vld [vmem:[%s152 + $0x12c] sm:%s145]
                %209 = vst [vmem:[%s153 + $0x6c] sm:%s145] %v208
                %v210 = vld [vmem:[%s152 + $0x130] sm:%s145]
                %211 = vst [vmem:[%s153 + $0x70] sm:%s145] %v210
                %v212 = vld [vmem:[%s152 + $0x134] sm:%s145]
                %213 = vst [vmem:[%s153 + $0x74] sm:%s145] %v212
                %v214 = vld [vmem:[%s152 + $0x138] sm:%s145]
                %215 = vst [vmem:[%s153 + $0x78] sm:%s145] %v214
                %v216 = vld [vmem:[%s152 + $0x13c] sm:%s145]
                %217 = vst [vmem:[%s153 + $0x7c] sm:%s145] %v216
                %v218 = vld [vmem:[%s152 + $0x200] sm:%s145]
                %219 = vst [vmem:[%s153 + $0x80] sm:%s145] %v218
                %v220 = vld [vmem:[%s152 + $0x204] sm:%s145]
                %221 = vst [vmem:[%s153 + $0x84] sm:%s145] %v220
                %v222 = vld [vmem:[%s152 + $0x208] sm:%s145]
                %223 = vst [vmem:[%s153 + $0x88] sm:%s145] %v222
                %v224 = vld [vmem:[%s152 + $0x20c] sm:%s145]
                %225 = vst [vmem:[%s153 + $0x8c] sm:%s145] %v224
                %v226 = vld [vmem:[%s152 + $0x210] sm:%s145]
                %227 = vst [vmem:[%s153 + $0x90] sm:%s145] %v226
                %v228 = vld [vmem:[%s152 + $0x214] sm:%s145]
                %229 = vst [vmem:[%s153 + $0x94] sm:%s145] %v228
                %v230 = vld [vmem:[%s152 + $0x218] sm:%s145]
                %231 = vst [vmem:[%s153 + $0x98] sm:%s145] %v230
                %v232 = vld [vmem:[%s152 + $0x21c] sm:%s145]
                %233 = vst [vmem:[%s153 + $0x9c] sm:%s145] %v232
                %v234 = vld [vmem:[%s152 + $0x220] sm:%s145]
                %235 = vst [vmem:[%s153 + $0xa0] sm:%s145] %v234
                %v236 = vld [vmem:[%s152 + $0x224] sm:%s145]
                %237 = vst [vmem:[%s153 + $0xa4] sm:%s145] %v236
                %v238 = vld [vmem:[%s152 + $0x228] sm:%s145]
                %239 = vst [vmem:[%s153 + $0xa8] sm:%s145] %v238
                %v240 = vld [vmem:[%s152 + $0x22c] sm:%s145]
                %241 = vst [vmem:[%s153 + $0xac] sm:%s145] %v240
                %v242 = vld [vmem:[%s152 + $0x230] sm:%s145]
                %243 = vst [vmem:[%s153 + $0xb0] sm:%s145] %v242
                %v244 = vld [vmem:[%s152 + $0x234] sm:%s145]
                %245 = vst [vmem:[%s153 + $0xb4] sm:%s145] %v244
                %v246 = vld [vmem:[%s152 + $0x238] sm:%s145]
                %247 = vst [vmem:[%s153 + $0xb8] sm:%s145] %v246
                %v248 = vld [vmem:[%s152 + $0x23c] sm:%s145]
                %249 = vst [vmem:[%s153 + $0xbc] sm:%s145] %v248
                %v250 = vld [vmem:[%s152 + $0x300] sm:%s145]
                %251 = vst [vmem:[%s153 + $0xc0] sm:%s145] %v250
                %v252 = vld [vmem:[%s152 + $0x304] sm:%s145]
                %253 = vst [vmem:[%s153 + $0xc4] sm:%s145] %v252
                %v254 = vld [vmem:[%s152 + $0x308] sm:%s145]
                %255 = vst [vmem:[%s153 + $0xc8] sm:%s145] %v254
                %v256 = vld [vmem:[%s152 + $0x30c] sm:%s145]
                %257 = vst [vmem:[%s153 + $0xcc] sm:%s145] %v256
                %v258 = vld [vmem:[%s152 + $0x310] sm:%s145]
                %259 = vst [vmem:[%s153 + $0xd0] sm:%s145] %v258
                %v260 = vld [vmem:[%s152 + $0x314] sm:%s145]
                %261 = vst [vmem:[%s153 + $0xd4] sm:%s145] %v260
                %v262 = vld [vmem:[%s152 + $0x318] sm:%s145]
                %263 = vst [vmem:[%s153 + $0xd8] sm:%s145] %v262
                %v264 = vld [vmem:[%s152 + $0x31c] sm:%s145]
                %265 = vst [vmem:[%s153 + $0xdc] sm:%s145] %v264
                %v266 = vld [vmem:[%s152 + $0x320] sm:%s145]
                %267 = vst [vmem:[%s153 + $0xe0] sm:%s145] %v266
                %v268 = vld [vmem:[%s152 + $0x324] sm:%s145]
                %269 = vst [vmem:[%s153 + $0xe4] sm:%s145] %v268
                %v270 = vld [vmem:[%s152 + $0x328] sm:%s145]
                %271 = vst [vmem:[%s153 + $0xe8] sm:%s145] %v270
                %v272 = vld [vmem:[%s152 + $0x32c] sm:%s145]
                %273 = vst [vmem:[%s153 + $0xec] sm:%s145] %v272
                %v274 = vld [vmem:[%s152 + $0x330] sm:%s145]
                %275 = vst [vmem:[%s153 + $0xf0] sm:%s145] %v274
                %v276 = vld [vmem:[%s152 + $0x334] sm:%s145]
                %277 = vst [vmem:[%s153 + $0xf4] sm:%s145] %v276
                %v278 = vld [vmem:[%s152 + $0x338] sm:%s145]
                %279 = vst [vmem:[%s153 + $0xf8] sm:%s145] %v278
                %v280 = vld [vmem:[%s152 + $0x33c] sm:%s145]
                %281 = vst [vmem:[%s153 + $0xfc] sm:%s145] %v280
              $region45: #{custom_cnn_forward.4} parent=39 // loop_footer
                %s151 = sadd.s32 1, %s147
              $region46: #{custom_cnn_forward.4} parent=39 // loop_footer_branch
                %146 = sbr.rel target = $region42
              $region47: #{custom_cnn_forward.4} parent=39 // loop_exit
                _
            $region40: #{custom_cnn_forward.4} parent=31 // pred_fallthru
              _
          $region32: #{custom_cnn_forward.4} parent=27 // pred_fallthru
            _
          %430 = vnop
        $region28: #{custom_cnn_forward.4} parent=23 // pred_fallthru
          _
      $region24: #{custom_cnn_forward.4} parent=5 // pred_fallthru
        _
      %p431 = scmp.le.s32.totalorder 1, %s9
      %p432 = scmp.lt.s32.totalorder %s9, 5
      %p433 = pnand %p431, %p432
      %p434 = pneg %p433
      // Predicated region
      $region66: #{custom_cnn_forward.4} parent=5 // pred_check
        _
      $region67: #{custom_cnn_forward.4} parent=5 // pred_check_branch
        %436 = sbr.rel (%p433) target = $region69
      $region68: #{custom_cnn_forward.4} parent=5 // pred_region
        %s437 = ssub.s32 %s9, 1
        %s438 = sand.u32 %s22, 1
        %s439 = sand.u32 %s22, 1
        %s440 = smul.addr %s439, 256
        %s441 = scalar_lea.vmem [#allocation2], %s440
        // Predicated region
        $region70: #{custom_cnn_forward.4} parent=68 // pred_check
          %p442 = pneg %p35
        $region71: #{custom_cnn_forward.4} parent=68 // pred_check_branch
          %444 = sbr.rel (%p442) target = $region73
        $region72: #{custom_cnn_forward.4} parent=68 // pred_region
          _
        $region73: #{custom_cnn_forward.4} parent=68 // pred_fallthru
          _
        %s445 = sand.u32 %s22, 1
        %s446 = sand.u32 %s22, 1
        %s447 = smul.addr %s446, 256
        %s448 = scalar_lea.vmem [#allocation2], %s447
        %p449 = pneg %p35
        %p450 = pneg %p32
        %p451 = pneg %p56
        %p452 = pneg %p53
        %p453 = pneg %p77
        %p454 = pneg %p74
        %p455 = pneg %p103
        %p456 = pneg %p100
        %s457 = smul.u32 16, %s14
        %p458 = scmp.lt.s32.totalorder %s457, 63
        %s459 = scalar_select %p458, %s457, 63
        %s460 = smul.addr %s459, 8
        %s461 = scalar_lea.vmem %s3, %s460
        %s462 = smul.u32 16, %s14
        %s463 = smul.u32 16, %s14
        %p464 = scmp.lt.s32.totalorder %s463, 63
        %s465 = scalar_select %p464, %s463, 63
        %s466 = smul.addr %s465, 8
        %s467 = scalar_lea.vmem %s3, %s466
        %s468 = smul.u32 16, %s14
        %v470 = vld [vmem:[%s1] sm:$0xf]
        %v471 = vld [vmem:[%s1 + $0x4] sm:$0xf]
        %v472 = vld [vmem:[%s1 + $0x8] sm:$0xf]
        %v473 = vld [vmem:[%s1 + $0xc] sm:$0x3]
        %v474 = vld [vmem:[%s441] sm:$0xf]
        %v475 = vld [vmem:[%s441 + $0x4] sm:$0xf]
        %v476 = vld [vmem:[%s441 + $0x8] sm:$0xf]
        %v477 = vld [vmem:[%s441 + $0xc] sm:$0xf]
        %v478 = vld [vmem:[%s441 + $0x10] sm:$0xf]
        %v479 = vld [vmem:[%s441 + $0x14] sm:$0xf]
        %v480 = vld [vmem:[%s441 + $0x18] sm:$0xf]
        %v481 = vld [vmem:[%s441 + $0x1c] sm:$0xf]
        %v482 = vld [vmem:[%s441 + $0x20] sm:$0xf]
        %v483 = vld [vmem:[%s441 + $0x24] sm:$0xf]
        %v484 = vld [vmem:[%s441 + $0x28] sm:$0xf]
        %v485 = vld [vmem:[%s441 + $0x2c] sm:$0xf]
        %v486 = vld [vmem:[%s441 + $0x30] sm:$0xf]
        %v487 = vld [vmem:[%s441 + $0x34] sm:$0xf]
        %v488 = vld [vmem:[%s441 + $0x38] sm:$0xf]
        %v489 = vld [vmem:[%s441 + $0x3c] sm:$0xf]
        %v506 = vunpack.c.l.b16 %v474
        %v507 = vunpack.c.l.b16 %v475
        %v508 = vunpack.c.l.b16 %v476
        %v509 = vunpack.c.l.b16 %v477
        %v510 = vunpack.c.l.b16 %v478
        %v511 = vunpack.c.l.b16 %v479
        %v512 = vunpack.c.l.b16 %v480
        %v513 = vunpack.c.l.b16 %v481
        %v514 = vunpack.c.l.b16 %v482
        %v515 = vunpack.c.l.b16 %v483
        %v516 = vunpack.c.l.b16 %v484
        %v517 = vunpack.c.l.b16 %v485
        %v518 = vunpack.c.l.b16 %v486
        %v519 = vunpack.c.l.b16 %v487
        %v520 = vunpack.c.l.b16 %v488
        %v521 = vunpack.c.l.b16 %v489
        %v522 = vpack.c.b16 %v507, %v506
        %v523 = vpack.c.b16 %v509, %v508
        %v524 = vpack.c.b16 %v511, %v510
        %v525 = vpack.c.b16 %v513, %v512
        %v526 = vpack.c.b16 %v515, %v514
        %v527 = vpack.c.b16 %v517, %v516
        %v528 = vpack.c.b16 %v519, %v518
        %v529 = vpack.c.b16 %v521, %v520
        %v534 = vunpack.c.l.b16 %v470
        %v535 = vunpack.c.l.b16 %v471
        %v536 = vunpack.c.l.b16 %v472
        %v537 = vunpack.c.l.b16 %v473
        %v538 = vpack.c.b16 %v535, %v534
        %v539 = vpack.c.b16 %v537, %v536
        %vm541 = vcmask 220160
        %v543 = vsel %vm541, %v522, 0
        %v546 = vsel %vm541, %v523, 0
        %v549 = vsel %vm541, %v524, 0
        %v552 = vsel %vm541, %v525, 0
        %v555 = vsel %vm541, %v526, 0
        %v558 = vsel %vm541, %v527, 0
        %v561 = vsel %vm541, %v528, 0
        %v564 = vsel %vm541, %v529, 0
        %vm566 = vcmask 1044480
        %vm567 = vcmask 1045504
        %v568 = vsel %vm566, 4294967295, 65535
        %v569 = vsel %vm567, %v568, 0
        %v571 = vand.u32 %v539, %v569
        %573 = vmatprep.subr.bf16.mxu0 0
        %574 = vmatpush1.bf16.msra.mxu0 0
        %575 = vmatprep.subr.bf16.mxu0 0
        %576 = vmatpush1.bf16.msra.mxu0 0
        %577 = vmatprep.subr.bf16.mxu0 0
        %578 = vmatpush1.bf16.msra.mxu0 0
        %579 = vmatprep.subr.bf16.mxu0 0
        %580 = vmatpush1.bf16.msra.mxu0 0
        %581 = vmatprep.subr.bf16.mxu0 0
        %582 = vmatpush1.bf16.msra.mxu0 0
        %583 = vmatprep.subr.bf16.mxu0 0
        %584 = vmatpush1.bf16.msra.mxu0 0
        %585 = vmatprep.subr.bf16.mxu0 0
        %586 = vmatpush1.bf16.msra.mxu0 %v571
        %587 = vmatprep.subr.bf16.mxu0 0
        %588 = vmatpush1.bf16.msra.mxu0 %v538
        %589 = vmatprep.subr.bf16.mxu0 0
        %590 = vmatpush2.bf16.msra.mxu0 0
        %591 = vmatprep.subr.bf16.mxu0 0
        %592 = vmatpush2.bf16.msra.mxu0 0
        %593 = vmatprep.subr.bf16.mxu0 0
        %594 = vmatpush2.bf16.msra.mxu0 0
        %595 = vmatprep.subr.bf16.mxu0 0
        %596 = vmatpush2.bf16.msra.mxu0 0
        %597 = vmatprep.subr.bf16.mxu0 0
        %598 = vmatpush2.bf16.msra.mxu0 0
        %599 = vmatprep.subr.bf16.mxu0 0
        %600 = vmatpush2.bf16.msra.mxu0 0
        %601 = vmatprep.subr.bf16.mxu0 0
        %602 = vmatpush2.bf16.msra.mxu0 0
        %603 = vmatprep.subr.bf16.mxu0 0
        %604 = vmatpush2.bf16.msra.mxu0 0
        %605 = vmatprep.mubr.bf16.mxu0 0
        %606 = vmatmul.mubr.bf16.gmra.mxu0 %v543
        %v607 = vpop.f32.mrf.mxu0
        %v608 = vadd.f32 0.0, %v607
        %v609 = vpop.f32.mrf.mxu0
        %v610 = vpop.f32.mrf.mxu0
        %v611 = vadd.f32 0.0, %v610
        %v612 = vpop.f32.mrf.mxu0
        %613 = vmatprep.mubr.bf16.mxu0 0
        %614 = vmatmul.mubr.bf16.gmra.mxu0 %v546
        %v615 = vpop.f32.mrf.mxu0
        %v616 = vadd.f32 0.0, %v615
        %v617 = vpop.f32.mrf.mxu0
        %v618 = vpop.f32.mrf.mxu0
        %v619 = vadd.f32 0.0, %v618
        %v620 = vpop.f32.mrf.mxu0
        %621 = vmatprep.mubr.bf16.mxu0 0
        %622 = vmatmul.mubr.bf16.gmra.mxu0 %v549
        %v623 = vpop.f32.mrf.mxu0
        %v624 = vadd.f32 0.0, %v623
        %v625 = vpop.f32.mrf.mxu0
        %v626 = vpop.f32.mrf.mxu0
        %v627 = vadd.f32 0.0, %v626
        %v628 = vpop.f32.mrf.mxu0
        %629 = vmatprep.mubr.bf16.mxu0 0
        %630 = vmatmul.mubr.bf16.gmra.mxu0 %v552
        %v631 = vpop.f32.mrf.mxu0
        %v632 = vadd.f32 0.0, %v631
        %v633 = vpop.f32.mrf.mxu0
        %v634 = vpop.f32.mrf.mxu0
        %v635 = vadd.f32 0.0, %v634
        %v636 = vpop.f32.mrf.mxu0
        %637 = vmatprep.mubr.bf16.mxu0 0
        %638 = vmatmul.mubr.bf16.gmra.mxu0 %v555
        %v639 = vpop.f32.mrf.mxu0
        %v640 = vadd.f32 0.0, %v639
        %v641 = vpop.f32.mrf.mxu0
        %v642 = vpop.f32.mrf.mxu0
        %v643 = vadd.f32 0.0, %v642
        %v644 = vpop.f32.mrf.mxu0
        %645 = vmatprep.mubr.bf16.mxu0 0
        %646 = vmatmul.mubr.bf16.gmra.mxu0 %v558
        %v647 = vpop.f32.mrf.mxu0
        %v648 = vadd.f32 0.0, %v647
        %v649 = vpop.f32.mrf.mxu0
        %v650 = vpop.f32.mrf.mxu0
        %v651 = vadd.f32 0.0, %v650
        %v652 = vpop.f32.mrf.mxu0
        %653 = vmatprep.mubr.bf16.mxu0 0
        %654 = vmatmul.mubr.bf16.gmra.mxu0 %v561
        %v655 = vpop.f32.mrf.mxu0
        %v656 = vadd.f32 0.0, %v655
        %v657 = vpop.f32.mrf.mxu0
        %v658 = vpop.f32.mrf.mxu0
        %v659 = vadd.f32 0.0, %v658
        %v660 = vpop.f32.mrf.mxu0
        %661 = vmatprep.mubr.bf16.mxu0 0
        %662 = vmatmul.mubr.bf16.gmra.mxu0 %v564
        %v663 = vpop.f32.mrf.mxu0
        %v664 = vadd.f32 0.0, %v663
        %v665 = vpop.f32.mrf.mxu0
        %v666 = vpop.f32.mrf.mxu0
        %v667 = vadd.f32 0.0, %v666
        %v668 = vpop.f32.mrf.mxu0
        %669 = vdwg.mxu0
        %s670 = scalar_lea.vmem %s441, 64 [#allocation2]
        %v671 = vld [vmem:[%s670] sm:$0xf]
        %v672 = vld [vmem:[%s670 + $0x4] sm:$0xf]
        %v673 = vld [vmem:[%s670 + $0x8] sm:$0xf]
        %v674 = vld [vmem:[%s670 + $0xc] sm:$0xf]
        %v675 = vld [vmem:[%s670 + $0x10] sm:$0xf]
        %v676 = vld [vmem:[%s670 + $0x14] sm:$0xf]
        %v677 = vld [vmem:[%s670 + $0x18] sm:$0xf]
        %v678 = vld [vmem:[%s670 + $0x1c] sm:$0xf]
        %v679 = vld [vmem:[%s670 + $0x20] sm:$0xf]
        %v680 = vld [vmem:[%s670 + $0x24] sm:$0xf]
        %v681 = vld [vmem:[%s670 + $0x28] sm:$0xf]
        %v682 = vld [vmem:[%s670 + $0x2c] sm:$0xf]
        %v683 = vld [vmem:[%s670 + $0x30] sm:$0xf]
        %v684 = vld [vmem:[%s670 + $0x34] sm:$0xf]
        %v685 = vld [vmem:[%s670 + $0x38] sm:$0xf]
        %v686 = vld [vmem:[%s670 + $0x3c] sm:$0xf]
        %v703 = vunpack.c.l.b16 %v671
        %v704 = vunpack.c.l.b16 %v672
        %v705 = vunpack.c.l.b16 %v673
        %v706 = vunpack.c.l.b16 %v674
        %v707 = vunpack.c.l.b16 %v675
        %v708 = vunpack.c.l.b16 %v676
        %v709 = vunpack.c.l.b16 %v677
        %v710 = vunpack.c.l.b16 %v678
        %v711 = vunpack.c.l.b16 %v679
        %v712 = vunpack.c.l.b16 %v680
        %v713 = vunpack.c.l.b16 %v681
        %v714 = vunpack.c.l.b16 %v682
        %v715 = vunpack.c.l.b16 %v683
        %v716 = vunpack.c.l.b16 %v684
        %v717 = vunpack.c.l.b16 %v685
        %v718 = vunpack.c.l.b16 %v686
        %v719 = vpack.c.b16 %v704, %v703
        %v720 = vpack.c.b16 %v706, %v705
        %v721 = vpack.c.b16 %v708, %v707
        %v722 = vpack.c.b16 %v710, %v709
        %v723 = vpack.c.b16 %v712, %v711
        %v724 = vpack.c.b16 %v714, %v713
        %v725 = vpack.c.b16 %v716, %v715
        %v726 = vpack.c.b16 %v718, %v717
        %v728 = vsel %vm541, %v719, 0
        %v731 = vsel %vm541, %v720, 0
        %v734 = vsel %vm541, %v721, 0
        %v737 = vsel %vm541, %v722, 0
        %v740 = vsel %vm541, %v723, 0
        %v743 = vsel %vm541, %v724, 0
        %v746 = vsel %vm541, %v725, 0
        %v749 = vsel %vm541, %v726, 0
        %751 = vmatprep.subr.bf16.mxu0 0
        %752 = vmatpush1.bf16.msra.mxu0 0
        %753 = vmatprep.subr.bf16.mxu0 0
        %754 = vmatpush1.bf16.msra.mxu0 0
        %755 = vmatprep.subr.bf16.mxu0 0
        %756 = vmatpush1.bf16.msra.mxu0 0
        %757 = vmatprep.subr.bf16.mxu0 0
        %758 = vmatpush1.bf16.msra.mxu0 0
        %759 = vmatprep.subr.bf16.mxu0 0
        %760 = vmatpush1.bf16.msra.mxu0 0
        %761 = vmatprep.subr.bf16.mxu0 0
        %762 = vmatpush1.bf16.msra.mxu0 0
        %763 = vmatprep.subr.bf16.mxu0 0
        %764 = vmatpush1.bf16.msra.mxu0 %v571
        %765 = vmatprep.subr.bf16.mxu0 0
        %766 = vmatpush1.bf16.msra.mxu0 %v538
        %767 = vmatprep.subr.bf16.mxu0 0
        %768 = vmatpush2.bf16.msra.mxu0 0
        %769 = vmatprep.subr.bf16.mxu0 0
        %770 = vmatpush2.bf16.msra.mxu0 0
        %771 = vmatprep.subr.bf16.mxu0 0
        %772 = vmatpush2.bf16.msra.mxu0 0
        %773 = vmatprep.subr.bf16.mxu0 0
        %774 = vmatpush2.bf16.msra.mxu0 0
        %775 = vmatprep.subr.bf16.mxu0 0
        %776 = vmatpush2.bf16.msra.mxu0 0
        %777 = vmatprep.subr.bf16.mxu0 0
        %778 = vmatpush2.bf16.msra.mxu0 0
        %779 = vmatprep.subr.bf16.mxu0 0
        %780 = vmatpush2.bf16.msra.mxu0 0
        %781 = vmatprep.subr.bf16.mxu0 0
        %782 = vmatpush2.bf16.msra.mxu0 0
        %783 = vmatprep.mubr.bf16.mxu0 0
        %784 = vmatmul.mubr.bf16.gmra.mxu0 %v728
        %v785 = vpop.f32.mrf.mxu0
        %v786 = vadd.f32 0.0, %v785
        %v787 = vpop.f32.mrf.mxu0
        %v788 = vpop.f32.mrf.mxu0
        %v789 = vadd.f32 0.0, %v788
        %v790 = vpop.f32.mrf.mxu0
        %791 = vmatprep.mubr.bf16.mxu0 0
        %792 = vmatmul.mubr.bf16.gmra.mxu0 %v731
        %v793 = vpop.f32.mrf.mxu0
        %v794 = vadd.f32 0.0, %v793
        %v795 = vpop.f32.mrf.mxu0
        %v796 = vpop.f32.mrf.mxu0
        %v797 = vadd.f32 0.0, %v796
        %v798 = vpop.f32.mrf.mxu0
        %799 = vmatprep.mubr.bf16.mxu0 0
        %800 = vmatmul.mubr.bf16.gmra.mxu0 %v734
        %v801 = vpop.f32.mrf.mxu0
        %v802 = vadd.f32 0.0, %v801
        %v803 = vpop.f32.mrf.mxu0
        %v804 = vpop.f32.mrf.mxu0
        %v805 = vadd.f32 0.0, %v804
        %v806 = vpop.f32.mrf.mxu0
        %807 = vmatprep.mubr.bf16.mxu0 0
        %808 = vmatmul.mubr.bf16.gmra.mxu0 %v737
        %v809 = vpop.f32.mrf.mxu0
        %v810 = vadd.f32 0.0, %v809
        %v811 = vpop.f32.mrf.mxu0
        %v812 = vpop.f32.mrf.mxu0
        %v813 = vadd.f32 0.0, %v812
        %v814 = vpop.f32.mrf.mxu0
        %815 = vmatprep.mubr.bf16.mxu0 0
        %816 = vmatmul.mubr.bf16.gmra.mxu0 %v740
        %v817 = vpop.f32.mrf.mxu0
        %v818 = vadd.f32 0.0, %v817
        %v819 = vpop.f32.mrf.mxu0
        %v820 = vpop.f32.mrf.mxu0
        %v821 = vadd.f32 0.0, %v820
        %v822 = vpop.f32.mrf.mxu0
        %823 = vmatprep.mubr.bf16.mxu0 0
        %824 = vmatmul.mubr.bf16.gmra.mxu0 %v743
        %v825 = vpop.f32.mrf.mxu0
        %v826 = vadd.f32 0.0, %v825
        %v827 = vpop.f32.mrf.mxu0
        %v828 = vpop.f32.mrf.mxu0
        %v829 = vadd.f32 0.0, %v828
        %v830 = vpop.f32.mrf.mxu0
        %831 = vmatprep.mubr.bf16.mxu0 0
        %832 = vmatmul.mubr.bf16.gmra.mxu0 %v746
        %v833 = vpop.f32.mrf.mxu0
        %v834 = vadd.f32 0.0, %v833
        %v835 = vpop.f32.mrf.mxu0
        %v836 = vpop.f32.mrf.mxu0
        %v837 = vadd.f32 0.0, %v836
        %v838 = vpop.f32.mrf.mxu0
        %839 = vmatprep.mubr.bf16.mxu0 0
        %840 = vmatmul.mubr.bf16.gmra.mxu0 %v749
        %v841 = vpop.f32.mrf.mxu0
        %v842 = vadd.f32 0.0, %v841
        %v843 = vpop.f32.mrf.mxu0
        %v844 = vpop.f32.mrf.mxu0
        %v845 = vadd.f32 0.0, %v844
        %v846 = vpop.f32.mrf.mxu0
        %847 = vdwg.mxu0
        %v848 = vmax.f32 %v608, %v786
        %v849 = vmax.f32 %v611, %v789
        %v850 = vmax.f32 %v616, %v794
        %v851 = vmax.f32 %v619, %v797
        %v852 = vmax.f32 %v624, %v802
        %v853 = vmax.f32 %v627, %v805
        %v854 = vmax.f32 %v632, %v810
        %v855 = vmax.f32 %v635, %v813
        %v856 = vmax.f32 %v640, %v818
        %v857 = vmax.f32 %v643, %v821
        %v858 = vmax.f32 %v648, %v826
        %v859 = vmax.f32 %v651, %v829
        %v860 = vmax.f32 %v656, %v834
        %v861 = vmax.f32 %v659, %v837
        %v862 = vmax.f32 %v664, %v842
        %v863 = vmax.f32 %v667, %v845
        %s864 = scalar_lea.vmem %s441, 128 [#allocation2]
        %v865 = vld [vmem:[%s864] sm:$0xf]
        %v866 = vld [vmem:[%s864 + $0x4] sm:$0xf]
        %v867 = vld [vmem:[%s864 + $0x8] sm:$0xf]
        %v868 = vld [vmem:[%s864 + $0xc] sm:$0xf]
        %v869 = vld [vmem:[%s864 + $0x10] sm:$0xf]
        %v870 = vld [vmem:[%s864 + $0x14] sm:$0xf]
        %v871 = vld [vmem:[%s864 + $0x18] sm:$0xf]
        %v872 = vld [vmem:[%s864 + $0x1c] sm:$0xf]
        %v873 = vld [vmem:[%s864 + $0x20] sm:$0xf]
        %v874 = vld [vmem:[%s864 + $0x24] sm:$0xf]
        %v875 = vld [vmem:[%s864 + $0x28] sm:$0xf]
        %v876 = vld [vmem:[%s864 + $0x2c] sm:$0xf]
        %v877 = vld [vmem:[%s864 + $0x30] sm:$0xf]
        %v878 = vld [vmem:[%s864 + $0x34] sm:$0xf]
        %v879 = vld [vmem:[%s864 + $0x38] sm:$0xf]
        %v880 = vld [vmem:[%s864 + $0x3c] sm:$0xf]
        %v897 = vunpack.c.l.b16 %v865
        %v898 = vunpack.c.l.b16 %v866
        %v899 = vunpack.c.l.b16 %v867
        %v900 = vunpack.c.l.b16 %v868
        %v901 = vunpack.c.l.b16 %v869
        %v902 = vunpack.c.l.b16 %v870
        %v903 = vunpack.c.l.b16 %v871
        %v904 = vunpack.c.l.b16 %v872
        %v905 = vunpack.c.l.b16 %v873
        %v906 = vunpack.c.l.b16 %v874
        %v907 = vunpack.c.l.b16 %v875
        %v908 = vunpack.c.l.b16 %v876
        %v909 = vunpack.c.l.b16 %v877
        %v910 = vunpack.c.l.b16 %v878
        %v911 = vunpack.c.l.b16 %v879
        %v912 = vunpack.c.l.b16 %v880
        %v913 = vpack.c.b16 %v898, %v897
        %v914 = vpack.c.b16 %v900, %v899
        %v915 = vpack.c.b16 %v902, %v901
        %v916 = vpack.c.b16 %v904, %v903
        %v917 = vpack.c.b16 %v906, %v905
        %v918 = vpack.c.b16 %v908, %v907
        %v919 = vpack.c.b16 %v910, %v909
        %v920 = vpack.c.b16 %v912, %v911
        %v922 = vsel %vm541, %v913, 0
        %v925 = vsel %vm541, %v914, 0
        %v928 = vsel %vm541, %v915, 0
        %v931 = vsel %vm541, %v916, 0
        %v934 = vsel %vm541, %v917, 0
        %v937 = vsel %vm541, %v918, 0
        %v940 = vsel %vm541, %v919, 0
        %v943 = vsel %vm541, %v920, 0
        %945 = vmatprep.subr.bf16.mxu0 0
        %946 = vmatpush1.bf16.msra.mxu0 0
        %947 = vmatprep.subr.bf16.mxu0 0
        %948 = vmatpush1.bf16.msra.mxu0 0
        %949 = vmatprep.subr.bf16.mxu0 0
        %950 = vmatpush1.bf16.msra.mxu0 0
        %951 = vmatprep.subr.bf16.mxu0 0
        %952 = vmatpush1.bf16.msra.mxu0 0
        %953 = vmatprep.subr.bf16.mxu0 0
        %954 = vmatpush1.bf16.msra.mxu0 0
        %955 = vmatprep.subr.bf16.mxu0 0
        %956 = vmatpush1.bf16.msra.mxu0 0
        %957 = vmatprep.subr.bf16.mxu0 0
        %958 = vmatpush1.bf16.msra.mxu0 %v571
        %959 = vmatprep.subr.bf16.mxu0 0
        %960 = vmatpush1.bf16.msra.mxu0 %v538
        %961 = vmatprep.subr.bf16.mxu0 0
        %962 = vmatpush2.bf16.msra.mxu0 0
        %963 = vmatprep.subr.bf16.mxu0 0
        %964 = vmatpush2.bf16.msra.mxu0 0
        %965 = vmatprep.subr.bf16.mxu0 0
        %966 = vmatpush2.bf16.msra.mxu0 0
        %967 = vmatprep.subr.bf16.mxu0 0
        %968 = vmatpush2.bf16.msra.mxu0 0
        %969 = vmatprep.subr.bf16.mxu0 0
        %970 = vmatpush2.bf16.msra.mxu0 0
        %971 = vmatprep.subr.bf16.mxu0 0
        %972 = vmatpush2.bf16.msra.mxu0 0
        %973 = vmatprep.subr.bf16.mxu0 0
        %974 = vmatpush2.bf16.msra.mxu0 0
        %975 = vmatprep.subr.bf16.mxu0 0
        %976 = vmatpush2.bf16.msra.mxu0 0
        %977 = vmatprep.mubr.bf16.mxu0 0
        %978 = vmatmul.mubr.bf16.gmra.mxu0 %v922
        %v979 = vpop.f32.mrf.mxu0
        %v980 = vadd.f32 0.0, %v979
        %v981 = vpop.f32.mrf.mxu0
        %v982 = vpop.f32.mrf.mxu0
        %v983 = vadd.f32 0.0, %v982
        %v984 = vpop.f32.mrf.mxu0
        %985 = vmatprep.mubr.bf16.mxu0 0
        %986 = vmatmul.mubr.bf16.gmra.mxu0 %v925
        %v987 = vpop.f32.mrf.mxu0
        %v988 = vadd.f32 0.0, %v987
        %v989 = vpop.f32.mrf.mxu0
        %v990 = vpop.f32.mrf.mxu0
        %v991 = vadd.f32 0.0, %v990
        %v992 = vpop.f32.mrf.mxu0
        %993 = vmatprep.mubr.bf16.mxu0 0
        %994 = vmatmul.mubr.bf16.gmra.mxu0 %v928
        %v995 = vpop.f32.mrf.mxu0
        %v996 = vadd.f32 0.0, %v995
        %v997 = vpop.f32.mrf.mxu0
        %v998 = vpop.f32.mrf.mxu0
        %v999 = vadd.f32 0.0, %v998
        %v1000 = vpop.f32.mrf.mxu0
        %1001 = vmatprep.mubr.bf16.mxu0 0
        %1002 = vmatmul.mubr.bf16.gmra.mxu0 %v931
        %v1003 = vpop.f32.mrf.mxu0
        %v1004 = vadd.f32 0.0, %v1003
        %v1005 = vpop.f32.mrf.mxu0
        %v1006 = vpop.f32.mrf.mxu0
        %v1007 = vadd.f32 0.0, %v1006
        %v1008 = vpop.f32.mrf.mxu0
        %1009 = vmatprep.mubr.bf16.mxu0 0
        %1010 = vmatmul.mubr.bf16.gmra.mxu0 %v934
        %v1011 = vpop.f32.mrf.mxu0
        %v1012 = vadd.f32 0.0, %v1011
        %v1013 = vpop.f32.mrf.mxu0
        %v1014 = vpop.f32.mrf.mxu0
        %v1015 = vadd.f32 0.0, %v1014
        %v1016 = vpop.f32.mrf.mxu0
        %1017 = vmatprep.mubr.bf16.mxu0 0
        %1018 = vmatmul.mubr.bf16.gmra.mxu0 %v937
        %v1019 = vpop.f32.mrf.mxu0
        %v1020 = vadd.f32 0.0, %v1019
        %v1021 = vpop.f32.mrf.mxu0
        %v1022 = vpop.f32.mrf.mxu0
        %v1023 = vadd.f32 0.0, %v1022
        %v1024 = vpop.f32.mrf.mxu0
        %1025 = vmatprep.mubr.bf16.mxu0 0
        %1026 = vmatmul.mubr.bf16.gmra.mxu0 %v940
        %v1027 = vpop.f32.mrf.mxu0
        %v1028 = vadd.f32 0.0, %v1027
        %v1029 = vpop.f32.mrf.mxu0
        %v1030 = vpop.f32.mrf.mxu0
        %v1031 = vadd.f32 0.0, %v1030
        %v1032 = vpop.f32.mrf.mxu0
        %1033 = vmatprep.mubr.bf16.mxu0 0
        %1034 = vmatmul.mubr.bf16.gmra.mxu0 %v943
        %v1035 = vpop.f32.mrf.mxu0
        %v1036 = vadd.f32 0.0, %v1035
        %v1037 = vpop.f32.mrf.mxu0
        %v1038 = vpop.f32.mrf.mxu0
        %v1039 = vadd.f32 0.0, %v1038
        %v1040 = vpop.f32.mrf.mxu0
        %1041 = vdwg.mxu0
        %v1042 = vmax.f32 %v848, %v980
        %v1043 = vmax.f32 %v849, %v983
        %v1044 = vmax.f32 %v850, %v988
        %v1045 = vmax.f32 %v851, %v991
        %v1046 = vmax.f32 %v852, %v996
        %v1047 = vmax.f32 %v853, %v999
        %v1048 = vmax.f32 %v854, %v1004
        %v1049 = vmax.f32 %v855, %v1007
        %v1050 = vmax.f32 %v856, %v1012
        %v1051 = vmax.f32 %v857, %v1015
        %v1052 = vmax.f32 %v858, %v1020
        %v1053 = vmax.f32 %v859, %v1023
        %v1054 = vmax.f32 %v860, %v1028
        %v1055 = vmax.f32 %v861, %v1031
        %v1056 = vmax.f32 %v862, %v1036
        %v1057 = vmax.f32 %v863, %v1039
        %s1058 = scalar_lea.vmem %s441, 192 [#allocation2]
        %v1059 = vld [vmem:[%s1058] sm:$0xf]
        %v1060 = vld [vmem:[%s1058 + $0x4] sm:$0xf]
        %v1061 = vld [vmem:[%s1058 + $0x8] sm:$0xf]
        %v1062 = vld [vmem:[%s1058 + $0xc] sm:$0xf]
        %v1063 = vld [vmem:[%s1058 + $0x10] sm:$0xf]
        %v1064 = vld [vmem:[%s1058 + $0x14] sm:$0xf]
        %v1065 = vld [vmem:[%s1058 + $0x18] sm:$0xf]
        %v1066 = vld [vmem:[%s1058 + $0x1c] sm:$0xf]
        %v1067 = vld [vmem:[%s1058 + $0x20] sm:$0xf]
        %v1068 = vld [vmem:[%s1058 + $0x24] sm:$0xf]
        %v1069 = vld [vmem:[%s1058 + $0x28] sm:$0xf]
        %v1070 = vld [vmem:[%s1058 + $0x2c] sm:$0xf]
        %v1071 = vld [vmem:[%s1058 + $0x30] sm:$0xf]
        %v1072 = vld [vmem:[%s1058 + $0x34] sm:$0xf]
        %v1073 = vld [vmem:[%s1058 + $0x38] sm:$0xf]
        %v1074 = vld [vmem:[%s1058 + $0x3c] sm:$0xf]
        %v1091 = vunpack.c.l.b16 %v1059
        %v1092 = vunpack.c.l.b16 %v1060
        %v1093 = vunpack.c.l.b16 %v1061
        %v1094 = vunpack.c.l.b16 %v1062
        %v1095 = vunpack.c.l.b16 %v1063
        %v1096 = vunpack.c.l.b16 %v1064
        %v1097 = vunpack.c.l.b16 %v1065
        %v1098 = vunpack.c.l.b16 %v1066
        %v1099 = vunpack.c.l.b16 %v1067
        %v1100 = vunpack.c.l.b16 %v1068
        %v1101 = vunpack.c.l.b16 %v1069
        %v1102 = vunpack.c.l.b16 %v1070
        %v1103 = vunpack.c.l.b16 %v1071
        %v1104 = vunpack.c.l.b16 %v1072
        %v1105 = vunpack.c.l.b16 %v1073
        %v1106 = vunpack.c.l.b16 %v1074
        %v1107 = vpack.c.b16 %v1092, %v1091
        %v1108 = vpack.c.b16 %v1094, %v1093
        %v1109 = vpack.c.b16 %v1096, %v1095
        %v1110 = vpack.c.b16 %v1098, %v1097
        %v1111 = vpack.c.b16 %v1100, %v1099
        %v1112 = vpack.c.b16 %v1102, %v1101
        %v1113 = vpack.c.b16 %v1104, %v1103
        %v1114 = vpack.c.b16 %v1106, %v1105
        %v1116 = vsel %vm541, %v1107, 0
        %v1119 = vsel %vm541, %v1108, 0
        %v1122 = vsel %vm541, %v1109, 0
        %v1125 = vsel %vm541, %v1110, 0
        %v1128 = vsel %vm541, %v1111, 0
        %v1131 = vsel %vm541, %v1112, 0
        %v1134 = vsel %vm541, %v1113, 0
        %v1137 = vsel %vm541, %v1114, 0
        %1139 = vmatprep.subr.bf16.mxu0 0
        %1140 = vmatpush1.bf16.msra.mxu0 0
        %1141 = vmatprep.subr.bf16.mxu0 0
        %1142 = vmatpush1.bf16.msra.mxu0 0
        %1143 = vmatprep.subr.bf16.mxu0 0
        %1144 = vmatpush1.bf16.msra.mxu0 0
        %1145 = vmatprep.subr.bf16.mxu0 0
        %1146 = vmatpush1.bf16.msra.mxu0 0
        %1147 = vmatprep.subr.bf16.mxu0 0
        %1148 = vmatpush1.bf16.msra.mxu0 0
        %1149 = vmatprep.subr.bf16.mxu0 0
        %1150 = vmatpush1.bf16.msra.mxu0 0
        %1151 = vmatprep.subr.bf16.mxu0 0
        %1152 = vmatpush1.bf16.msra.mxu0 %v571
        %1153 = vmatprep.subr.bf16.mxu0 0
        %1154 = vmatpush1.bf16.msra.mxu0 %v538
        %1155 = vmatprep.subr.bf16.mxu0 0
        %1156 = vmatpush2.bf16.msra.mxu0 0
        %1157 = vmatprep.subr.bf16.mxu0 0
        %1158 = vmatpush2.bf16.msra.mxu0 0
        %1159 = vmatprep.subr.bf16.mxu0 0
        %1160 = vmatpush2.bf16.msra.mxu0 0
        %1161 = vmatprep.subr.bf16.mxu0 0
        %1162 = vmatpush2.bf16.msra.mxu0 0
        %1163 = vmatprep.subr.bf16.mxu0 0
        %1164 = vmatpush2.bf16.msra.mxu0 0
        %1165 = vmatprep.subr.bf16.mxu0 0
        %1166 = vmatpush2.bf16.msra.mxu0 0
        %1167 = vmatprep.subr.bf16.mxu0 0
        %1168 = vmatpush2.bf16.msra.mxu0 0
        %1169 = vmatprep.subr.bf16.mxu0 0
        %1170 = vmatpush2.bf16.msra.mxu0 0
        %1171 = vmatprep.mubr.bf16.mxu0 0
        %1172 = vmatmul.mubr.bf16.gmra.mxu0 %v1116
        %v1173 = vpop.f32.mrf.mxu0
        %v1174 = vadd.f32 0.0, %v1173
        %v1175 = vpop.f32.mrf.mxu0
        %v1176 = vpop.f32.mrf.mxu0
        %v1177 = vadd.f32 0.0, %v1176
        %v1178 = vpop.f32.mrf.mxu0
        %1179 = vmatprep.mubr.bf16.mxu0 0
        %1180 = vmatmul.mubr.bf16.gmra.mxu0 %v1119
        %v1181 = vpop.f32.mrf.mxu0
        %v1182 = vadd.f32 0.0, %v1181
        %v1183 = vpop.f32.mrf.mxu0
        %v1184 = vpop.f32.mrf.mxu0
        %v1185 = vadd.f32 0.0, %v1184
        %v1186 = vpop.f32.mrf.mxu0
        %1187 = vmatprep.mubr.bf16.mxu0 0
        %1188 = vmatmul.mubr.bf16.gmra.mxu0 %v1122
        %v1189 = vpop.f32.mrf.mxu0
        %v1190 = vadd.f32 0.0, %v1189
        %v1191 = vpop.f32.mrf.mxu0
        %v1192 = vpop.f32.mrf.mxu0
        %v1193 = vadd.f32 0.0, %v1192
        %v1194 = vpop.f32.mrf.mxu0
        %1195 = vmatprep.mubr.bf16.mxu0 0
        %1196 = vmatmul.mubr.bf16.gmra.mxu0 %v1125
        %v1197 = vpop.f32.mrf.mxu0
        %v1198 = vadd.f32 0.0, %v1197
        %v1199 = vpop.f32.mrf.mxu0
        %v1200 = vpop.f32.mrf.mxu0
        %v1201 = vadd.f32 0.0, %v1200
        %v1202 = vpop.f32.mrf.mxu0
        %1203 = vmatprep.mubr.bf16.mxu0 0
        %1204 = vmatmul.mubr.bf16.gmra.mxu0 %v1128
        %v1205 = vpop.f32.mrf.mxu0
        %v1206 = vadd.f32 0.0, %v1205
        %v1207 = vpop.f32.mrf.mxu0
        %v1208 = vpop.f32.mrf.mxu0
        %v1209 = vadd.f32 0.0, %v1208
        %v1210 = vpop.f32.mrf.mxu0
        %1211 = vmatprep.mubr.bf16.mxu0 0
        %1212 = vmatmul.mubr.bf16.gmra.mxu0 %v1131
        %v1213 = vpop.f32.mrf.mxu0
        %v1214 = vadd.f32 0.0, %v1213
        %v1215 = vpop.f32.mrf.mxu0
        %v1216 = vpop.f32.mrf.mxu0
        %v1217 = vadd.f32 0.0, %v1216
        %v1218 = vpop.f32.mrf.mxu0
        %1219 = vmatprep.mubr.bf16.mxu0 0
        %1220 = vmatmul.mubr.bf16.gmra.mxu0 %v1134
        %v1221 = vpop.f32.mrf.mxu0
        %v1222 = vadd.f32 0.0, %v1221
        %v1223 = vpop.f32.mrf.mxu0
        %v1224 = vpop.f32.mrf.mxu0
        %v1225 = vadd.f32 0.0, %v1224
        %v1226 = vpop.f32.mrf.mxu0
        %1227 = vmatprep.mubr.bf16.mxu0 0
        %1228 = vmatmul.mubr.bf16.gmra.mxu0 %v1137
        %v1229 = vpop.f32.mrf.mxu0
        %v1230 = vadd.f32 0.0, %v1229
        %v1231 = vpop.f32.mrf.mxu0
        %v1232 = vpop.f32.mrf.mxu0
        %v1233 = vadd.f32 0.0, %v1232
        %v1234 = vpop.f32.mrf.mxu0
        %1235 = vdwg.mxu0
        %v1236 = vmax.f32 %v1042, %v1174
        %v1237 = vmax.f32 %v1043, %v1177
        %v1238 = vmax.f32 %v1044, %v1182
        %v1239 = vmax.f32 %v1045, %v1185
        %v1240 = vmax.f32 %v1046, %v1190
        %v1241 = vmax.f32 %v1047, %v1193
        %v1242 = vmax.f32 %v1048, %v1198
        %v1243 = vmax.f32 %v1049, %v1201
        %v1244 = vmax.f32 %v1050, %v1206
        %v1245 = vmax.f32 %v1051, %v1209
        %v1246 = vmax.f32 %v1052, %v1214
        %v1247 = vmax.f32 %v1053, %v1217
        %v1248 = vmax.f32 %v1054, %v1222
        %v1249 = vmax.f32 %v1055, %v1225
        %v1250 = vmax.f32 %v1056, %v1230
        %v1251 = vmax.f32 %v1057, %v1233
        %v1252 = vld [vmem:[%s2] sm:$0x1]
        %v1254 = vlaneseq
        %v1255 = vshrl.u32 %v1254, 7
        %v1256 = vsub.s32 0, %v1255
        %v1257 = vrot.slane %v1252, %v1256
        %v1259 = vadd.f32 %v1236, %v1257
        %v1260 = vadd.f32 %v1237, %v1257
        %v1261 = vadd.f32 %v1238, %v1257
        %v1262 = vadd.f32 %v1239, %v1257
        %v1263 = vadd.f32 %v1240, %v1257
        %v1264 = vadd.f32 %v1241, %v1257
        %v1265 = vadd.f32 %v1242, %v1257
        %v1266 = vadd.f32 %v1243, %v1257
        %v1267 = vadd.f32 %v1244, %v1257
        %v1268 = vadd.f32 %v1245, %v1257
        %v1269 = vadd.f32 %v1246, %v1257
        %v1270 = vadd.f32 %v1247, %v1257
        %v1271 = vadd.f32 %v1248, %v1257
        %v1272 = vadd.f32 %v1249, %v1257
        %v1273 = vadd.f32 %v1250, %v1257
        %v1274 = vadd.f32 %v1251, %v1257
        %v1275 = vmax.f32 %v1259, 0.0
        %v1276 = vmax.f32 %v1260, 0.0
        %v1277 = vmax.f32 %v1261, 0.0
        %v1278 = vmax.f32 %v1262, 0.0
        %v1279 = vmax.f32 %v1263, 0.0
        %v1280 = vmax.f32 %v1264, 0.0
        %v1281 = vmax.f32 %v1265, 0.0
        %v1282 = vmax.f32 %v1266, 0.0
        %v1283 = vmax.f32 %v1267, 0.0
        %v1284 = vmax.f32 %v1268, 0.0
        %v1285 = vmax.f32 %v1269, 0.0
        %v1286 = vmax.f32 %v1270, 0.0
        %v1287 = vmax.f32 %v1271, 0.0
        %v1288 = vmax.f32 %v1272, 0.0
        %v1289 = vmax.f32 %v1273, 0.0
        %v1290 = vmax.f32 %v1274, 0.0
        %vm1291 = vcmask 130048
        %1292 = vst.msk [vmem:[%s467] sm:$0xff] %vm1291, %v1275
        %1293 = vst.msk [vmem:[%s467 + $0x8] sm:$0xff] %vm1291, %v1276
        %1294 = vst.msk [vmem:[%s467 + $0x10] sm:$0xff] %vm1291, %v1277
        %1295 = vst.msk [vmem:[%s467 + $0x18] sm:$0xff] %vm1291, %v1278
        %1296 = vst.msk [vmem:[%s467 + $0x20] sm:$0xff] %vm1291, %v1279
        %1297 = vst.msk [vmem:[%s467 + $0x28] sm:$0xff] %vm1291, %v1280
        %1298 = vst.msk [vmem:[%s467 + $0x30] sm:$0xff] %vm1291, %v1281
        %1299 = vst.msk [vmem:[%s467 + $0x38] sm:$0xff] %vm1291, %v1282
        %1300 = vst.msk [vmem:[%s467 + $0x40] sm:$0xff] %vm1291, %v1283
        %1301 = vst.msk [vmem:[%s467 + $0x48] sm:$0xff] %vm1291, %v1284
        %1302 = vst.msk [vmem:[%s467 + $0x50] sm:$0xff] %vm1291, %v1285
        %1303 = vst.msk [vmem:[%s467 + $0x58] sm:$0xff] %vm1291, %v1286
        %1304 = vst.msk [vmem:[%s467 + $0x60] sm:$0xff] %vm1291, %v1287
        %1305 = vst.msk [vmem:[%s467 + $0x68] sm:$0xff] %vm1291, %v1288
        %1306 = vst.msk [vmem:[%s467 + $0x70] sm:$0xff] %vm1291, %v1289
        %1307 = vst.msk [vmem:[%s467 + $0x78] sm:$0xff] %vm1291, %v1290
        %s1308 = smul.u32 16, %s14
        %p1309 = scmp.lt.s32.totalorder %s1308, 63
        %s1310 = scalar_select %p1309, %s1308, 63
        %s1311 = smul.addr %s1310, 8
        %s1312 = scalar_lea.vmem %s3, %s1311
        // Predicated region
        $region74: #{custom_cnn_forward.4} parent=68 // pred_check
          %p1313 = pneg %p100
        $region75: #{custom_cnn_forward.4} parent=68 // pred_check_branch
          %1315 = sbr.rel (%p1313) target = $region77
        $region76: #{custom_cnn_forward.4} parent=68 // pred_region
          %s1316 = smul.u32 16, %s14
        $region77: #{custom_cnn_forward.4} parent=68 // pred_fallthru
          _
      $region69: #{custom_cnn_forward.4} parent=5 // pred_fallthru
        _
      %p1317 = scmp.le.s32.totalorder 2, %s9
      // Predicated region
      $region78: #{custom_cnn_forward.4} parent=5 // pred_check
        %p1318 = pneg %p1317
      $region79: #{custom_cnn_forward.4} parent=5 // pred_check_branch
        %1320 = sbr.rel (%p1318) target = $region81
      $region80: #{custom_cnn_forward.4} parent=5 // pred_region
        %s1321 = ssub.s32 %s9, 2
        // Predicated region
        $region82: #{custom_cnn_forward.4} parent=80 // pred_check
          %p1322 = pneg %p106
        $region83: #{custom_cnn_forward.4} parent=80 // pred_check_branch
          %1324 = sbr.rel (%p1322) target = $region85
        $region84: #{custom_cnn_forward.4} parent=80 // pred_region
          %s1325 = smul.u32 16, %s15
          %p1326 = scmp.lt.s32.totalorder %s1325, 63
          %s1327 = scalar_select %p1326, %s1325, 63
          %s1328 = smul.addr %s1327, 8
          %s1329 = scalar_lea.vmem %s3, %s1328
        $region85: #{custom_cnn_forward.4} parent=80 // pred_fallthru
          _
      $region81: #{custom_cnn_forward.4} parent=5 // pred_fallthru
        _
    $region6: #{custom_cnn_forward.4} parent=1 // loop_footer
      %s13 = sadd.s32 1, %s9
    $region7: #{custom_cnn_forward.4} parent=1 // loop_footer_branch
      %8 = sbr.rel target = $region3
    $region8: #{custom_cnn_forward.4} parent=1 // loop_exit
      _

// kernel: custom_cnn_forward.5
$region0: #{custom_cnn_forward.5}
  #allocation0 [shape = 'u32[]', space=smem, size = 0x4, offset = 0x4, fixed_abs, tag = 'smem constant byte address 0x4 - core index']
  #allocation1 [shape = 'u32[144,128]{1,0:T(1,128)}', space=vmem, size = 0x12000, scoped, tag = 'internal scratch']
  %s0 = inlined_call_operand.vmem [shape: bf16[4,128,144], index: 0, kind: input, shape index: {}]
  %s1 = inlined_call_operand.vmem [shape: bf16[144,32], index: 1, kind: input, shape index: {}]
  %s2 = inlined_call_operand.vmem [shape: f32[1,32], index: 2, kind: input, shape index: {}]
  %s3 = inlined_call_operand.vmem [shape: f32[128,32], index: 3, kind: output, shape index: {}]
  %s4 = sld [smem:[#allocation0]]
  $region22: #{custom_cnn_forward.5} parent=0
    _
  %s6 = ssub.s32 1, %s4
  %s7 = scalar_select 0, %s6, %s4
  // Predicated region
  $region2: #{custom_cnn_forward.5} parent=0 // pred_check
    _
  $region3: #{custom_cnn_forward.5} parent=0 // pred_check_branch
    %9 = sbr.rel (0) target = $region5
  $region4: #{custom_cnn_forward.5} parent=0 // pred_region
    _
  $region5: #{custom_cnn_forward.5} parent=0 // pred_fallthru
    _
  // Predicated region
  $region6: #{custom_cnn_forward.5} parent=0 // pred_check
    _
  $region7: #{custom_cnn_forward.5} parent=0 // pred_check_branch
    %11 = sbr.rel (0) target = $region9
  $region8: #{custom_cnn_forward.5} parent=0 // pred_region
    _
  $region9: #{custom_cnn_forward.5} parent=0 // pred_fallthru
    _
  // Predicated region
  $region10: #{custom_cnn_forward.5} parent=0 // pred_check
    _
  $region11: #{custom_cnn_forward.5} parent=0 // pred_check_branch
    %13 = sbr.rel (0) target = $region13
  $region12: #{custom_cnn_forward.5} parent=0 // pred_region
    _
  $region13: #{custom_cnn_forward.5} parent=0 // pred_fallthru
    _
  %v15 = vld [vmem:[%s1] sm:$0xf]
  %v16 = vld [vmem:[%s1 + $0x4] sm:$0xf]
  %v17 = vld [vmem:[%s1 + $0x8] sm:$0xf]
  %v18 = vld [vmem:[%s1 + $0xc] sm:$0xf]
  %v19 = vld [vmem:[%s1 + $0x10] sm:$0xf]
  %v20 = vld [vmem:[%s1 + $0x14] sm:$0xf]
  %v21 = vld [vmem:[%s1 + $0x18] sm:$0xf]
  %v22 = vld [vmem:[%s1 + $0x1c] sm:$0xf]
  %v23 = vld [vmem:[%s1 + $0x20] sm:$0xf]
  %v24 = vld [vmem:[%s1 + $0x24] sm:$0xf]
  %v25 = vld [vmem:[%s1 + $0x28] sm:$0xf]
  %v26 = vld [vmem:[%s1 + $0x2c] sm:$0xf]
  %v27 = vld [vmem:[%s1 + $0x30] sm:$0xf]
  %v28 = vld [vmem:[%s1 + $0x34] sm:$0xf]
  %v29 = vld [vmem:[%s1 + $0x38] sm:$0xf]
  %v30 = vld [vmem:[%s1 + $0x3c] sm:$0xf]
  %v31 = vld [vmem:[%s1 + $0x40] sm:$0xf]
  %v32 = vld [vmem:[%s1 + $0x44] sm:$0xf]
  %v33 = vld [vmem:[%s0] sm:$0xff]
  %v34 = vld [vmem:[%s0 + $0x8] sm:$0xff]
  %v35 = vld [vmem:[%s0 + $0x10] sm:$0xff]
  %v36 = vld [vmem:[%s0 + $0x18] sm:$0xff]
  %v37 = vld [vmem:[%s0 + $0x20] sm:$0xff]
  %v38 = vld [vmem:[%s0 + $0x28] sm:$0xff]
  %v39 = vld [vmem:[%s0 + $0x30] sm:$0xff]
  %v40 = vld [vmem:[%s0 + $0x38] sm:$0xff]
  %v41 = vld [vmem:[%s0 + $0x40] sm:$0xff]
  %v42 = vld [vmem:[%s0 + $0x48] sm:$0xff]
  %v43 = vld [vmem:[%s0 + $0x50] sm:$0xff]
  %v44 = vld [vmem:[%s0 + $0x58] sm:$0xff]
  %v45 = vld [vmem:[%s0 + $0x60] sm:$0xff]
  %v46 = vld [vmem:[%s0 + $0x68] sm:$0xff]
  %v47 = vld [vmem:[%s0 + $0x70] sm:$0xff]
  %v48 = vld [vmem:[%s0 + $0x78] sm:$0xff]
  %v65 = vunpack.c.l.b16 %v33
  %v66 = vunpack.c.h.b16 %v33
  %v67 = vunpack.c.l.b16 %v34
  %v68 = vunpack.c.h.b16 %v34
  %v69 = vunpack.c.l.b16 %v35
  %v70 = vunpack.c.h.b16 %v35
  %v71 = vunpack.c.l.b16 %v36
  %v72 = vunpack.c.h.b16 %v36
  %v73 = vunpack.c.l.b16 %v37
  %v74 = vunpack.c.h.b16 %v37
  %v75 = vunpack.c.l.b16 %v38
  %v76 = vunpack.c.h.b16 %v38
  %v77 = vunpack.c.l.b16 %v39
  %v78 = vunpack.c.h.b16 %v39
  %v79 = vunpack.c.l.b16 %v40
  %v80 = vunpack.c.h.b16 %v40
  %v81 = vunpack.c.l.b16 %v41
  %v82 = vunpack.c.h.b16 %v41
  %v83 = vunpack.c.l.b16 %v42
  %v84 = vunpack.c.h.b16 %v42
  %v85 = vunpack.c.l.b16 %v43
  %v86 = vunpack.c.h.b16 %v43
  %v87 = vunpack.c.l.b16 %v44
  %v88 = vunpack.c.h.b16 %v44
  %v89 = vunpack.c.l.b16 %v45
  %v90 = vunpack.c.h.b16 %v45
  %v91 = vunpack.c.l.b16 %v46
  %v92 = vunpack.c.h.b16 %v46
  %v93 = vunpack.c.l.b16 %v47
  %v94 = vunpack.c.h.b16 %v47
  %v95 = vunpack.c.l.b16 %v48
  %v96 = vunpack.c.h.b16 %v48
  %v97 = vpack.c.b16 %v67, %v65
  %v98 = vpack.c.b16 %v68, %v66
  %v99 = vpack.c.b16 %v71, %v69
  %v100 = vpack.c.b16 %v72, %v70
  %v101 = vpack.c.b16 %v75, %v73
  %v102 = vpack.c.b16 %v76, %v74
  %v103 = vpack.c.b16 %v79, %v77
  %v104 = vpack.c.b16 %v80, %v78
  %v105 = vpack.c.b16 %v83, %v81
  %v106 = vpack.c.b16 %v84, %v82
  %v107 = vpack.c.b16 %v87, %v85
  %v108 = vpack.c.b16 %v88, %v86
  %v109 = vpack.c.b16 %v91, %v89
  %v110 = vpack.c.b16 %v92, %v90
  %v111 = vpack.c.b16 %v95, %v93
  %v112 = vpack.c.b16 %v96, %v94
  %v139 = vunpack.c.l.b16 %v15
  %v140 = vunpack.c.l.b16 %v16
  %v141 = vunpack.c.l.b16 %v17
  %v142 = vunpack.c.l.b16 %v18
  %v143 = vunpack.c.l.b16 %v19
  %v144 = vunpack.c.l.b16 %v20
  %v145 = vunpack.c.l.b16 %v21
  %v146 = vunpack.c.l.b16 %v22
  %v147 = vunpack.c.l.b16 %v23
  %v148 = vunpack.c.l.b16 %v24
  %v149 = vunpack.c.l.b16 %v25
  %v150 = vunpack.c.l.b16 %v26
  %v151 = vunpack.c.l.b16 %v27
  %v152 = vunpack.c.l.b16 %v28
  %v153 = vunpack.c.l.b16 %v29
  %v154 = vunpack.c.l.b16 %v30
  %v155 = vunpack.c.l.b16 %v31
  %v156 = vunpack.c.l.b16 %v32
  %v157 = vpack.c.b16 %v140, %v139
  %v158 = vpack.c.b16 %v142, %v141
  %v159 = vpack.c.b16 %v144, %v143
  %v160 = vpack.c.b16 %v146, %v145
  %v161 = vpack.c.b16 %v148, %v147
  %v162 = vpack.c.b16 %v150, %v149
  %v163 = vpack.c.b16 %v152, %v151
  %v164 = vpack.c.b16 %v154, %v153
  %v165 = vpack.c.b16 %v156, %v155
  %vm175 = vcmask 130048
  %v177 = vsel %vm175, %v98, 0
  %v180 = vsel %vm175, %v100, 0
  %v183 = vsel %vm175, %v102, 0
  %v186 = vsel %vm175, %v104, 0
  %v189 = vsel %vm175, %v106, 0
  %v192 = vsel %vm175, %v108, 0
  %v195 = vsel %vm175, %v110, 0
  %v198 = vsel %vm175, %v112, 0
  %200 = vmatprep.subr.bf16.mxu0 0
  %201 = vmatpush1.bf16.msra.mxu0 %v164
  %202 = vmatprep.subr.bf16.mxu0 0
  %203 = vmatpush1.bf16.msra.mxu0 %v163
  %204 = vmatprep.subr.bf16.mxu0 0
  %205 = vmatpush1.bf16.msra.mxu0 %v162
  %206 = vmatprep.subr.bf16.mxu0 0
  %207 = vmatpush1.bf16.msra.mxu0 %v161
  %208 = vmatprep.subr.bf16.mxu0 0
  %209 = vmatpush1.bf16.msra.mxu0 %v160
  %210 = vmatprep.subr.bf16.mxu0 0
  %211 = vmatpush1.bf16.msra.mxu0 %v159
  %212 = vmatprep.subr.bf16.mxu0 0
  %213 = vmatpush1.bf16.msra.mxu0 %v158
  %214 = vmatprep.subr.bf16.mxu0 0
  %215 = vmatpush1.bf16.msra.mxu0 %v157
  %216 = vmatprep.subr.bf16.mxu0 0
  %217 = vmatpush2.bf16.msra.mxu0 0
  %218 = vmatprep.subr.bf16.mxu0 0
  %219 = vmatpush2.bf16.msra.mxu0 0
  %220 = vmatprep.subr.bf16.mxu0 0
  %221 = vmatpush2.bf16.msra.mxu0 0
  %222 = vmatprep.subr.bf16.mxu0 0
  %223 = vmatpush2.bf16.msra.mxu0 0
  %224 = vmatprep.subr.bf16.mxu0 0
  %225 = vmatpush2.bf16.msra.mxu0 0
  %226 = vmatprep.subr.bf16.mxu0 0
  %227 = vmatpush2.bf16.msra.mxu0 0
  %228 = vmatprep.subr.bf16.mxu0 0
  %229 = vmatpush2.bf16.msra.mxu0 0
  %230 = vmatprep.subr.bf16.mxu0 0
  %231 = vmatpush2.bf16.msra.mxu0 %v165
  %232 = vmatprep.mubr.bf16.mxu0 %v177
  %233 = vmatmul.mubr.bf16.gmra.mxu0 %v97
  %v234 = vpop.f32.mrf.mxu0
  %v235 = vadd.f32 0.0, %v234
  %v236 = vpop.f32.mrf.mxu0
  %v237 = vpop.f32.mrf.mxu0
  %v238 = vadd.f32 0.0, %v237
  %v239 = vpop.f32.mrf.mxu0
  %240 = vmatprep.mubr.bf16.mxu0 %v180
  %241 = vmatmul.mubr.bf16.gmra.mxu0 %v99
  %v242 = vpop.f32.mrf.mxu0
  %v243 = vadd.f32 0.0, %v242
  %v244 = vpop.f32.mrf.mxu0
  %v245 = vpop.f32.mrf.mxu0
  %v246 = vadd.f32 0.0, %v245
  %v247 = vpop.f32.mrf.mxu0
  %248 = vmatprep.mubr.bf16.mxu0 %v183
  %249 = vmatmul.mubr.bf16.gmra.mxu0 %v101
  %v250 = vpop.f32.mrf.mxu0
  %v251 = vadd.f32 0.0, %v250
  %v252 = vpop.f32.mrf.mxu0
  %v253 = vpop.f32.mrf.mxu0
  %v254 = vadd.f32 0.0, %v253
  %v255 = vpop.f32.mrf.mxu0
  %256 = vmatprep.mubr.bf16.mxu0 %v186
  %257 = vmatmul.mubr.bf16.gmra.mxu0 %v103
  %v258 = vpop.f32.mrf.mxu0
  %v259 = vadd.f32 0.0, %v258
  %v260 = vpop.f32.mrf.mxu0
  %v261 = vpop.f32.mrf.mxu0
  %v262 = vadd.f32 0.0, %v261
  %v263 = vpop.f32.mrf.mxu0
  %264 = vmatprep.mubr.bf16.mxu0 %v189
  %265 = vmatmul.mubr.bf16.gmra.mxu0 %v105
  %v266 = vpop.f32.mrf.mxu0
  %v267 = vadd.f32 0.0, %v266
  %v268 = vpop.f32.mrf.mxu0
  %v269 = vpop.f32.mrf.mxu0
  %v270 = vadd.f32 0.0, %v269
  %v271 = vpop.f32.mrf.mxu0
  %272 = vmatprep.mubr.bf16.mxu0 %v192
  %273 = vmatmul.mubr.bf16.gmra.mxu0 %v107
  %v274 = vpop.f32.mrf.mxu0
  %v275 = vadd.f32 0.0, %v274
  %v276 = vpop.f32.mrf.mxu0
  %v277 = vpop.f32.mrf.mxu0
  %v278 = vadd.f32 0.0, %v277
  %v279 = vpop.f32.mrf.mxu0
  %280 = vmatprep.mubr.bf16.mxu0 %v195
  %281 = vmatmul.mubr.bf16.gmra.mxu0 %v109
  %v282 = vpop.f32.mrf.mxu0
  %v283 = vadd.f32 0.0, %v282
  %v284 = vpop.f32.mrf.mxu0
  %v285 = vpop.f32.mrf.mxu0
  %v286 = vadd.f32 0.0, %v285
  %v287 = vpop.f32.mrf.mxu0
  %288 = vmatprep.mubr.bf16.mxu0 %v198
  %289 = vmatmul.mubr.bf16.gmra.mxu0 %v111
  %v290 = vpop.f32.mrf.mxu0
  %v291 = vadd.f32 0.0, %v290
  %v292 = vpop.f32.mrf.mxu0
  %v293 = vpop.f32.mrf.mxu0
  %v294 = vadd.f32 0.0, %v293
  %v295 = vpop.f32.mrf.mxu0
  %296 = vdwg.mxu0
  %s297 = scalar_lea.vmem %s0, 128
  %v298 = vld [vmem:[%s297] sm:$0xff]
  %v299 = vld [vmem:[%s297 + $0x8] sm:$0xff]
  %v300 = vld [vmem:[%s297 + $0x10] sm:$0xff]
  %v301 = vld [vmem:[%s297 + $0x18] sm:$0xff]
  %v302 = vld [vmem:[%s297 + $0x20] sm:$0xff]
  %v303 = vld [vmem:[%s297 + $0x28] sm:$0xff]
  %v304 = vld [vmem:[%s297 + $0x30] sm:$0xff]
  %v305 = vld [vmem:[%s297 + $0x38] sm:$0xff]
  %v306 = vld [vmem:[%s297 + $0x40] sm:$0xff]
  %v307 = vld [vmem:[%s297 + $0x48] sm:$0xff]
  %v308 = vld [vmem:[%s297 + $0x50] sm:$0xff]
  %v309 = vld [vmem:[%s297 + $0x58] sm:$0xff]
  %v310 = vld [vmem:[%s297 + $0x60] sm:$0xff]
  %v311 = vld [vmem:[%s297 + $0x68] sm:$0xff]
  %v312 = vld [vmem:[%s297 + $0x70] sm:$0xff]
  %v313 = vld [vmem:[%s297 + $0x78] sm:$0xff]
  %v330 = vunpack.c.l.b16 %v298
  %v331 = vunpack.c.h.b16 %v298
  %v332 = vunpack.c.l.b16 %v299
  %v333 = vunpack.c.h.b16 %v299
  %v334 = vunpack.c.l.b16 %v300
  %v335 = vunpack.c.h.b16 %v300
  %v336 = vunpack.c.l.b16 %v301
  %v337 = vunpack.c.h.b16 %v301
  %v338 = vunpack.c.l.b16 %v302
  %v339 = vunpack.c.h.b16 %v302
  %v340 = vunpack.c.l.b16 %v303
  %v341 = vunpack.c.h.b16 %v303
  %v342 = vunpack.c.l.b16 %v304
  %v343 = vunpack.c.h.b16 %v304
  %v344 = vunpack.c.l.b16 %v305
  %v345 = vunpack.c.h.b16 %v305
  %v346 = vunpack.c.l.b16 %v306
  %v347 = vunpack.c.h.b16 %v306
  %v348 = vunpack.c.l.b16 %v307
  %v349 = vunpack.c.h.b16 %v307
  %v350 = vunpack.c.l.b16 %v308
  %v351 = vunpack.c.h.b16 %v308
  %v352 = vunpack.c.l.b16 %v309
  %v353 = vunpack.c.h.b16 %v309
  %v354 = vunpack.c.l.b16 %v310
  %v355 = vunpack.c.h.b16 %v310
  %v356 = vunpack.c.l.b16 %v311
  %v357 = vunpack.c.h.b16 %v311
  %v358 = vunpack.c.l.b16 %v312
  %v359 = vunpack.c.h.b16 %v312
  %v360 = vunpack.c.l.b16 %v313
  %v361 = vunpack.c.h.b16 %v313
  %v362 = vpack.c.b16 %v332, %v330
  %v363 = vpack.c.b16 %v333, %v331
  %v364 = vpack.c.b16 %v336, %v334
  %v365 = vpack.c.b16 %v337, %v335
  %v366 = vpack.c.b16 %v340, %v338
  %v367 = vpack.c.b16 %v341, %v339
  %v368 = vpack.c.b16 %v344, %v342
  %v369 = vpack.c.b16 %v345, %v343
  %v370 = vpack.c.b16 %v348, %v346
  %v371 = vpack.c.b16 %v349, %v347
  %v372 = vpack.c.b16 %v352, %v350
  %v373 = vpack.c.b16 %v353, %v351
  %v374 = vpack.c.b16 %v356, %v354
  %v375 = vpack.c.b16 %v357, %v355
  %v376 = vpack.c.b16 %v360, %v358
  %v377 = vpack.c.b16 %v361, %v359
  %v387 = vsel %vm175, %v363, 0
  %v390 = vsel %vm175, %v365, 0
  %v393 = vsel %vm175, %v367, 0
  %v396 = vsel %vm175, %v369, 0
  %v399 = vsel %vm175, %v371, 0
  %v402 = vsel %vm175, %v373, 0
  %v405 = vsel %vm175, %v375, 0
  %v408 = vsel %vm175, %v377, 0
  %410 = vmatprep.subr.bf16.mxu0 0
  %411 = vmatpush1.bf16.msra.mxu0 %v164
  %412 = vmatprep.subr.bf16.mxu0 0
  %413 = vmatpush1.bf16.msra.mxu0 %v163
  %414 = vmatprep.subr.bf16.mxu0 0
  %415 = vmatpush1.bf16.msra.mxu0 %v162
  %416 = vmatprep.subr.bf16.mxu0 0
  %417 = vmatpush1.bf16.msra.mxu0 %v161
  %418 = vmatprep.subr.bf16.mxu0 0
  %419 = vmatpush1.bf16.msra.mxu0 %v160
  %420 = vmatprep.subr.bf16.mxu0 0
  %421 = vmatpush1.bf16.msra.mxu0 %v159
  %422 = vmatprep.subr.bf16.mxu0 0
  %423 = vmatpush1.bf16.msra.mxu0 %v158
  %424 = vmatprep.subr.bf16.mxu0 0
  %425 = vmatpush1.bf16.msra.mxu0 %v157
  %426 = vmatprep.subr.bf16.mxu0 0
  %427 = vmatpush2.bf16.msra.mxu0 0
  %428 = vmatprep.subr.bf16.mxu0 0
  %429 = vmatpush2.bf16.msra.mxu0 0
  %430 = vmatprep.subr.bf16.mxu0 0
  %431 = vmatpush2.bf16.msra.mxu0 0
  %432 = vmatprep.subr.bf16.mxu0 0
  %433 = vmatpush2.bf16.msra.mxu0 0
  %434 = vmatprep.subr.bf16.mxu0 0
  %435 = vmatpush2.bf16.msra.mxu0 0
  %436 = vmatprep.subr.bf16.mxu0 0
  %437 = vmatpush2.bf16.msra.mxu0 0
  %438 = vmatprep.subr.bf16.mxu0 0
  %439 = vmatpush2.bf16.msra.mxu0 0
  %440 = vmatprep.subr.bf16.mxu0 0
  %441 = vmatpush2.bf16.msra.mxu0 %v165
  %442 = vmatprep.mubr.bf16.mxu0 %v387
  %443 = vmatmul.mubr.bf16.gmra.mxu0 %v362
  %v444 = vpop.f32.mrf.mxu0
  %v445 = vadd.f32 0.0, %v444
  %v446 = vpop.f32.mrf.mxu0
  %v447 = vpop.f32.mrf.mxu0
  %v448 = vadd.f32 0.0, %v447
  %v449 = vpop.f32.mrf.mxu0
  %450 = vmatprep.mubr.bf16.mxu0 %v390
  %451 = vmatmul.mubr.bf16.gmra.mxu0 %v364
  %v452 = vpop.f32.mrf.mxu0
  %v453 = vadd.f32 0.0, %v452
  %v454 = vpop.f32.mrf.mxu0
  %v455 = vpop.f32.mrf.mxu0
  %v456 = vadd.f32 0.0, %v455
  %v457 = vpop.f32.mrf.mxu0
  %458 = vmatprep.mubr.bf16.mxu0 %v393
  %459 = vmatmul.mubr.bf16.gmra.mxu0 %v366
  %v460 = vpop.f32.mrf.mxu0
  %v461 = vadd.f32 0.0, %v460
  %v462 = vpop.f32.mrf.mxu0
  %v463 = vpop.f32.mrf.mxu0
  %v464 = vadd.f32 0.0, %v463
  %v465 = vpop.f32.mrf.mxu0
  %466 = vmatprep.mubr.bf16.mxu0 %v396
  %467 = vmatmul.mubr.bf16.gmra.mxu0 %v368
  %v468 = vpop.f32.mrf.mxu0
  %v469 = vadd.f32 0.0, %v468
  %v470 = vpop.f32.mrf.mxu0
  %v471 = vpop.f32.mrf.mxu0
  %v472 = vadd.f32 0.0, %v471
  %v473 = vpop.f32.mrf.mxu0
  %474 = vmatprep.mubr.bf16.mxu0 %v399
  %475 = vmatmul.mubr.bf16.gmra.mxu0 %v370
  %v476 = vpop.f32.mrf.mxu0
  %v477 = vadd.f32 0.0, %v476
  %v478 = vpop.f32.mrf.mxu0
  %v479 = vpop.f32.mrf.mxu0
  %v480 = vadd.f32 0.0, %v479
  %v481 = vpop.f32.mrf.mxu0
  %482 = vmatprep.mubr.bf16.mxu0 %v402
  %483 = vmatmul.mubr.bf16.gmra.mxu0 %v372
  %v484 = vpop.f32.mrf.mxu0
  %v485 = vadd.f32 0.0, %v484
  %v486 = vpop.f32.mrf.mxu0
  %v487 = vpop.f32.mrf.mxu0
  %v488 = vadd.f32 0.0, %v487
  %v489 = vpop.f32.mrf.mxu0
  %490 = vmatprep.mubr.bf16.mxu0 %v405
  %491 = vmatmul.mubr.bf16.gmra.mxu0 %v374
  %v492 = vpop.f32.mrf.mxu0
  %v493 = vadd.f32 0.0, %v492
  %v494 = vpop.f32.mrf.mxu0
  %v495 = vpop.f32.mrf.mxu0
  %v496 = vadd.f32 0.0, %v495
  %v497 = vpop.f32.mrf.mxu0
  %498 = vmatprep.mubr.bf16.mxu0 %v408
  %499 = vmatmul.mubr.bf16.gmra.mxu0 %v376
  %v500 = vpop.f32.mrf.mxu0
  %v501 = vadd.f32 0.0, %v500
  %v502 = vpop.f32.mrf.mxu0
  %v503 = vpop.f32.mrf.mxu0
  %v504 = vadd.f32 0.0, %v503
  %v505 = vpop.f32.mrf.mxu0
  %506 = vdwg.mxu0
  %v507 = vmax.f32 %v235, %v445
  %v508 = vmax.f32 %v238, %v448
  %v509 = vmax.f32 %v243, %v453
  %v510 = vmax.f32 %v246, %v456
  %v511 = vmax.f32 %v251, %v461
  %v512 = vmax.f32 %v254, %v464
  %v513 = vmax.f32 %v259, %v469
  %v514 = vmax.f32 %v262, %v472
  %v515 = vmax.f32 %v267, %v477
  %v516 = vmax.f32 %v270, %v480
  %v517 = vmax.f32 %v275, %v485
  %v518 = vmax.f32 %v278, %v488
  %v519 = vmax.f32 %v283, %v493
  %v520 = vmax.f32 %v286, %v496
  %v521 = vmax.f32 %v291, %v501
  %v522 = vmax.f32 %v294, %v504
  %s523 = scalar_lea.vmem %s0, 256
  %v524 = vld [vmem:[%s523] sm:$0xff]
  %v525 = vld [vmem:[%s523 + $0x8] sm:$0xff]
  %v526 = vld [vmem:[%s523 + $0x10] sm:$0xff]
  %v527 = vld [vmem:[%s523 + $0x18] sm:$0xff]
  %v528 = vld [vmem:[%s523 + $0x20] sm:$0xff]
  %v529 = vld [vmem:[%s523 + $0x28] sm:$0xff]
  %v530 = vld [vmem:[%s523 + $0x30] sm:$0xff]
  %v531 = vld [vmem:[%s523 + $0x38] sm:$0xff]
  %v532 = vld [vmem:[%s523 + $0x40] sm:$0xff]
  %v533 = vld [vmem:[%s523 + $0x48] sm:$0xff]
  %v534 = vld [vmem:[%s523 + $0x50] sm:$0xff]
  %v535 = vld [vmem:[%s523 + $0x58] sm:$0xff]
  %v536 = vld [vmem:[%s523 + $0x60] sm:$0xff]
  %v537 = vld [vmem:[%s523 + $0x68] sm:$0xff]
  %v538 = vld [vmem:[%s523 + $0x70] sm:$0xff]
  %v539 = vld [vmem:[%s523 + $0x78] sm:$0xff]
  %v556 = vunpack.c.l.b16 %v524
  %v557 = vunpack.c.h.b16 %v524
  %v558 = vunpack.c.l.b16 %v525
  %v559 = vunpack.c.h.b16 %v525
  %v560 = vunpack.c.l.b16 %v526
  %v561 = vunpack.c.h.b16 %v526
  %v562 = vunpack.c.l.b16 %v527
  %v563 = vunpack.c.h.b16 %v527
  %v564 = vunpack.c.l.b16 %v528
  %v565 = vunpack.c.h.b16 %v528
  %v566 = vunpack.c.l.b16 %v529
  %v567 = vunpack.c.h.b16 %v529
  %v568 = vunpack.c.l.b16 %v530
  %v569 = vunpack.c.h.b16 %v530
  %v570 = vunpack.c.l.b16 %v531
  %v571 = vunpack.c.h.b16 %v531
  %v572 = vunpack.c.l.b16 %v532
  %v573 = vunpack.c.h.b16 %v532
  %v574 = vunpack.c.l.b16 %v533
  %v575 = vunpack.c.h.b16 %v533
  %v576 = vunpack.c.l.b16 %v534
  %v577 = vunpack.c.h.b16 %v534
  %v578 = vunpack.c.l.b16 %v535
  %v579 = vunpack.c.h.b16 %v535
  %v580 = vunpack.c.l.b16 %v536
  %v581 = vunpack.c.h.b16 %v536
  %v582 = vunpack.c.l.b16 %v537
  %v583 = vunpack.c.h.b16 %v537
  %v584 = vunpack.c.l.b16 %v538
  %v585 = vunpack.c.h.b16 %v538
  %v586 = vunpack.c.l.b16 %v539
  %v587 = vunpack.c.h.b16 %v539
  %v588 = vpack.c.b16 %v558, %v556
  %v589 = vpack.c.b16 %v559, %v557
  %v590 = vpack.c.b16 %v562, %v560
  %v591 = vpack.c.b16 %v563, %v561
  %v592 = vpack.c.b16 %v566, %v564
  %v593 = vpack.c.b16 %v567, %v565
  %v594 = vpack.c.b16 %v570, %v568
  %v595 = vpack.c.b16 %v571, %v569
  %v596 = vpack.c.b16 %v574, %v572
  %v597 = vpack.c.b16 %v575, %v573
  %v598 = vpack.c.b16 %v578, %v576
  %v599 = vpack.c.b16 %v579, %v577
  %v600 = vpack.c.b16 %v582, %v580
  %v601 = vpack.c.b16 %v583, %v581
  %v602 = vpack.c.b16 %v586, %v584
  %v603 = vpack.c.b16 %v587, %v585
  %v613 = vsel %vm175, %v589, 0
  %v616 = vsel %vm175, %v591, 0
  %v619 = vsel %vm175, %v593, 0
  %v622 = vsel %vm175, %v595, 0
  %v625 = vsel %vm175, %v597, 0
  %v628 = vsel %vm175, %v599, 0
  %v631 = vsel %vm175, %v601, 0
  %v634 = vsel %vm175, %v603, 0
  %636 = vmatprep.subr.bf16.mxu0 0
  %637 = vmatpush1.bf16.msra.mxu0 %v164
  %638 = vmatprep.subr.bf16.mxu0 0
  %639 = vmatpush1.bf16.msra.mxu0 %v163
  %640 = vmatprep.subr.bf16.mxu0 0
  %641 = vmatpush1.bf16.msra.mxu0 %v162
  %642 = vmatprep.subr.bf16.mxu0 0
  %643 = vmatpush1.bf16.msra.mxu0 %v161
  %644 = vmatprep.subr.bf16.mxu0 0
  %645 = vmatpush1.bf16.msra.mxu0 %v160
  %646 = vmatprep.subr.bf16.mxu0 0
  %647 = vmatpush1.bf16.msra.mxu0 %v159
  %648 = vmatprep.subr.bf16.mxu0 0
  %649 = vmatpush1.bf16.msra.mxu0 %v158
  %650 = vmatprep.subr.bf16.mxu0 0
  %651 = vmatpush1.bf16.msra.mxu0 %v157
  %652 = vmatprep.subr.bf16.mxu0 0
  %653 = vmatpush2.bf16.msra.mxu0 0
  %654 = vmatprep.subr.bf16.mxu0 0
  %655 = vmatpush2.bf16.msra.mxu0 0
  %656 = vmatprep.subr.bf16.mxu0 0
  %657 = vmatpush2.bf16.msra.mxu0 0
  %658 = vmatprep.subr.bf16.mxu0 0
  %659 = vmatpush2.bf16.msra.mxu0 0
  %660 = vmatprep.subr.bf16.mxu0 0
  %661 = vmatpush2.bf16.msra.mxu0 0
  %662 = vmatprep.subr.bf16.mxu0 0
  %663 = vmatpush2.bf16.msra.mxu0 0
  %664 = vmatprep.subr.bf16.mxu0 0
  %665 = vmatpush2.bf16.msra.mxu0 0
  %666 = vmatprep.subr.bf16.mxu0 0
  %667 = vmatpush2.bf16.msra.mxu0 %v165
  %668 = vmatprep.mubr.bf16.mxu0 %v613
  %669 = vmatmul.mubr.bf16.gmra.mxu0 %v588
  %v670 = vpop.f32.mrf.mxu0
  %v671 = vadd.f32 0.0, %v670
  %v672 = vpop.f32.mrf.mxu0
  %v673 = vpop.f32.mrf.mxu0
  %v674 = vadd.f32 0.0, %v673
  %v675 = vpop.f32.mrf.mxu0
  %676 = vmatprep.mubr.bf16.mxu0 %v616
  %677 = vmatmul.mubr.bf16.gmra.mxu0 %v590
  %v678 = vpop.f32.mrf.mxu0
  %v679 = vadd.f32 0.0, %v678
  %v680 = vpop.f32.mrf.mxu0
  %v681 = vpop.f32.mrf.mxu0
  %v682 = vadd.f32 0.0, %v681
  %v683 = vpop.f32.mrf.mxu0
  %684 = vmatprep.mubr.bf16.mxu0 %v619
  %685 = vmatmul.mubr.bf16.gmra.mxu0 %v592
  %v686 = vpop.f32.mrf.mxu0
  %v687 = vadd.f32 0.0, %v686
  %v688 = vpop.f32.mrf.mxu0
  %v689 = vpop.f32.mrf.mxu0
  %v690 = vadd.f32 0.0, %v689
  %v691 = vpop.f32.mrf.mxu0
  %692 = vmatprep.mubr.bf16.mxu0 %v622
  %693 = vmatmul.mubr.bf16.gmra.mxu0 %v594
  %v694 = vpop.f32.mrf.mxu0
  %v695 = vadd.f32 0.0, %v694
  %v696 = vpop.f32.mrf.mxu0
  %v697 = vpop.f32.mrf.mxu0
  %v698 = vadd.f32 0.0, %v697
  %v699 = vpop.f32.mrf.mxu0
  %700 = vmatprep.mubr.bf16.mxu0 %v625
  %701 = vmatmul.mubr.bf16.gmra.mxu0 %v596
  %v702 = vpop.f32.mrf.mxu0
  %v703 = vadd.f32 0.0, %v702
  %v704 = vpop.f32.mrf.mxu0
  %v705 = vpop.f32.mrf.mxu0
  %v706 = vadd.f32 0.0, %v705
  %v707 = vpop.f32.mrf.mxu0
  %708 = vmatprep.mubr.bf16.mxu0 %v628
  %709 = vmatmul.mubr.bf16.gmra.mxu0 %v598
  %v710 = vpop.f32.mrf.mxu0
  %v711 = vadd.f32 0.0, %v710
  %v712 = vpop.f32.mrf.mxu0
  %v713 = vpop.f32.mrf.mxu0
  %v714 = vadd.f32 0.0, %v713
  %v715 = vpop.f32.mrf.mxu0
  %716 = vmatprep.mubr.bf16.mxu0 %v631
  %717 = vmatmul.mubr.bf16.gmra.mxu0 %v600
  %v718 = vpop.f32.mrf.mxu0
  %v719 = vadd.f32 0.0, %v718
  %v720 = vpop.f32.mrf.mxu0
  %v721 = vpop.f32.mrf.mxu0
  %v722 = vadd.f32 0.0, %v721
  %v723 = vpop.f32.mrf.mxu0
  %724 = vmatprep.mubr.bf16.mxu0 %v634
  %725 = vmatmul.mubr.bf16.gmra.mxu0 %v602
  %v726 = vpop.f32.mrf.mxu0
  %v727 = vadd.f32 0.0, %v726
  %v728 = vpop.f32.mrf.mxu0
  %v729 = vpop.f32.mrf.mxu0
  %v730 = vadd.f32 0.0, %v729
  %v731 = vpop.f32.mrf.mxu0
  %732 = vdwg.mxu0
  %v733 = vmax.f32 %v507, %v671
  %v734 = vmax.f32 %v508, %v674
  %v735 = vmax.f32 %v509, %v679
  %v736 = vmax.f32 %v510, %v682
  %v737 = vmax.f32 %v511, %v687
  %v738 = vmax.f32 %v512, %v690
  %v739 = vmax.f32 %v513, %v695
  %v740 = vmax.f32 %v514, %v698
  %v741 = vmax.f32 %v515, %v703
  %v742 = vmax.f32 %v516, %v706
  %v743 = vmax.f32 %v517, %v711
  %v744 = vmax.f32 %v518, %v714
  %v745 = vmax.f32 %v519, %v719
  %v746 = vmax.f32 %v520, %v722
  %v747 = vmax.f32 %v521, %v727
  %v748 = vmax.f32 %v522, %v730
  %s749 = scalar_lea.vmem %s0, 384
  %v750 = vld [vmem:[%s749] sm:$0xff]
  %v751 = vld [vmem:[%s749 + $0x8] sm:$0xff]
  %v752 = vld [vmem:[%s749 + $0x10] sm:$0xff]
  %v753 = vld [vmem:[%s749 + $0x18] sm:$0xff]
  %v754 = vld [vmem:[%s749 + $0x20] sm:$0xff]
  %v755 = vld [vmem:[%s749 + $0x28] sm:$0xff]
  %v756 = vld [vmem:[%s749 + $0x30] sm:$0xff]
  %v757 = vld [vmem:[%s749 + $0x38] sm:$0xff]
  %v758 = vld [vmem:[%s749 + $0x40] sm:$0xff]
  %v759 = vld [vmem:[%s749 + $0x48] sm:$0xff]
  %v760 = vld [vmem:[%s749 + $0x50] sm:$0xff]
  %v761 = vld [vmem:[%s749 + $0x58] sm:$0xff]
  %v762 = vld [vmem:[%s749 + $0x60] sm:$0xff]
  %v763 = vld [vmem:[%s749 + $0x68] sm:$0xff]
  %v764 = vld [vmem:[%s749 + $0x70] sm:$0xff]
  %v765 = vld [vmem:[%s749 + $0x78] sm:$0xff]
  %v782 = vunpack.c.l.b16 %v750
  %v783 = vunpack.c.h.b16 %v750
  %v784 = vunpack.c.l.b16 %v751
  %v785 = vunpack.c.h.b16 %v751
  %v786 = vunpack.c.l.b16 %v752
  %v787 = vunpack.c.h.b16 %v752
  %v788 = vunpack.c.l.b16 %v753
  %v789 = vunpack.c.h.b16 %v753
  %v790 = vunpack.c.l.b16 %v754
  %v791 = vunpack.c.h.b16 %v754
  %v792 = vunpack.c.l.b16 %v755
  %v793 = vunpack.c.h.b16 %v755
  %v794 = vunpack.c.l.b16 %v756
  %v795 = vunpack.c.h.b16 %v756
  %v796 = vunpack.c.l.b16 %v757
  %v797 = vunpack.c.h.b16 %v757
  %v798 = vunpack.c.l.b16 %v758
  %v799 = vunpack.c.h.b16 %v758
  %v800 = vunpack.c.l.b16 %v759
  %v801 = vunpack.c.h.b16 %v759
  %v802 = vunpack.c.l.b16 %v760
  %v803 = vunpack.c.h.b16 %v760
  %v804 = vunpack.c.l.b16 %v761
  %v805 = vunpack.c.h.b16 %v761
  %v806 = vunpack.c.l.b16 %v762
  %v807 = vunpack.c.h.b16 %v762
  %v808 = vunpack.c.l.b16 %v763
  %v809 = vunpack.c.h.b16 %v763
  %v810 = vunpack.c.l.b16 %v764
  %v811 = vunpack.c.h.b16 %v764
  %v812 = vunpack.c.l.b16 %v765
  %v813 = vunpack.c.h.b16 %v765
  %v814 = vpack.c.b16 %v784, %v782
  %v815 = vpack.c.b16 %v785, %v783
  %v816 = vpack.c.b16 %v788, %v786
  %v817 = vpack.c.b16 %v789, %v787
  %v818 = vpack.c.b16 %v792, %v790
  %v819 = vpack.c.b16 %v793, %v791
  %v820 = vpack.c.b16 %v796, %v794
  %v821 = vpack.c.b16 %v797, %v795
  %v822 = vpack.c.b16 %v800, %v798
  %v823 = vpack.c.b16 %v801, %v799
  %v824 = vpack.c.b16 %v804, %v802
  %v825 = vpack.c.b16 %v805, %v803
  %v826 = vpack.c.b16 %v808, %v806
  %v827 = vpack.c.b16 %v809, %v807
  %v828 = vpack.c.b16 %v812, %v810
  %v829 = vpack.c.b16 %v813, %v811
  %v839 = vsel %vm175, %v815, 0
  %v842 = vsel %vm175, %v817, 0
  %v845 = vsel %vm175, %v819, 0
  %v848 = vsel %vm175, %v821, 0
  %v851 = vsel %vm175, %v823, 0
  %v854 = vsel %vm175, %v825, 0
  %v857 = vsel %vm175, %v827, 0
  %v860 = vsel %vm175, %v829, 0
  %862 = vmatprep.subr.bf16.mxu0 0
  %863 = vmatpush1.bf16.msra.mxu0 %v164
  %864 = vmatprep.subr.bf16.mxu0 0
  %865 = vmatpush1.bf16.msra.mxu0 %v163
  %866 = vmatprep.subr.bf16.mxu0 0
  %867 = vmatpush1.bf16.msra.mxu0 %v162
  %868 = vmatprep.subr.bf16.mxu0 0
  %869 = vmatpush1.bf16.msra.mxu0 %v161
  %870 = vmatprep.subr.bf16.mxu0 0
  %871 = vmatpush1.bf16.msra.mxu0 %v160
  %872 = vmatprep.subr.bf16.mxu0 0
  %873 = vmatpush1.bf16.msra.mxu0 %v159
  %874 = vmatprep.subr.bf16.mxu0 0
  %875 = vmatpush1.bf16.msra.mxu0 %v158
  %876 = vmatprep.subr.bf16.mxu0 0
  %877 = vmatpush1.bf16.msra.mxu0 %v157
  %878 = vmatprep.subr.bf16.mxu0 0
  %879 = vmatpush2.bf16.msra.mxu0 0
  %880 = vmatprep.subr.bf16.mxu0 0
  %881 = vmatpush2.bf16.msra.mxu0 0
  %882 = vmatprep.subr.bf16.mxu0 0
  %883 = vmatpush2.bf16.msra.mxu0 0
  %884 = vmatprep.subr.bf16.mxu0 0
  %885 = vmatpush2.bf16.msra.mxu0 0
  %886 = vmatprep.subr.bf16.mxu0 0
  %887 = vmatpush2.bf16.msra.mxu0 0
  %888 = vmatprep.subr.bf16.mxu0 0
  %889 = vmatpush2.bf16.msra.mxu0 0
  %890 = vmatprep.subr.bf16.mxu0 0
  %891 = vmatpush2.bf16.msra.mxu0 0
  %892 = vmatprep.subr.bf16.mxu0 0
  %893 = vmatpush2.bf16.msra.mxu0 %v165
  %894 = vmatprep.mubr.bf16.mxu0 %v839
  %895 = vmatmul.mubr.bf16.gmra.mxu0 %v814
  %v896 = vpop.f32.mrf.mxu0
  %v897 = vadd.f32 0.0, %v896
  %v898 = vpop.f32.mrf.mxu0
  %v899 = vpop.f32.mrf.mxu0
  %v900 = vadd.f32 0.0, %v899
  %v901 = vpop.f32.mrf.mxu0
  %902 = vmatprep.mubr.bf16.mxu0 %v842
  %903 = vmatmul.mubr.bf16.gmra.mxu0 %v816
  %v904 = vpop.f32.mrf.mxu0
  %v905 = vadd.f32 0.0, %v904
  %v906 = vpop.f32.mrf.mxu0
  %v907 = vpop.f32.mrf.mxu0
  %v908 = vadd.f32 0.0, %v907
  %v909 = vpop.f32.mrf.mxu0
  %910 = vmatprep.mubr.bf16.mxu0 %v845
  %911 = vmatmul.mubr.bf16.gmra.mxu0 %v818
  %v912 = vpop.f32.mrf.mxu0
  %v913 = vadd.f32 0.0, %v912
  %v914 = vpop.f32.mrf.mxu0
  %v915 = vpop.f32.mrf.mxu0
  %v916 = vadd.f32 0.0, %v915
  %v917 = vpop.f32.mrf.mxu0
  %918 = vmatprep.mubr.bf16.mxu0 %v848
  %919 = vmatmul.mubr.bf16.gmra.mxu0 %v820
  %v920 = vpop.f32.mrf.mxu0
  %v921 = vadd.f32 0.0, %v920
  %v922 = vpop.f32.mrf.mxu0
  %v923 = vpop.f32.mrf.mxu0
  %v924 = vadd.f32 0.0, %v923
  %v925 = vpop.f32.mrf.mxu0
  %926 = vmatprep.mubr.bf16.mxu0 %v851
  %927 = vmatmul.mubr.bf16.gmra.mxu0 %v822
  %v928 = vpop.f32.mrf.mxu0
  %v929 = vadd.f32 0.0, %v928
  %v930 = vpop.f32.mrf.mxu0
  %v931 = vpop.f32.mrf.mxu0
  %v932 = vadd.f32 0.0, %v931
  %v933 = vpop.f32.mrf.mxu0
  %934 = vmatprep.mubr.bf16.mxu0 %v854
  %935 = vmatmul.mubr.bf16.gmra.mxu0 %v824
  %v936 = vpop.f32.mrf.mxu0
  %v937 = vadd.f32 0.0, %v936
  %v938 = vpop.f32.mrf.mxu0
  %v939 = vpop.f32.mrf.mxu0
  %v940 = vadd.f32 0.0, %v939
  %v941 = vpop.f32.mrf.mxu0
  %942 = vmatprep.mubr.bf16.mxu0 %v857
  %943 = vmatmul.mubr.bf16.gmra.mxu0 %v826
  %v944 = vpop.f32.mrf.mxu0
  %v945 = vadd.f32 0.0, %v944
  %v946 = vpop.f32.mrf.mxu0
  %v947 = vpop.f32.mrf.mxu0
  %v948 = vadd.f32 0.0, %v947
  %v949 = vpop.f32.mrf.mxu0
  %950 = vmatprep.mubr.bf16.mxu0 %v860
  %951 = vmatmul.mubr.bf16.gmra.mxu0 %v828
  %v952 = vpop.f32.mrf.mxu0
  %v953 = vadd.f32 0.0, %v952
  %v954 = vpop.f32.mrf.mxu0
  %v955 = vpop.f32.mrf.mxu0
  %v956 = vadd.f32 0.0, %v955
  %v957 = vpop.f32.mrf.mxu0
  %958 = vdwg.mxu0
  %v959 = vmax.f32 %v733, %v897
  %v960 = vmax.f32 %v734, %v900
  %v961 = vmax.f32 %v735, %v905
  %v962 = vmax.f32 %v736, %v908
  %v963 = vmax.f32 %v737, %v913
  %v964 = vmax.f32 %v738, %v916
  %v965 = vmax.f32 %v739, %v921
  %v966 = vmax.f32 %v740, %v924
  %v967 = vmax.f32 %v741, %v929
  %v968 = vmax.f32 %v742, %v932
  %v969 = vmax.f32 %v743, %v937
  %v970 = vmax.f32 %v744, %v940
  %v971 = vmax.f32 %v745, %v945
  %v972 = vmax.f32 %v746, %v948
  %v973 = vmax.f32 %v747, %v953
  %v974 = vmax.f32 %v748, %v956
  %v975 = vld [vmem:[%s2] sm:$0x1]
  %v977 = vlaneseq
  %v978 = vshrl.u32 %v977, 7
  %v979 = vsub.s32 0, %v978
  %v980 = vrot.slane %v975, %v979
  %v982 = vadd.f32 %v959, %v980
  %v983 = vadd.f32 %v960, %v980
  %v984 = vadd.f32 %v961, %v980
  %v985 = vadd.f32 %v962, %v980
  %v986 = vadd.f32 %v963, %v980
  %v987 = vadd.f32 %v964, %v980
  %v988 = vadd.f32 %v965, %v980
  %v989 = vadd.f32 %v966, %v980
  %v990 = vadd.f32 %v967, %v980
  %v991 = vadd.f32 %v968, %v980
  %v992 = vadd.f32 %v969, %v980
  %v993 = vadd.f32 %v970, %v980
  %v994 = vadd.f32 %v971, %v980
  %v995 = vadd.f32 %v972, %v980
  %v996 = vadd.f32 %v973, %v980
  %v997 = vadd.f32 %v974, %v980
  %v998 = vmax.f32 %v982, 0.0
  %v999 = vmax.f32 %v983, 0.0
  %v1000 = vmax.f32 %v984, 0.0
  %v1001 = vmax.f32 %v985, 0.0
  %v1002 = vmax.f32 %v986, 0.0
  %v1003 = vmax.f32 %v987, 0.0
  %v1004 = vmax.f32 %v988, 0.0
  %v1005 = vmax.f32 %v989, 0.0
  %v1006 = vmax.f32 %v990, 0.0
  %v1007 = vmax.f32 %v991, 0.0
  %v1008 = vmax.f32 %v992, 0.0
  %v1009 = vmax.f32 %v993, 0.0
  %v1010 = vmax.f32 %v994, 0.0
  %v1011 = vmax.f32 %v995, 0.0
  %v1012 = vmax.f32 %v996, 0.0
  %v1013 = vmax.f32 %v997, 0.0
  %vm1014 = vcmask 261120
  %1015 = vst.msk [vmem:[%s3] sm:$0xff] %vm1014, %v998
  %1016 = vst.msk [vmem:[%s3 + $0x8] sm:$0xff] %vm1014, %v999
  %1017 = vst.msk [vmem:[%s3 + $0x10] sm:$0xff] %vm1014, %v1000
  %1018 = vst.msk [vmem:[%s3 + $0x18] sm:$0xff] %vm1014, %v1001
  %1019 = vst.msk [vmem:[%s3 + $0x20] sm:$0xff] %vm1014, %v1002
  %1020 = vst.msk [vmem:[%s3 + $0x28] sm:$0xff] %vm1014, %v1003
  %1021 = vst.msk [vmem:[%s3 + $0x30] sm:$0xff] %vm1014, %v1004
  %1022 = vst.msk [vmem:[%s3 + $0x38] sm:$0xff] %vm1014, %v1005
  %1023 = vst.msk [vmem:[%s3 + $0x40] sm:$0xff] %vm1014, %v1006
  %1024 = vst.msk [vmem:[%s3 + $0x48] sm:$0xff] %vm1014, %v1007
  %1025 = vst.msk [vmem:[%s3 + $0x50] sm:$0xff] %vm1014, %v1008
  %1026 = vst.msk [vmem:[%s3 + $0x58] sm:$0xff] %vm1014, %v1009
  %1027 = vst.msk [vmem:[%s3 + $0x60] sm:$0xff] %vm1014, %v1010
  %1028 = vst.msk [vmem:[%s3 + $0x68] sm:$0xff] %vm1014, %v1011
  %1029 = vst.msk [vmem:[%s3 + $0x70] sm:$0xff] %vm1014, %v1012
  %1030 = vst.msk [vmem:[%s3 + $0x78] sm:$0xff] %vm1014, %v1013
  // Predicated region
  $region14: #{custom_cnn_forward.5} parent=0 // pred_check
    _
  $region15: #{custom_cnn_forward.5} parent=0 // pred_check_branch
    %1032 = sbr.rel (0) target = $region17
  $region16: #{custom_cnn_forward.5} parent=0 // pred_region
    _
  $region17: #{custom_cnn_forward.5} parent=0 // pred_fallthru
    _
  // Predicated region
  $region18: #{custom_cnn_forward.5} parent=0 // pred_check
    _
  $region19: #{custom_cnn_forward.5} parent=0 // pred_check_branch
    %1034 = sbr.rel (0) target = $region21
  $region20: #{custom_cnn_forward.5} parent=0 // pred_region
    _
  $region21: #{custom_cnn_forward.5} parent=0 // pred_fallthru
    _

// kernel: custom_cnn_forward.6
$region0: #{custom_cnn_forward.6}
  #allocation0 [shape = 'u32[]', space=smem, size = 0x4, offset = 0x4, fixed_abs, tag = 'smem constant byte address 0x4 - core index']
  #allocation1 [shape = 'u32[144,128]{1,0:T(1,128)}', space=vmem, size = 0x12000, scoped, tag = 'internal scratch']
  %s0 = inlined_call_operand.vmem [shape: bf16[4,32,288], index: 0, kind: input, shape index: {}]
  %s1 = inlined_call_operand.vmem [shape: bf16[288,64], index: 1, kind: input, shape index: {}]
  %s2 = inlined_call_operand.vmem [shape: f32[1,64], index: 2, kind: input, shape index: {}]
  %s3 = inlined_call_operand.vmem [shape: f32[32,64], index: 3, kind: output, shape index: {}]
  %s4 = sld [smem:[#allocation0]]
  $region22: #{custom_cnn_forward.6} parent=0
    _
  %s6 = ssub.s32 1, %s4
  %s7 = scalar_select 0, %s6, %s4
  // Predicated region
  $region2: #{custom_cnn_forward.6} parent=0 // pred_check
    _
  $region3: #{custom_cnn_forward.6} parent=0 // pred_check_branch
    %9 = sbr.rel (0) target = $region5
  $region4: #{custom_cnn_forward.6} parent=0 // pred_region
    _
  $region5: #{custom_cnn_forward.6} parent=0 // pred_fallthru
    _
  // Predicated region
  $region6: #{custom_cnn_forward.6} parent=0 // pred_check
    _
  $region7: #{custom_cnn_forward.6} parent=0 // pred_check_branch
    %11 = sbr.rel (0) target = $region9
  $region8: #{custom_cnn_forward.6} parent=0 // pred_region
    _
  $region9: #{custom_cnn_forward.6} parent=0 // pred_fallthru
    _
  // Predicated region
  $region10: #{custom_cnn_forward.6} parent=0 // pred_check
    _
  $region11: #{custom_cnn_forward.6} parent=0 // pred_check_branch
    %13 = sbr.rel (0) target = $region13
  $region12: #{custom_cnn_forward.6} parent=0 // pred_region
    _
  $region13: #{custom_cnn_forward.6} parent=0 // pred_fallthru
    _
  %v15 = vld [vmem:[%s1] sm:$0xf]
  %v16 = vld [vmem:[%s1 + $0x4] sm:$0xf]
  %v17 = vld [vmem:[%s1 + $0x8] sm:$0xf]
  %v18 = vld [vmem:[%s1 + $0xc] sm:$0xf]
  %v19 = vld [vmem:[%s1 + $0x10] sm:$0xf]
  %v20 = vld [vmem:[%s1 + $0x14] sm:$0xf]
  %v21 = vld [vmem:[%s1 + $0x18] sm:$0xf]
  %v22 = vld [vmem:[%s1 + $0x1c] sm:$0xf]
  %v23 = vld [vmem:[%s1 + $0x20] sm:$0xf]
  %v24 = vld [vmem:[%s1 + $0x24] sm:$0xf]
  %v25 = vld [vmem:[%s1 + $0x28] sm:$0xf]
  %v26 = vld [vmem:[%s1 + $0x2c] sm:$0xf]
  %v27 = vld [vmem:[%s1 + $0x30] sm:$0xf]
  %v28 = vld [vmem:[%s1 + $0x34] sm:$0xf]
  %v29 = vld [vmem:[%s1 + $0x38] sm:$0xf]
  %v30 = vld [vmem:[%s1 + $0x3c] sm:$0xf]
  %v31 = vld [vmem:[%s1 + $0x40] sm:$0xf]
  %v32 = vld [vmem:[%s1 + $0x44] sm:$0xf]
  %v33 = vld [vmem:[%s1 + $0x48] sm:$0xf]
  %v34 = vld [vmem:[%s1 + $0x4c] sm:$0xf]
  %v35 = vld [vmem:[%s1 + $0x50] sm:$0xf]
  %v36 = vld [vmem:[%s1 + $0x54] sm:$0xf]
  %v37 = vld [vmem:[%s1 + $0x58] sm:$0xf]
  %v38 = vld [vmem:[%s1 + $0x5c] sm:$0xf]
  %v39 = vld [vmem:[%s1 + $0x60] sm:$0xf]
  %v40 = vld [vmem:[%s1 + $0x64] sm:$0xf]
  %v41 = vld [vmem:[%s1 + $0x68] sm:$0xf]
  %v42 = vld [vmem:[%s1 + $0x6c] sm:$0xf]
  %v43 = vld [vmem:[%s1 + $0x70] sm:$0xf]
  %v44 = vld [vmem:[%s1 + $0x74] sm:$0xf]
  %v45 = vld [vmem:[%s1 + $0x78] sm:$0xf]
  %v46 = vld [vmem:[%s1 + $0x7c] sm:$0xf]
  %v47 = vld [vmem:[%s1 + $0x80] sm:$0xf]
  %v48 = vld [vmem:[%s1 + $0x84] sm:$0xf]
  %v49 = vld [vmem:[%s1 + $0x88] sm:$0xf]
  %v50 = vld [vmem:[%s1 + $0x8c] sm:$0xf]
  %v51 = vld [vmem:[%s0] sm:$0xff]
  %v52 = vld [vmem:[%s0 + $0x8] sm:$0xf]
  %v53 = vld [vmem:[%s0 + $0xc] sm:$0xff]
  %v54 = vld [vmem:[%s0 + $0x14] sm:$0xf]
  %v55 = vld [vmem:[%s0 + $0x18] sm:$0xff]
  %v56 = vld [vmem:[%s0 + $0x20] sm:$0xf]
  %v57 = vld [vmem:[%s0 + $0x24] sm:$0xff]
  %v58 = vld [vmem:[%s0 + $0x2c] sm:$0xf]
  %v67 = vunpack.c.l.b16 %v51
  %v68 = vunpack.c.h.b16 %v51
  %v69 = vunpack.c.l.b16 %v52
  %v70 = vunpack.c.l.b16 %v53
  %v71 = vunpack.c.h.b16 %v53
  %v72 = vunpack.c.l.b16 %v54
  %v73 = vunpack.c.l.b16 %v55
  %v74 = vunpack.c.h.b16 %v55
  %v75 = vunpack.c.l.b16 %v56
  %v76 = vunpack.c.l.b16 %v57
  %v77 = vunpack.c.h.b16 %v57
  %v78 = vunpack.c.l.b16 %v58
  %v79 = vpack.c.b16 %v70, %v67
  %v80 = vpack.c.b16 %v71, %v68
  %v81 = vpack.c.b16 %v72, %v69
  %v82 = vpack.c.b16 %v76, %v73
  %v83 = vpack.c.b16 %v77, %v74
  %v84 = vpack.c.b16 %v78, %v75
  %v125 = vunpack.c.l.b16 %v15
  %v126 = vunpack.c.l.b16 %v16
  %v127 = vunpack.c.l.b16 %v17
  %v128 = vunpack.c.l.b16 %v18
  %v129 = vunpack.c.l.b16 %v19
  %v130 = vunpack.c.l.b16 %v20
  %v131 = vunpack.c.l.b16 %v21
  %v132 = vunpack.c.l.b16 %v22
  %v133 = vunpack.c.l.b16 %v23
  %v134 = vunpack.c.l.b16 %v24
  %v135 = vunpack.c.l.b16 %v25
  %v136 = vunpack.c.l.b16 %v26
  %v137 = vunpack.c.l.b16 %v27
  %v138 = vunpack.c.l.b16 %v28
  %v139 = vunpack.c.l.b16 %v29
  %v140 = vunpack.c.l.b16 %v30
  %v141 = vunpack.c.l.b16 %v31
  %v142 = vunpack.c.l.b16 %v32
  %v143 = vunpack.c.l.b16 %v33
  %v144 = vunpack.c.l.b16 %v34
  %v145 = vunpack.c.l.b16 %v35
  %v146 = vunpack.c.l.b16 %v36
  %v147 = vunpack.c.l.b16 %v37
  %v148 = vunpack.c.l.b16 %v38
  %v149 = vunpack.c.l.b16 %v39
  %v150 = vunpack.c.l.b16 %v40
  %v151 = vunpack.c.l.b16 %v41
  %v152 = vunpack.c.l.b16 %v42
  %v153 = vunpack.c.l.b16 %v43
  %v154 = vunpack.c.l.b16 %v44
  %v155 = vunpack.c.l.b16 %v45
  %v156 = vunpack.c.l.b16 %v46
  %v157 = vunpack.c.l.b16 %v47
  %v158 = vunpack.c.l.b16 %v48
  %v159 = vunpack.c.l.b16 %v49
  %v160 = vunpack.c.l.b16 %v50
  %v161 = vpack.c.b16 %v126, %v125
  %v162 = vpack.c.b16 %v128, %v127
  %v163 = vpack.c.b16 %v130, %v129
  %v164 = vpack.c.b16 %v132, %v131
  %v165 = vpack.c.b16 %v134, %v133
  %v166 = vpack.c.b16 %v136, %v135
  %v167 = vpack.c.b16 %v138, %v137
  %v168 = vpack.c.b16 %v140, %v139
  %v169 = vpack.c.b16 %v142, %v141
  %v170 = vpack.c.b16 %v144, %v143
  %v171 = vpack.c.b16 %v146, %v145
  %v172 = vpack.c.b16 %v148, %v147
  %v173 = vpack.c.b16 %v150, %v149
  %v174 = vpack.c.b16 %v152, %v151
  %v175 = vpack.c.b16 %v154, %v153
  %v176 = vpack.c.b16 %v156, %v155
  %v177 = vpack.c.b16 %v158, %v157
  %v178 = vpack.c.b16 %v160, %v159
  %vm197 = vcmask 261120
  %v199 = vsel %vm197, %v81, 0
  %v202 = vsel %vm197, %v84, 0
  %204 = vmatprep.subr.bf16.mxu0 0
  %205 = vmatpush1.bf16.msra.mxu0 %v168
  %206 = vmatprep.subr.bf16.mxu0 0
  %207 = vmatpush1.bf16.msra.mxu0 %v167
  %208 = vmatprep.subr.bf16.mxu0 0
  %209 = vmatpush1.bf16.msra.mxu0 %v166
  %210 = vmatprep.subr.bf16.mxu0 0
  %211 = vmatpush1.bf16.msra.mxu0 %v165
  %212 = vmatprep.subr.bf16.mxu0 0
  %213 = vmatpush1.bf16.msra.mxu0 %v164
  %214 = vmatprep.subr.bf16.mxu0 0
  %215 = vmatpush1.bf16.msra.mxu0 %v163
  %216 = vmatprep.subr.bf16.mxu0 0
  %217 = vmatpush1.bf16.msra.mxu0 %v162
  %218 = vmatprep.subr.bf16.mxu0 0
  %219 = vmatpush1.bf16.msra.mxu0 %v161
  %220 = vmatprep.subr.bf16.mxu0 0
  %221 = vmatpush2.bf16.msra.mxu0 %v176
  %222 = vmatprep.subr.bf16.mxu0 0
  %223 = vmatpush2.bf16.msra.mxu0 %v175
  %224 = vmatprep.subr.bf16.mxu0 0
  %225 = vmatpush2.bf16.msra.mxu0 %v174
  %226 = vmatprep.subr.bf16.mxu0 0
  %227 = vmatpush2.bf16.msra.mxu0 %v173
  %228 = vmatprep.subr.bf16.mxu0 0
  %229 = vmatpush2.bf16.msra.mxu0 %v172
  %230 = vmatprep.subr.bf16.mxu0 0
  %231 = vmatpush2.bf16.msra.mxu0 %v171
  %232 = vmatprep.subr.bf16.mxu0 0
  %233 = vmatpush2.bf16.msra.mxu0 %v170
  %234 = vmatprep.subr.bf16.mxu0 0
  %235 = vmatpush2.bf16.msra.mxu0 %v169
  %236 = vmatprep.mubr.bf16.mxu0 %v80
  %237 = vmatmul.mubr.bf16.gmra.mxu0 %v79
  %v238 = vpop.f32.mrf.mxu0
  %v239 = vadd.f32 0.0, %v238
  %v240 = vpop.f32.mrf.mxu0
  %v241 = vpop.f32.mrf.mxu0
  %v242 = vadd.f32 0.0, %v241
  %v243 = vpop.f32.mrf.mxu0
  %244 = vmatprep.mubr.bf16.mxu0 %v83
  %245 = vmatmul.mubr.bf16.gmra.mxu0 %v82
  %v246 = vpop.f32.mrf.mxu0
  %v247 = vadd.f32 0.0, %v246
  %v248 = vpop.f32.mrf.mxu0
  %v249 = vpop.f32.mrf.mxu0
  %v250 = vadd.f32 0.0, %v249
  %v251 = vpop.f32.mrf.mxu0
  %252 = vdwg.mxu0
  %253 = vmatprep.subr.bf16.mxu0 0
  %254 = vmatpush1.bf16.msra.mxu0 0
  %255 = vmatprep.subr.bf16.mxu0 0
  %256 = vmatpush1.bf16.msra.mxu0 0
  %257 = vmatprep.subr.bf16.mxu0 0
  %258 = vmatpush1.bf16.msra.mxu0 0
  %259 = vmatprep.subr.bf16.mxu0 0
  %260 = vmatpush1.bf16.msra.mxu0 0
  %261 = vmatprep.subr.bf16.mxu0 0
  %262 = vmatpush1.bf16.msra.mxu0 0
  %263 = vmatprep.subr.bf16.mxu0 0
  %264 = vmatpush1.bf16.msra.mxu0 0
  %265 = vmatprep.subr.bf16.mxu0 0
  %266 = vmatpush1.bf16.msra.mxu0 %v178
  %267 = vmatprep.subr.bf16.mxu0 0
  %268 = vmatpush1.bf16.msra.mxu0 %v177
  %269 = vmatprep.subr.bf16.mxu0 0
  %270 = vmatpush2.bf16.msra.mxu0 0
  %271 = vmatprep.subr.bf16.mxu0 0
  %272 = vmatpush2.bf16.msra.mxu0 0
  %273 = vmatprep.subr.bf16.mxu0 0
  %274 = vmatpush2.bf16.msra.mxu0 0
  %275 = vmatprep.subr.bf16.mxu0 0
  %276 = vmatpush2.bf16.msra.mxu0 0
  %277 = vmatprep.subr.bf16.mxu0 0
  %278 = vmatpush2.bf16.msra.mxu0 0
  %279 = vmatprep.subr.bf16.mxu0 0
  %280 = vmatpush2.bf16.msra.mxu0 0
  %281 = vmatprep.subr.bf16.mxu0 0
  %282 = vmatpush2.bf16.msra.mxu0 0
  %283 = vmatprep.subr.bf16.mxu0 0
  %284 = vmatpush2.bf16.msra.mxu0 0
  %285 = vmatprep.mubr.bf16.mxu0 0
  %286 = vmatmul.mubr.bf16.gmra.mxu0 %v199
  %v287 = vpop.f32.mrf.mxu0
  %v288 = vadd.f32 %v239, %v287
  %v289 = vpop.f32.mrf.mxu0
  %v290 = vpop.f32.mrf.mxu0
  %v291 = vadd.f32 %v242, %v290
  %v292 = vpop.f32.mrf.mxu0
  %293 = vmatprep.mubr.bf16.mxu0 0
  %294 = vmatmul.mubr.bf16.gmra.mxu0 %v202
  %v295 = vpop.f32.mrf.mxu0
  %v296 = vadd.f32 %v247, %v295
  %v297 = vpop.f32.mrf.mxu0
  %v298 = vpop.f32.mrf.mxu0
  %v299 = vadd.f32 %v250, %v298
  %v300 = vpop.f32.mrf.mxu0
  %301 = vdwg.mxu0
  %s302 = scalar_lea.vmem %s0, 48
  %v303 = vld [vmem:[%s302] sm:$0xff]
  %v304 = vld [vmem:[%s302 + $0x8] sm:$0xf]
  %v305 = vld [vmem:[%s302 + $0xc] sm:$0xff]
  %v306 = vld [vmem:[%s302 + $0x14] sm:$0xf]
  %v307 = vld [vmem:[%s302 + $0x18] sm:$0xff]
  %v308 = vld [vmem:[%s302 + $0x20] sm:$0xf]
  %v309 = vld [vmem:[%s302 + $0x24] sm:$0xff]
  %v310 = vld [vmem:[%s302 + $0x2c] sm:$0xf]
  %v319 = vunpack.c.l.b16 %v303
  %v320 = vunpack.c.h.b16 %v303
  %v321 = vunpack.c.l.b16 %v304
  %v322 = vunpack.c.l.b16 %v305
  %v323 = vunpack.c.h.b16 %v305
  %v324 = vunpack.c.l.b16 %v306
  %v325 = vunpack.c.l.b16 %v307
  %v326 = vunpack.c.h.b16 %v307
  %v327 = vunpack.c.l.b16 %v308
  %v328 = vunpack.c.l.b16 %v309
  %v329 = vunpack.c.h.b16 %v309
  %v330 = vunpack.c.l.b16 %v310
  %v331 = vpack.c.b16 %v322, %v319
  %v332 = vpack.c.b16 %v323, %v320
  %v333 = vpack.c.b16 %v324, %v321
  %v334 = vpack.c.b16 %v328, %v325
  %v335 = vpack.c.b16 %v329, %v326
  %v336 = vpack.c.b16 %v330, %v327
  %v342 = vsel %vm197, %v333, 0
  %v345 = vsel %vm197, %v336, 0
  %347 = vmatprep.subr.bf16.mxu0 0
  %348 = vmatpush1.bf16.msra.mxu0 %v168
  %349 = vmatprep.subr.bf16.mxu0 0
  %350 = vmatpush1.bf16.msra.mxu0 %v167
  %351 = vmatprep.subr.bf16.mxu0 0
  %352 = vmatpush1.bf16.msra.mxu0 %v166
  %353 = vmatprep.subr.bf16.mxu0 0
  %354 = vmatpush1.bf16.msra.mxu0 %v165
  %355 = vmatprep.subr.bf16.mxu0 0
  %356 = vmatpush1.bf16.msra.mxu0 %v164
  %357 = vmatprep.subr.bf16.mxu0 0
  %358 = vmatpush1.bf16.msra.mxu0 %v163
  %359 = vmatprep.subr.bf16.mxu0 0
  %360 = vmatpush1.bf16.msra.mxu0 %v162
  %361 = vmatprep.subr.bf16.mxu0 0
  %362 = vmatpush1.bf16.msra.mxu0 %v161
  %363 = vmatprep.subr.bf16.mxu0 0
  %364 = vmatpush2.bf16.msra.mxu0 %v176
  %365 = vmatprep.subr.bf16.mxu0 0
  %366 = vmatpush2.bf16.msra.mxu0 %v175
  %367 = vmatprep.subr.bf16.mxu0 0
  %368 = vmatpush2.bf16.msra.mxu0 %v174
  %369 = vmatprep.subr.bf16.mxu0 0
  %370 = vmatpush2.bf16.msra.mxu0 %v173
  %371 = vmatprep.subr.bf16.mxu0 0
  %372 = vmatpush2.bf16.msra.mxu0 %v172
  %373 = vmatprep.subr.bf16.mxu0 0
  %374 = vmatpush2.bf16.msra.mxu0 %v171
  %375 = vmatprep.subr.bf16.mxu0 0
  %376 = vmatpush2.bf16.msra.mxu0 %v170
  %377 = vmatprep.subr.bf16.mxu0 0
  %378 = vmatpush2.bf16.msra.mxu0 %v169
  %379 = vmatprep.mubr.bf16.mxu0 %v332
  %380 = vmatmul.mubr.bf16.gmra.mxu0 %v331
  %v381 = vpop.f32.mrf.mxu0
  %v382 = vadd.f32 0.0, %v381
  %v383 = vpop.f32.mrf.mxu0
  %v384 = vpop.f32.mrf.mxu0
  %v385 = vadd.f32 0.0, %v384
  %v386 = vpop.f32.mrf.mxu0
  %387 = vmatprep.mubr.bf16.mxu0 %v335
  %388 = vmatmul.mubr.bf16.gmra.mxu0 %v334
  %v389 = vpop.f32.mrf.mxu0
  %v390 = vadd.f32 0.0, %v389
  %v391 = vpop.f32.mrf.mxu0
  %v392 = vpop.f32.mrf.mxu0
  %v393 = vadd.f32 0.0, %v392
  %v394 = vpop.f32.mrf.mxu0
  %395 = vdwg.mxu0
  %396 = vmatprep.subr.bf16.mxu0 0
  %397 = vmatpush1.bf16.msra.mxu0 0
  %398 = vmatprep.subr.bf16.mxu0 0
  %399 = vmatpush1.bf16.msra.mxu0 0
  %400 = vmatprep.subr.bf16.mxu0 0
  %401 = vmatpush1.bf16.msra.mxu0 0
  %402 = vmatprep.subr.bf16.mxu0 0
  %403 = vmatpush1.bf16.msra.mxu0 0
  %404 = vmatprep.subr.bf16.mxu0 0
  %405 = vmatpush1.bf16.msra.mxu0 0
  %406 = vmatprep.subr.bf16.mxu0 0
  %407 = vmatpush1.bf16.msra.mxu0 0
  %408 = vmatprep.subr.bf16.mxu0 0
  %409 = vmatpush1.bf16.msra.mxu0 %v178
  %410 = vmatprep.subr.bf16.mxu0 0
  %411 = vmatpush1.bf16.msra.mxu0 %v177
  %412 = vmatprep.subr.bf16.mxu0 0
  %413 = vmatpush2.bf16.msra.mxu0 0
  %414 = vmatprep.subr.bf16.mxu0 0
  %415 = vmatpush2.bf16.msra.mxu0 0
  %416 = vmatprep.subr.bf16.mxu0 0
  %417 = vmatpush2.bf16.msra.mxu0 0
  %418 = vmatprep.subr.bf16.mxu0 0
  %419 = vmatpush2.bf16.msra.mxu0 0
  %420 = vmatprep.subr.bf16.mxu0 0
  %421 = vmatpush2.bf16.msra.mxu0 0
  %422 = vmatprep.subr.bf16.mxu0 0
  %423 = vmatpush2.bf16.msra.mxu0 0
  %424 = vmatprep.subr.bf16.mxu0 0
  %425 = vmatpush2.bf16.msra.mxu0 0
  %426 = vmatprep.subr.bf16.mxu0 0
  %427 = vmatpush2.bf16.msra.mxu0 0
  %428 = vmatprep.mubr.bf16.mxu0 0
  %429 = vmatmul.mubr.bf16.gmra.mxu0 %v342
  %v430 = vpop.f32.mrf.mxu0
  %v431 = vadd.f32 %v382, %v430
  %v432 = vpop.f32.mrf.mxu0
  %v433 = vpop.f32.mrf.mxu0
  %v434 = vadd.f32 %v385, %v433
  %v435 = vpop.f32.mrf.mxu0
  %436 = vmatprep.mubr.bf16.mxu0 0
  %437 = vmatmul.mubr.bf16.gmra.mxu0 %v345
  %v438 = vpop.f32.mrf.mxu0
  %v439 = vadd.f32 %v390, %v438
  %v440 = vpop.f32.mrf.mxu0
  %v441 = vpop.f32.mrf.mxu0
  %v442 = vadd.f32 %v393, %v441
  %v443 = vpop.f32.mrf.mxu0
  %444 = vdwg.mxu0
  %v445 = vmax.f32 %v288, %v431
  %v446 = vmax.f32 %v291, %v434
  %v447 = vmax.f32 %v296, %v439
  %v448 = vmax.f32 %v299, %v442
  %s449 = scalar_lea.vmem %s0, 96
  %v450 = vld [vmem:[%s449] sm:$0xff]
  %v451 = vld [vmem:[%s449 + $0x8] sm:$0xf]
  %v452 = vld [vmem:[%s449 + $0xc] sm:$0xff]
  %v453 = vld [vmem:[%s449 + $0x14] sm:$0xf]
  %v454 = vld [vmem:[%s449 + $0x18] sm:$0xff]
  %v455 = vld [vmem:[%s449 + $0x20] sm:$0xf]
  %v456 = vld [vmem:[%s449 + $0x24] sm:$0xff]
  %v457 = vld [vmem:[%s449 + $0x2c] sm:$0xf]
  %v466 = vunpack.c.l.b16 %v450
  %v467 = vunpack.c.h.b16 %v450
  %v468 = vunpack.c.l.b16 %v451
  %v469 = vunpack.c.l.b16 %v452
  %v470 = vunpack.c.h.b16 %v452
  %v471 = vunpack.c.l.b16 %v453
  %v472 = vunpack.c.l.b16 %v454
  %v473 = vunpack.c.h.b16 %v454
  %v474 = vunpack.c.l.b16 %v455
  %v475 = vunpack.c.l.b16 %v456
  %v476 = vunpack.c.h.b16 %v456
  %v477 = vunpack.c.l.b16 %v457
  %v478 = vpack.c.b16 %v469, %v466
  %v479 = vpack.c.b16 %v470, %v467
  %v480 = vpack.c.b16 %v471, %v468
  %v481 = vpack.c.b16 %v475, %v472
  %v482 = vpack.c.b16 %v476, %v473
  %v483 = vpack.c.b16 %v477, %v474
  %v489 = vsel %vm197, %v480, 0
  %v492 = vsel %vm197, %v483, 0
  %494 = vmatprep.subr.bf16.mxu0 0
  %495 = vmatpush1.bf16.msra.mxu0 %v168
  %496 = vmatprep.subr.bf16.mxu0 0
  %497 = vmatpush1.bf16.msra.mxu0 %v167
  %498 = vmatprep.subr.bf16.mxu0 0
  %499 = vmatpush1.bf16.msra.mxu0 %v166
  %500 = vmatprep.subr.bf16.mxu0 0
  %501 = vmatpush1.bf16.msra.mxu0 %v165
  %502 = vmatprep.subr.bf16.mxu0 0
  %503 = vmatpush1.bf16.msra.mxu0 %v164
  %504 = vmatprep.subr.bf16.mxu0 0
  %505 = vmatpush1.bf16.msra.mxu0 %v163
  %506 = vmatprep.subr.bf16.mxu0 0
  %507 = vmatpush1.bf16.msra.mxu0 %v162
  %508 = vmatprep.subr.bf16.mxu0 0
  %509 = vmatpush1.bf16.msra.mxu0 %v161
  %510 = vmatprep.subr.bf16.mxu0 0
  %511 = vmatpush2.bf16.msra.mxu0 %v176
  %512 = vmatprep.subr.bf16.mxu0 0
  %513 = vmatpush2.bf16.msra.mxu0 %v175
  %514 = vmatprep.subr.bf16.mxu0 0
  %515 = vmatpush2.bf16.msra.mxu0 %v174
  %516 = vmatprep.subr.bf16.mxu0 0
  %517 = vmatpush2.bf16.msra.mxu0 %v173
  %518 = vmatprep.subr.bf16.mxu0 0
  %519 = vmatpush2.bf16.msra.mxu0 %v172
  %520 = vmatprep.subr.bf16.mxu0 0
  %521 = vmatpush2.bf16.msra.mxu0 %v171
  %522 = vmatprep.subr.bf16.mxu0 0
  %523 = vmatpush2.bf16.msra.mxu0 %v170
  %524 = vmatprep.subr.bf16.mxu0 0
  %525 = vmatpush2.bf16.msra.mxu0 %v169
  %526 = vmatprep.mubr.bf16.mxu0 %v479
  %527 = vmatmul.mubr.bf16.gmra.mxu0 %v478
  %v528 = vpop.f32.mrf.mxu0
  %v529 = vadd.f32 0.0, %v528
  %v530 = vpop.f32.mrf.mxu0
  %v531 = vpop.f32.mrf.mxu0
  %v532 = vadd.f32 0.0, %v531
  %v533 = vpop.f32.mrf.mxu0
  %534 = vmatprep.mubr.bf16.mxu0 %v482
  %535 = vmatmul.mubr.bf16.gmra.mxu0 %v481
  %v536 = vpop.f32.mrf.mxu0
  %v537 = vadd.f32 0.0, %v536
  %v538 = vpop.f32.mrf.mxu0
  %v539 = vpop.f32.mrf.mxu0
  %v540 = vadd.f32 0.0, %v539
  %v541 = vpop.f32.mrf.mxu0
  %542 = vdwg.mxu0
  %543 = vmatprep.subr.bf16.mxu0 0
  %544 = vmatpush1.bf16.msra.mxu0 0
  %545 = vmatprep.subr.bf16.mxu0 0
  %546 = vmatpush1.bf16.msra.mxu0 0
  %547 = vmatprep.subr.bf16.mxu0 0
  %548 = vmatpush1.bf16.msra.mxu0 0
  %549 = vmatprep.subr.bf16.mxu0 0
  %550 = vmatpush1.bf16.msra.mxu0 0
  %551 = vmatprep.subr.bf16.mxu0 0
  %552 = vmatpush1.bf16.msra.mxu0 0
  %553 = vmatprep.subr.bf16.mxu0 0
  %554 = vmatpush1.bf16.msra.mxu0 0
  %555 = vmatprep.subr.bf16.mxu0 0
  %556 = vmatpush1.bf16.msra.mxu0 %v178
  %557 = vmatprep.subr.bf16.mxu0 0
  %558 = vmatpush1.bf16.msra.mxu0 %v177
  %559 = vmatprep.subr.bf16.mxu0 0
  %560 = vmatpush2.bf16.msra.mxu0 0
  %561 = vmatprep.subr.bf16.mxu0 0
  %562 = vmatpush2.bf16.msra.mxu0 0
  %563 = vmatprep.subr.bf16.mxu0 0
  %564 = vmatpush2.bf16.msra.mxu0 0
  %565 = vmatprep.subr.bf16.mxu0 0
  %566 = vmatpush2.bf16.msra.mxu0 0
  %567 = vmatprep.subr.bf16.mxu0 0
  %568 = vmatpush2.bf16.msra.mxu0 0
  %569 = vmatprep.subr.bf16.mxu0 0
  %570 = vmatpush2.bf16.msra.mxu0 0
  %571 = vmatprep.subr.bf16.mxu0 0
  %572 = vmatpush2.bf16.msra.mxu0 0
  %573 = vmatprep.subr.bf16.mxu0 0
  %574 = vmatpush2.bf16.msra.mxu0 0
  %575 = vmatprep.mubr.bf16.mxu0 0
  %576 = vmatmul.mubr.bf16.gmra.mxu0 %v489
  %v577 = vpop.f32.mrf.mxu0
  %v578 = vadd.f32 %v529, %v577
  %v579 = vpop.f32.mrf.mxu0
  %v580 = vpop.f32.mrf.mxu0
  %v581 = vadd.f32 %v532, %v580
  %v582 = vpop.f32.mrf.mxu0
  %583 = vmatprep.mubr.bf16.mxu0 0
  %584 = vmatmul.mubr.bf16.gmra.mxu0 %v492
  %v585 = vpop.f32.mrf.mxu0
  %v586 = vadd.f32 %v537, %v585
  %v587 = vpop.f32.mrf.mxu0
  %v588 = vpop.f32.mrf.mxu0
  %v589 = vadd.f32 %v540, %v588
  %v590 = vpop.f32.mrf.mxu0
  %591 = vdwg.mxu0
  %v592 = vmax.f32 %v445, %v578
  %v593 = vmax.f32 %v446, %v581
  %v594 = vmax.f32 %v447, %v586
  %v595 = vmax.f32 %v448, %v589
  %s596 = scalar_lea.vmem %s0, 144
  %v597 = vld [vmem:[%s596] sm:$0xff]
  %v598 = vld [vmem:[%s596 + $0x8] sm:$0xf]
  %v599 = vld [vmem:[%s596 + $0xc] sm:$0xff]
  %v600 = vld [vmem:[%s596 + $0x14] sm:$0xf]
  %v601 = vld [vmem:[%s596 + $0x18] sm:$0xff]
  %v602 = vld [vmem:[%s596 + $0x20] sm:$0xf]
  %v603 = vld [vmem:[%s596 + $0x24] sm:$0xff]
  %v604 = vld [vmem:[%s596 + $0x2c] sm:$0xf]
  %v613 = vunpack.c.l.b16 %v597
  %v614 = vunpack.c.h.b16 %v597
  %v615 = vunpack.c.l.b16 %v598
  %v616 = vunpack.c.l.b16 %v599
  %v617 = vunpack.c.h.b16 %v599
  %v618 = vunpack.c.l.b16 %v600
  %v619 = vunpack.c.l.b16 %v601
  %v620 = vunpack.c.h.b16 %v601
  %v621 = vunpack.c.l.b16 %v602
  %v622 = vunpack.c.l.b16 %v603
  %v623 = vunpack.c.h.b16 %v603
  %v624 = vunpack.c.l.b16 %v604
  %v625 = vpack.c.b16 %v616, %v613
  %v626 = vpack.c.b16 %v617, %v614
  %v627 = vpack.c.b16 %v618, %v615
  %v628 = vpack.c.b16 %v622, %v619
  %v629 = vpack.c.b16 %v623, %v620
  %v630 = vpack.c.b16 %v624, %v621
  %v636 = vsel %vm197, %v627, 0
  %v639 = vsel %vm197, %v630, 0
  %641 = vmatprep.subr.bf16.mxu0 0
  %642 = vmatpush1.bf16.msra.mxu0 %v168
  %643 = vmatprep.subr.bf16.mxu0 0
  %644 = vmatpush1.bf16.msra.mxu0 %v167
  %645 = vmatprep.subr.bf16.mxu0 0
  %646 = vmatpush1.bf16.msra.mxu0 %v166
  %647 = vmatprep.subr.bf16.mxu0 0
  %648 = vmatpush1.bf16.msra.mxu0 %v165
  %649 = vmatprep.subr.bf16.mxu0 0
  %650 = vmatpush1.bf16.msra.mxu0 %v164
  %651 = vmatprep.subr.bf16.mxu0 0
  %652 = vmatpush1.bf16.msra.mxu0 %v163
  %653 = vmatprep.subr.bf16.mxu0 0
  %654 = vmatpush1.bf16.msra.mxu0 %v162
  %655 = vmatprep.subr.bf16.mxu0 0
  %656 = vmatpush1.bf16.msra.mxu0 %v161
  %657 = vmatprep.subr.bf16.mxu0 0
  %658 = vmatpush2.bf16.msra.mxu0 %v176
  %659 = vmatprep.subr.bf16.mxu0 0
  %660 = vmatpush2.bf16.msra.mxu0 %v175
  %661 = vmatprep.subr.bf16.mxu0 0
  %662 = vmatpush2.bf16.msra.mxu0 %v174
  %663 = vmatprep.subr.bf16.mxu0 0
  %664 = vmatpush2.bf16.msra.mxu0 %v173
  %665 = vmatprep.subr.bf16.mxu0 0
  %666 = vmatpush2.bf16.msra.mxu0 %v172
  %667 = vmatprep.subr.bf16.mxu0 0
  %668 = vmatpush2.bf16.msra.mxu0 %v171
  %669 = vmatprep.subr.bf16.mxu0 0
  %670 = vmatpush2.bf16.msra.mxu0 %v170
  %671 = vmatprep.subr.bf16.mxu0 0
  %672 = vmatpush2.bf16.msra.mxu0 %v169
  %673 = vmatprep.mubr.bf16.mxu0 %v626
  %674 = vmatmul.mubr.bf16.gmra.mxu0 %v625
  %v675 = vpop.f32.mrf.mxu0
  %v676 = vadd.f32 0.0, %v675
  %v677 = vpop.f32.mrf.mxu0
  %v678 = vpop.f32.mrf.mxu0
  %v679 = vadd.f32 0.0, %v678
  %v680 = vpop.f32.mrf.mxu0
  %681 = vmatprep.mubr.bf16.mxu0 %v629
  %682 = vmatmul.mubr.bf16.gmra.mxu0 %v628
  %v683 = vpop.f32.mrf.mxu0
  %v684 = vadd.f32 0.0, %v683
  %v685 = vpop.f32.mrf.mxu0
  %v686 = vpop.f32.mrf.mxu0
  %v687 = vadd.f32 0.0, %v686
  %v688 = vpop.f32.mrf.mxu0
  %689 = vdwg.mxu0
  %690 = vmatprep.subr.bf16.mxu0 0
  %691 = vmatpush1.bf16.msra.mxu0 0
  %692 = vmatprep.subr.bf16.mxu0 0
  %693 = vmatpush1.bf16.msra.mxu0 0
  %694 = vmatprep.subr.bf16.mxu0 0
  %695 = vmatpush1.bf16.msra.mxu0 0
  %696 = vmatprep.subr.bf16.mxu0 0
  %697 = vmatpush1.bf16.msra.mxu0 0
  %698 = vmatprep.subr.bf16.mxu0 0
  %699 = vmatpush1.bf16.msra.mxu0 0
  %700 = vmatprep.subr.bf16.mxu0 0
  %701 = vmatpush1.bf16.msra.mxu0 0
  %702 = vmatprep.subr.bf16.mxu0 0
  %703 = vmatpush1.bf16.msra.mxu0 %v178
  %704 = vmatprep.subr.bf16.mxu0 0
  %705 = vmatpush1.bf16.msra.mxu0 %v177
  %706 = vmatprep.subr.bf16.mxu0 0
  %707 = vmatpush2.bf16.msra.mxu0 0
  %708 = vmatprep.subr.bf16.mxu0 0
  %709 = vmatpush2.bf16.msra.mxu0 0
  %710 = vmatprep.subr.bf16.mxu0 0
  %711 = vmatpush2.bf16.msra.mxu0 0
  %712 = vmatprep.subr.bf16.mxu0 0
  %713 = vmatpush2.bf16.msra.mxu0 0
  %714 = vmatprep.subr.bf16.mxu0 0
  %715 = vmatpush2.bf16.msra.mxu0 0
  %716 = vmatprep.subr.bf16.mxu0 0
  %717 = vmatpush2.bf16.msra.mxu0 0
  %718 = vmatprep.subr.bf16.mxu0 0
  %719 = vmatpush2.bf16.msra.mxu0 0
  %720 = vmatprep.subr.bf16.mxu0 0
  %721 = vmatpush2.bf16.msra.mxu0 0
  %722 = vmatprep.mubr.bf16.mxu0 0
  %723 = vmatmul.mubr.bf16.gmra.mxu0 %v636
  %v724 = vpop.f32.mrf.mxu0
  %v725 = vadd.f32 %v676, %v724
  %v726 = vpop.f32.mrf.mxu0
  %v727 = vpop.f32.mrf.mxu0
  %v728 = vadd.f32 %v679, %v727
  %v729 = vpop.f32.mrf.mxu0
  %730 = vmatprep.mubr.bf16.mxu0 0
  %731 = vmatmul.mubr.bf16.gmra.mxu0 %v639
  %v732 = vpop.f32.mrf.mxu0
  %v733 = vadd.f32 %v684, %v732
  %v734 = vpop.f32.mrf.mxu0
  %v735 = vpop.f32.mrf.mxu0
  %v736 = vadd.f32 %v687, %v735
  %v737 = vpop.f32.mrf.mxu0
  %738 = vdwg.mxu0
  %v739 = vmax.f32 %v592, %v725
  %v740 = vmax.f32 %v593, %v728
  %v741 = vmax.f32 %v594, %v733
  %v742 = vmax.f32 %v595, %v736
  %v743 = vld [vmem:[%s2] sm:$0x1]
  %v745 = vlaneseq
  %v746 = vshrl.u32 %v745, 7
  %v747 = vsub.s32 0, %v746
  %v748 = vrot.slane %v743, %v747
  %v750 = vadd.f32 %v739, %v748
  %v751 = vadd.f32 %v740, %v748
  %v752 = vadd.f32 %v741, %v748
  %v753 = vadd.f32 %v742, %v748
  %v754 = vmax.f32 %v750, 0.0
  %v755 = vmax.f32 %v751, 0.0
  %v756 = vmax.f32 %v752, 0.0
  %v757 = vmax.f32 %v753, 0.0
  %vm758 = vcmask 523264
  %759 = vst.msk [vmem:[%s3] sm:$0xff] %vm758, %v754
  %760 = vst.msk [vmem:[%s3 + $0x8] sm:$0xff] %vm758, %v755
  %761 = vst.msk [vmem:[%s3 + $0x10] sm:$0xff] %vm758, %v756
  %762 = vst.msk [vmem:[%s3 + $0x18] sm:$0xff] %vm758, %v757
  // Predicated region
  $region14: #{custom_cnn_forward.6} parent=0 // pred_check
    _
  $region15: #{custom_cnn_forward.6} parent=0 // pred_check_branch
    %764 = sbr.rel (0) target = $region17
  $region16: #{custom_cnn_forward.6} parent=0 // pred_region
    _
  $region17: #{custom_cnn_forward.6} parent=0 // pred_fallthru
    _
  // Predicated region
  $region18: #{custom_cnn_forward.6} parent=0 // pred_check
    _
  $region19: #{custom_cnn_forward.6} parent=0 // pred_check_branch
    %766 = sbr.rel (0) target = $region21
  $region20: #{custom_cnn_forward.6} parent=0 // pred_region
    _
  $region21: #{custom_cnn_forward.6} parent=0 // pred_fallthru
    _

// kernel: custom_cnn_forward.7
$region0: #{custom_cnn_forward.7}
  #allocation0 [shape = 'u32[]', space=smem, size = 0x4, offset = 0x4, fixed_abs, tag = 'smem constant byte address 0x4 - core index']
  #allocation1 [shape = 'u32[144,128]{1,0:T(1,128)}', space=vmem, size = 0x12000, scoped, tag = 'internal scratch']
  %s0 = inlined_call_operand.vmem [shape: bf16[4,16,576], index: 0, kind: input, shape index: {}]
  %s1 = inlined_call_operand.vmem [shape: bf16[576,128], index: 1, kind: input, shape index: {}]
  %s2 = inlined_call_operand.vmem [shape: f32[1,128], index: 2, kind: input, shape index: {}]
  %s3 = inlined_call_operand.vmem [shape: f32[128,128], index: 3, kind: input, shape index: {}]
  %s4 = inlined_call_operand.vmem [shape: f32[1,128], index: 4, kind: input, shape index: {}]
  %s5 = inlined_call_operand.vmem [shape: f32[2,1,128], index: 5, kind: output, shape index: {}]
  %s6 = sld [smem:[#allocation0]]
  $region79: #{custom_cnn_forward.7} parent=0
    _
  %s8 = ssub.s32 1, %s6
  %s9 = scalar_select 0, %s8, %s6
  $region1: #{custom_cnn_forward.7} parent=0
    #allocation2 [shape = 'u8[81920]{0}', space=vmem, size = 0x14000, scoped, tag = 'input window, operand 0']
    loop: start=0, step=1, limit=4
    $region2: #{custom_cnn_forward.7} parent=1 // loop_pre_header
      _
    $region3: #{custom_cnn_forward.7} parent=1 // loop_header
      %s11 = sphi 0, %s15
      %p12 = scmp.ge.s32.totalorder %s11, 4
      %s21 = sphi 0, %s23
      %s24 = sphi 0, %s21
      %s25 = sphi 0, %s24
      %s41 = sphi 0, %s25
      %s45 = sphi 0, %s45
      %s47 = sphi 0, %s45
      %s48 = sphi 0, %s47
      %s62 = sphi 0, %s48
      %s66 = sphi 0, %s66
      %s68 = sphi 0, %s66
      %s69 = sphi 0, %s68
      %s83 = sphi 0, %s69
      %s87 = sphi 0, %s87
      %s89 = sphi 0, %s87
      %s90 = sphi 0, %s89
      %s104 = sphi 0, %s90
      %s108 = sphi 0, %s108
      %s110 = sphi 0, %s108
      %s111 = sphi 0, %s110
      %s125 = sphi 0, %s111
      %s131 = sphi 0, %s133
      %s134 = sphi 0, %s131
      %s135 = sphi 0, %s134
      %s151 = sphi 0, %s135
    $region4: #{custom_cnn_forward.7} parent=1 // loop_header_branch
      %14 = sbr.rel (%p12) target = $region8
    $region5: #{custom_cnn_forward.7} parent=1 // loop_body
      %s16 = ssub.s32 %s11, 1
      %s17 = ssub.s32 %s11, 2
      %s18 = sadd.s32 %s11, 1
      %s19 = ssub.s32 %s11, %s18
      %p20 = scmp.eq.s32.totalorder %s19, 0
      %s22 = sadd.s32 %s21, 1
      %s23 = scalar_select %p20, %s21, %s22
      %p26 = pneg %p20
      %p27 = scmp.eq.s32.totalorder %s11, 1
      %p28 = por %p26, %p27
      %p29 = scmp.ne.s32.totalorder %s21, %s24
      %p30 = scmp.eq.s32.totalorder %s11, 0
      %p31 = por %p29, %p30
      %p32 = scmp.ne.s32.totalorder %s21, %s24
      %p33 = scmp.eq.s32.totalorder %s16, 1
      %p34 = por %p32, %p33
      %p35 = scmp.ne.s32.totalorder %s24, %s25
      %p36 = scmp.eq.s32.totalorder %s16, 0
      %p37 = por %p35, %p36
      %p38 = scmp.ne.s32.totalorder %s24, %s25
      %p39 = scmp.eq.s32.totalorder %s17, 1
      %p40 = por %p38, %p39
      %p42 = scmp.ne.s32.totalorder %s25, %s41
      %p43 = scmp.eq.s32.totalorder %s17, 0
      %p44 = por %p42, %p43
      %s46 = sadd.s32 %s45, 1
      %p49 = scmp.eq.s32.totalorder %s11, 1
      %p50 = scmp.ne.s32.totalorder %s45, %s47
      %p51 = scmp.eq.s32.totalorder %s11, 0
      %p52 = por %p50, %p51
      %p53 = scmp.ne.s32.totalorder %s45, %s47
      %p54 = scmp.eq.s32.totalorder %s16, 1
      %p55 = por %p53, %p54
      %p56 = scmp.ne.s32.totalorder %s47, %s48
      %p57 = scmp.eq.s32.totalorder %s16, 0
      %p58 = por %p56, %p57
      %p59 = scmp.ne.s32.totalorder %s47, %s48
      %p60 = scmp.eq.s32.totalorder %s17, 1
      %p61 = por %p59, %p60
      %p63 = scmp.ne.s32.totalorder %s48, %s62
      %p64 = scmp.eq.s32.totalorder %s17, 0
      %p65 = por %p63, %p64
      %s67 = sadd.s32 %s66, 1
      %p70 = scmp.eq.s32.totalorder %s11, 1
      %p71 = scmp.ne.s32.totalorder %s66, %s68
      %p72 = scmp.eq.s32.totalorder %s11, 0
      %p73 = por %p71, %p72
      %p74 = scmp.ne.s32.totalorder %s66, %s68
      %p75 = scmp.eq.s32.totalorder %s16, 1
      %p76 = por %p74, %p75
      %p77 = scmp.ne.s32.totalorder %s68, %s69
      %p78 = scmp.eq.s32.totalorder %s16, 0
      %p79 = por %p77, %p78
      %p80 = scmp.ne.s32.totalorder %s68, %s69
      %p81 = scmp.eq.s32.totalorder %s17, 1
      %p82 = por %p80, %p81
      %p84 = scmp.ne.s32.totalorder %s69, %s83
      %p85 = scmp.eq.s32.totalorder %s17, 0
      %p86 = por %p84, %p85
      %s88 = sadd.s32 %s87, 1
      %p91 = scmp.eq.s32.totalorder %s11, 1
      %p92 = scmp.ne.s32.totalorder %s87, %s89
      %p93 = scmp.eq.s32.totalorder %s11, 0
      %p94 = por %p92, %p93
      %p95 = scmp.ne.s32.totalorder %s87, %s89
      %p96 = scmp.eq.s32.totalorder %s16, 1
      %p97 = por %p95, %p96
      %p98 = scmp.ne.s32.totalorder %s89, %s90
      %p99 = scmp.eq.s32.totalorder %s16, 0
      %p100 = por %p98, %p99
      %p101 = scmp.ne.s32.totalorder %s89, %s90
      %p102 = scmp.eq.s32.totalorder %s17, 1
      %p103 = por %p101, %p102
      %p105 = scmp.ne.s32.totalorder %s90, %s104
      %p106 = scmp.eq.s32.totalorder %s17, 0
      %p107 = por %p105, %p106
      %s109 = sadd.s32 %s108, 1
      %p112 = scmp.eq.s32.totalorder %s11, 1
      %p113 = scmp.ne.s32.totalorder %s108, %s110
      %p114 = scmp.eq.s32.totalorder %s11, 0
      %p115 = por %p113, %p114
      %p116 = scmp.ne.s32.totalorder %s108, %s110
      %p117 = scmp.eq.s32.totalorder %s16, 1
      %p118 = por %p116, %p117
      %p119 = scmp.ne.s32.totalorder %s110, %s111
      %p120 = scmp.eq.s32.totalorder %s16, 0
      %p121 = por %p119, %p120
      %p122 = scmp.ne.s32.totalorder %s110, %s111
      %p123 = scmp.eq.s32.totalorder %s17, 1
      %p124 = por %p122, %p123
      %p126 = scmp.ne.s32.totalorder %s111, %s125
      %p127 = scmp.eq.s32.totalorder %s17, 0
      %p128 = por %p126, %p127
      %s129 = ssub.s32 %s11, %s18
      %p130 = scmp.eq.s32.totalorder %s129, 0
      %s132 = sadd.s32 %s131, 1
      %s133 = scalar_select %p130, %s131, %s132
      %p136 = pneg %p130
      %p137 = scmp.eq.s32.totalorder %s11, 1
      %p138 = por %p136, %p137
      %p139 = scmp.ne.s32.totalorder %s131, %s134
      %p140 = scmp.eq.s32.totalorder %s11, 0
      %p141 = por %p139, %p140
      %p142 = scmp.ne.s32.totalorder %s131, %s134
      %p143 = scmp.eq.s32.totalorder %s16, 1
      %p144 = por %p142, %p143
      %p145 = scmp.ne.s32.totalorder %s134, %s135
      %p146 = scmp.eq.s32.totalorder %s16, 0
      %p147 = por %p145, %p146
      %p148 = scmp.ne.s32.totalorder %s134, %s135
      %p149 = scmp.eq.s32.totalorder %s17, 1
      %p150 = por %p148, %p149
      %p152 = scmp.ne.s32.totalorder %s135, %s151
      %p153 = scmp.eq.s32.totalorder %s17, 0
      %p154 = por %p152, %p153
      %p155 = scmp.le.s32.totalorder 1, %s11
      %p156 = scmp.lt.s32.totalorder %s11, 3
      %p157 = pnand %p155, %p156
      %p158 = pneg %p157
      // Predicated region
      $region9: #{custom_cnn_forward.7} parent=5 // pred_check
        _
      $region10: #{custom_cnn_forward.7} parent=5 // pred_check_branch
        %160 = sbr.rel (%p157) target = $region12
      $region11: #{custom_cnn_forward.7} parent=5 // pred_region
        %s161 = ssub.s32 %s11, 1
        // Predicated region
        $region13: #{custom_cnn_forward.7} parent=11 // pred_check
          %p162 = pneg %p58
        $region14: #{custom_cnn_forward.7} parent=11 // pred_check_branch
          %164 = sbr.rel (%p162) target = $region16
        $region15: #{custom_cnn_forward.7} parent=11 // pred_region
          _
        $region16: #{custom_cnn_forward.7} parent=11 // pred_fallthru
          _
        // Predicated region
        $region17: #{custom_cnn_forward.7} parent=11 // pred_check
          %p165 = pneg %p79
        $region18: #{custom_cnn_forward.7} parent=11 // pred_check_branch
          %167 = sbr.rel (%p165) target = $region20
        $region19: #{custom_cnn_forward.7} parent=11 // pred_region
          _
        $region20: #{custom_cnn_forward.7} parent=11 // pred_fallthru
          _
        // Predicated region
        $region21: #{custom_cnn_forward.7} parent=11 // pred_check
          %p168 = pneg %p100
        $region22: #{custom_cnn_forward.7} parent=11 // pred_check_branch
          %170 = sbr.rel (%p168) target = $region24
        $region23: #{custom_cnn_forward.7} parent=11 // pred_region
          _
        $region24: #{custom_cnn_forward.7} parent=11 // pred_fallthru
          _
        // Predicated region
        $region25: #{custom_cnn_forward.7} parent=11 // pred_check
          %p171 = pneg %p121
        $region26: #{custom_cnn_forward.7} parent=11 // pred_check_branch
          %173 = sbr.rel (%p171) target = $region28
        $region27: #{custom_cnn_forward.7} parent=11 // pred_region
          _
        $region28: #{custom_cnn_forward.7} parent=11 // pred_fallthru
          _
      $region12: #{custom_cnn_forward.7} parent=5 // pred_fallthru
        _
      %p174 = scmp.lt.s32.totalorder %s11, 2
      // Predicated region
      $region29: #{custom_cnn_forward.7} parent=5 // pred_check
        %p175 = pneg %p174
      $region30: #{custom_cnn_forward.7} parent=5 // pred_check_branch
        %177 = sbr.rel (%p175) target = $region32
      $region31: #{custom_cnn_forward.7} parent=5 // pred_region
        // Predicated region
        $region33: #{custom_cnn_forward.7} parent=31 // pred_check
          %p178 = pneg %p31
        $region34: #{custom_cnn_forward.7} parent=31 // pred_check_branch
          %180 = sbr.rel (%p178) target = $region36
        $region35: #{custom_cnn_forward.7} parent=31 // pred_region
          %s181 = sand.u32 %s21, 1
          %s182 = sand.u32 %s21, 1
          %s183 = smul.addr %s182, 80
          %s184 = scalar_lea.vmem [#allocation2], %s183
          %s185 = smul.addr %s11, 5
          %s186 = smul.addr %s185, 4
          %s187 = scalar_lea.vmem %s0, %s186
          // Predicated region
          $region37: #{custom_cnn_forward.7} parent=35 // pred_check
            _
          $region38: #{custom_cnn_forward.7} parent=35 // pred_check_branch
            %189 = sbr.rel (0) target = $region40
          $region39: #{custom_cnn_forward.7} parent=35 // pred_region
            // Predicated region
            $region41: #{custom_cnn_forward.7} parent=39 // pred_check
              _
            $region42: #{custom_cnn_forward.7} parent=39 // pred_check_branch
              %191 = sbr.rel (0) target = $region44
            $region43: #{custom_cnn_forward.7} parent=39 // pred_region
              %s192 = scalar_lea.vmem %s187, 16
              %s193 = scalar_lea.vmem %s184, 16 [#allocation2]
              loop: start=0, step=1, limit=1
              $region45: #{custom_cnn_forward.7} parent=43 // loop_pre_header
                _
              $region46: #{custom_cnn_forward.7} parent=43 // loop_header
                %s195 = sphi 0, %s199
                %p196 = scmp.ge.s32.totalorder %s195, 1
                %s200 = sphi %s187, %s187
                %s201 = sphi %s184, %s184
              $region47: #{custom_cnn_forward.7} parent=43 // loop_header_branch
                %198 = sbr.rel (%p196) target = $region51
              $region48: #{custom_cnn_forward.7} parent=43 // loop_body
                %v202 = vld [vmem:[%s200] sm:$0xff]
                %203 = vst [vmem:[%s201] sm:$0xff] %v202
                %v204 = vld [vmem:[%s200 + $0x8] sm:$0xff]
                %205 = vst [vmem:[%s201 + $0x8] sm:$0xff] %v204
                %v206 = vld [vmem:[%s200 + $0x28] sm:$0xff]
                %207 = vst [vmem:[%s201 + $0x14] sm:$0xff] %v206
                %v208 = vld [vmem:[%s200 + $0x30] sm:$0xff]
                %209 = vst [vmem:[%s201 + $0x1c] sm:$0xff] %v208
                %v210 = vld [vmem:[%s200 + $0x50] sm:$0xff]
                %211 = vst [vmem:[%s201 + $0x28] sm:$0xff] %v210
                %v212 = vld [vmem:[%s200 + $0x58] sm:$0xff]
                %213 = vst [vmem:[%s201 + $0x30] sm:$0xff] %v212
                %v214 = vld [vmem:[%s200 + $0x78] sm:$0xff]
                %215 = vst [vmem:[%s201 + $0x3c] sm:$0xff] %v214
                %v216 = vld [vmem:[%s200 + $0x80] sm:$0xff]
                %217 = vst [vmem:[%s201 + $0x44] sm:$0xff] %v216
              $region49: #{custom_cnn_forward.7} parent=43 // loop_footer
                %s199 = sadd.s32 1, %s195
              $region50: #{custom_cnn_forward.7} parent=43 // loop_footer_branch
                %194 = sbr.rel target = $region46
              $region51: #{custom_cnn_forward.7} parent=43 // loop_exit
                _
              %s219 = ssub.s32 16, 1
              loop: start=0, step=1, limit=1
              $region52: #{custom_cnn_forward.7} parent=43 // loop_pre_header
                _
              $region53: #{custom_cnn_forward.7} parent=43 // loop_header
                %s221 = sphi 0, %s225
                %p222 = scmp.ge.s32.totalorder %s221, 1
                %s226 = sphi %s192, %s192
                %s227 = sphi %s193, %s193
              $region54: #{custom_cnn_forward.7} parent=43 // loop_header_branch
                %224 = sbr.rel (%p222) target = $region58
              $region55: #{custom_cnn_forward.7} parent=43 // loop_body
                %v228 = vld [vmem:[%s226] sm:%s219]
                %229 = vst [vmem:[%s227] sm:%s219] %v228
                %v230 = vld [vmem:[%s226 + $0x28] sm:%s219]
                %231 = vst [vmem:[%s227 + $0x14] sm:%s219] %v230
                %v232 = vld [vmem:[%s226 + $0x50] sm:%s219]
                %233 = vst [vmem:[%s227 + $0x28] sm:%s219] %v232
                %v234 = vld [vmem:[%s226 + $0x78] sm:%s219]
                %235 = vst [vmem:[%s227 + $0x3c] sm:%s219] %v234
              $region56: #{custom_cnn_forward.7} parent=43 // loop_footer
                %s225 = sadd.s32 1, %s221
              $region57: #{custom_cnn_forward.7} parent=43 // loop_footer_branch
                %220 = sbr.rel target = $region53
              $region58: #{custom_cnn_forward.7} parent=43 // loop_exit
                _
            $region44: #{custom_cnn_forward.7} parent=39 // pred_fallthru
              _
          $region40: #{custom_cnn_forward.7} parent=35 // pred_fallthru
            _
          %236 = vnop
        $region36: #{custom_cnn_forward.7} parent=31 // pred_fallthru
          _
      $region32: #{custom_cnn_forward.7} parent=5 // pred_fallthru
        _
      %p237 = scmp.le.s32.totalorder 1, %s11
      %p238 = scmp.lt.s32.totalorder %s11, 3
      %p239 = pnand %p237, %p238
      %p240 = pneg %p239
      // Predicated region
      $region59: #{custom_cnn_forward.7} parent=5 // pred_check
        _
      $region60: #{custom_cnn_forward.7} parent=5 // pred_check_branch
        %242 = sbr.rel (%p239) target = $region62
      $region61: #{custom_cnn_forward.7} parent=5 // pred_region
        %s243 = ssub.s32 %s11, 1
        %s244 = sand.u32 %s24, 1
        %s245 = sand.u32 %s24, 1
        %s246 = smul.addr %s245, 80
        %s247 = scalar_lea.vmem [#allocation2], %s246
        // Predicated region
        $region63: #{custom_cnn_forward.7} parent=61 // pred_check
          %p248 = pneg %p37
        $region64: #{custom_cnn_forward.7} parent=61 // pred_check_branch
          %250 = sbr.rel (%p248) target = $region66
        $region65: #{custom_cnn_forward.7} parent=61 // pred_region
          _
        $region66: #{custom_cnn_forward.7} parent=61 // pred_fallthru
          _
        %s251 = sand.u32 %s24, 1
        %s252 = sand.u32 %s24, 1
        %s253 = smul.addr %s252, 80
        %s254 = scalar_lea.vmem [#allocation2], %s253
        %p255 = pneg %p37
        %p256 = pneg %p34
        %p257 = pneg %p58
        %p258 = pneg %p55
        %p259 = pneg %p79
        %p260 = pneg %p76
        %p261 = pneg %p100
        %p262 = pneg %p97
        %p263 = pneg %p121
        %p264 = pneg %p118
        %p265 = pneg %p147
        %p266 = pneg %p144
        %p267 = scmp.lt.s32.totalorder %s16, 1
        %s268 = scalar_select %p267, %s16, 1
        %s269 = scalar_lea.vmem %s5, %s268
        %p270 = scmp.lt.s32.totalorder %s16, 1
        %s271 = scalar_select %p270, %s16, 1
        %s272 = scalar_lea.vmem %s5, %s271
        %v274 = vld [vmem:[%s1] sm:$0xf]
        %v275 = vld [vmem:[%s1 + $0x4] sm:$0xf]
        %v276 = vld [vmem:[%s1 + $0x8] sm:$0xf]
        %v277 = vld [vmem:[%s1 + $0xc] sm:$0xf]
        %v278 = vld [vmem:[%s1 + $0x10] sm:$0xf]
        %v279 = vld [vmem:[%s1 + $0x14] sm:$0xf]
        %v280 = vld [vmem:[%s1 + $0x18] sm:$0xf]
        %v281 = vld [vmem:[%s1 + $0x1c] sm:$0xf]
        %v282 = vld [vmem:[%s1 + $0x20] sm:$0xf]
        %v283 = vld [vmem:[%s1 + $0x24] sm:$0xf]
        %v284 = vld [vmem:[%s1 + $0x28] sm:$0xf]
        %v285 = vld [vmem:[%s1 + $0x2c] sm:$0xf]
        %v286 = vld [vmem:[%s1 + $0x30] sm:$0xf]
        %v287 = vld [vmem:[%s1 + $0x34] sm:$0xf]
        %v288 = vld [vmem:[%s1 + $0x38] sm:$0xf]
        %v289 = vld [vmem:[%s1 + $0x3c] sm:$0xf]
        %v290 = vld [vmem:[%s1 + $0x40] sm:$0xf]
        %v291 = vld [vmem:[%s1 + $0x44] sm:$0xf]
        %v292 = vld [vmem:[%s1 + $0x48] sm:$0xf]
        %v293 = vld [vmem:[%s1 + $0x4c] sm:$0xf]
        %v294 = vld [vmem:[%s1 + $0x50] sm:$0xf]
        %v295 = vld [vmem:[%s1 + $0x54] sm:$0xf]
        %v296 = vld [vmem:[%s1 + $0x58] sm:$0xf]
        %v297 = vld [vmem:[%s1 + $0x5c] sm:$0xf]
        %v298 = vld [vmem:[%s1 + $0x60] sm:$0xf]
        %v299 = vld [vmem:[%s1 + $0x64] sm:$0xf]
        %v300 = vld [vmem:[%s1 + $0x68] sm:$0xf]
        %v301 = vld [vmem:[%s1 + $0x6c] sm:$0xf]
        %v302 = vld [vmem:[%s1 + $0x70] sm:$0xf]
        %v303 = vld [vmem:[%s1 + $0x74] sm:$0xf]
        %v304 = vld [vmem:[%s1 + $0x78] sm:$0xf]
        %v305 = vld [vmem:[%s1 + $0x7c] sm:$0xf]
        %v306 = vld [vmem:[%s1 + $0x80] sm:$0xf]
        %v307 = vld [vmem:[%s1 + $0x84] sm:$0xf]
        %v308 = vld [vmem:[%s1 + $0x88] sm:$0xf]
        %v309 = vld [vmem:[%s1 + $0x8c] sm:$0xf]
        %v310 = vld [vmem:[%s1 + $0x90] sm:$0xf]
        %v311 = vld [vmem:[%s1 + $0x94] sm:$0xf]
        %v312 = vld [vmem:[%s1 + $0x98] sm:$0xf]
        %v313 = vld [vmem:[%s1 + $0x9c] sm:$0xf]
        %v314 = vld [vmem:[%s1 + $0xa0] sm:$0xf]
        %v315 = vld [vmem:[%s1 + $0xa4] sm:$0xf]
        %v316 = vld [vmem:[%s1 + $0xa8] sm:$0xf]
        %v317 = vld [vmem:[%s1 + $0xac] sm:$0xf]
        %v318 = vld [vmem:[%s1 + $0xb0] sm:$0xf]
        %v319 = vld [vmem:[%s1 + $0xb4] sm:$0xf]
        %v320 = vld [vmem:[%s1 + $0xb8] sm:$0xf]
        %v321 = vld [vmem:[%s1 + $0xbc] sm:$0xf]
        %v322 = vld [vmem:[%s1 + $0xc0] sm:$0xf]
        %v323 = vld [vmem:[%s1 + $0xc4] sm:$0xf]
        %v324 = vld [vmem:[%s1 + $0xc8] sm:$0xf]
        %v325 = vld [vmem:[%s1 + $0xcc] sm:$0xf]
        %v326 = vld [vmem:[%s1 + $0xd0] sm:$0xf]
        %v327 = vld [vmem:[%s1 + $0xd4] sm:$0xf]
        %v328 = vld [vmem:[%s1 + $0xd8] sm:$0xf]
        %v329 = vld [vmem:[%s1 + $0xdc] sm:$0xf]
        %v330 = vld [vmem:[%s1 + $0xe0] sm:$0xf]
        %v331 = vld [vmem:[%s1 + $0xe4] sm:$0xf]
        %v332 = vld [vmem:[%s1 + $0xe8] sm:$0xf]
        %v333 = vld [vmem:[%s1 + $0xec] sm:$0xf]
        %v334 = vld [vmem:[%s1 + $0xf0] sm:$0xf]
        %v335 = vld [vmem:[%s1 + $0xf4] sm:$0xf]
        %v336 = vld [vmem:[%s1 + $0xf8] sm:$0xf]
        %v337 = vld [vmem:[%s1 + $0xfc] sm:$0xf]
        %v338 = vld [vmem:[%s1 + $0x100] sm:$0xf]
        %v339 = vld [vmem:[%s1 + $0x104] sm:$0xf]
        %v340 = vld [vmem:[%s1 + $0x108] sm:$0xf]
        %v341 = vld [vmem:[%s1 + $0x10c] sm:$0xf]
        %v342 = vld [vmem:[%s1 + $0x110] sm:$0xf]
        %v343 = vld [vmem:[%s1 + $0x114] sm:$0xf]
        %v344 = vld [vmem:[%s1 + $0x118] sm:$0xf]
        %v345 = vld [vmem:[%s1 + $0x11c] sm:$0xf]
        %v346 = vld [vmem:[%s247] sm:$0xff]
        %v347 = vld [vmem:[%s247 + $0x8] sm:$0xff]
        %v348 = vld [vmem:[%s247 + $0x10] sm:$0xf]
        %v352 = vunpack.c.l.b16 %v346
        %v353 = vunpack.c.h.b16 %v346
        %v354 = vunpack.c.l.b16 %v347
        %v355 = vunpack.c.h.b16 %v347
        %v356 = vunpack.c.l.b16 %v348
        %v357 = vpack.c.b16 %v352, %v352
        %v358 = vpack.c.b16 %v353, %v353
        %v359 = vpack.c.b16 %v354, %v354
        %v360 = vpack.c.b16 %v355, %v355
        %v361 = vpack.c.b16 %v356, %v356
        %v438 = vunpack.c.l.b16 %v274
        %v439 = vunpack.c.l.b16 %v275
        %v440 = vunpack.c.l.b16 %v276
        %v441 = vunpack.c.l.b16 %v277
        %v442 = vunpack.c.l.b16 %v278
        %v443 = vunpack.c.l.b16 %v279
        %v444 = vunpack.c.l.b16 %v280
        %v445 = vunpack.c.l.b16 %v281
        %v446 = vunpack.c.l.b16 %v282
        %v447 = vunpack.c.l.b16 %v283
        %v448 = vunpack.c.l.b16 %v284
        %v449 = vunpack.c.l.b16 %v285
        %v450 = vunpack.c.l.b16 %v286
        %v451 = vunpack.c.l.b16 %v287
        %v452 = vunpack.c.l.b16 %v288
        %v453 = vunpack.c.l.b16 %v289
        %v454 = vunpack.c.l.b16 %v290
        %v455 = vunpack.c.l.b16 %v291
        %v456 = vunpack.c.l.b16 %v292
        %v457 = vunpack.c.l.b16 %v293
        %v458 = vunpack.c.l.b16 %v294
        %v459 = vunpack.c.l.b16 %v295
        %v460 = vunpack.c.l.b16 %v296
        %v461 = vunpack.c.l.b16 %v297
        %v462 = vunpack.c.l.b16 %v298
        %v463 = vunpack.c.l.b16 %v299
        %v464 = vunpack.c.l.b16 %v300
        %v465 = vunpack.c.l.b16 %v301
        %v466 = vunpack.c.l.b16 %v302
        %v467 = vunpack.c.l.b16 %v303
        %v468 = vunpack.c.l.b16 %v304
        %v469 = vunpack.c.l.b16 %v305
        %v470 = vunpack.c.l.b16 %v306
        %v471 = vunpack.c.l.b16 %v307
        %v472 = vunpack.c.l.b16 %v308
        %v473 = vunpack.c.l.b16 %v309
        %v474 = vunpack.c.l.b16 %v310
        %v475 = vunpack.c.l.b16 %v311
        %v476 = vunpack.c.l.b16 %v312
        %v477 = vunpack.c.l.b16 %v313
        %v478 = vunpack.c.l.b16 %v314
        %v479 = vunpack.c.l.b16 %v315
        %v480 = vunpack.c.l.b16 %v316
        %v481 = vunpack.c.l.b16 %v317
        %v482 = vunpack.c.l.b16 %v318
        %v483 = vunpack.c.l.b16 %v319
        %v484 = vunpack.c.l.b16 %v320
        %v485 = vunpack.c.l.b16 %v321
        %v486 = vunpack.c.l.b16 %v322
        %v487 = vunpack.c.l.b16 %v323
        %v488 = vunpack.c.l.b16 %v324
        %v489 = vunpack.c.l.b16 %v325
        %v490 = vunpack.c.l.b16 %v326
        %v491 = vunpack.c.l.b16 %v327
        %v492 = vunpack.c.l.b16 %v328
        %v493 = vunpack.c.l.b16 %v329
        %v494 = vunpack.c.l.b16 %v330
        %v495 = vunpack.c.l.b16 %v331
        %v496 = vunpack.c.l.b16 %v332
        %v497 = vunpack.c.l.b16 %v333
        %v498 = vunpack.c.l.b16 %v334
        %v499 = vunpack.c.l.b16 %v335
        %v500 = vunpack.c.l.b16 %v336
        %v501 = vunpack.c.l.b16 %v337
        %v502 = vunpack.c.l.b16 %v338
        %v503 = vunpack.c.l.b16 %v339
        %v504 = vunpack.c.l.b16 %v340
        %v505 = vunpack.c.l.b16 %v341
        %v506 = vunpack.c.l.b16 %v342
        %v507 = vunpack.c.l.b16 %v343
        %v508 = vunpack.c.l.b16 %v344
        %v509 = vunpack.c.l.b16 %v345
        %v510 = vpack.c.b16 %v439, %v438
        %v511 = vpack.c.b16 %v441, %v440
        %v512 = vpack.c.b16 %v443, %v442
        %v513 = vpack.c.b16 %v445, %v444
        %v514 = vpack.c.b16 %v447, %v446
        %v515 = vpack.c.b16 %v449, %v448
        %v516 = vpack.c.b16 %v451, %v450
        %v517 = vpack.c.b16 %v453, %v452
        %v518 = vpack.c.b16 %v455, %v454
        %v519 = vpack.c.b16 %v457, %v456
        %v520 = vpack.c.b16 %v459, %v458
        %v521 = vpack.c.b16 %v461, %v460
        %v522 = vpack.c.b16 %v463, %v462
        %v523 = vpack.c.b16 %v465, %v464
        %v524 = vpack.c.b16 %v467, %v466
        %v525 = vpack.c.b16 %v469, %v468
        %v526 = vpack.c.b16 %v471, %v470
        %v527 = vpack.c.b16 %v473, %v472
        %v528 = vpack.c.b16 %v475, %v474
        %v529 = vpack.c.b16 %v477, %v476
        %v530 = vpack.c.b16 %v479, %v478
        %v531 = vpack.c.b16 %v481, %v480
        %v532 = vpack.c.b16 %v483, %v482
        %v533 = vpack.c.b16 %v485, %v484
        %v534 = vpack.c.b16 %v487, %v486
        %v535 = vpack.c.b16 %v489, %v488
        %v536 = vpack.c.b16 %v491, %v490
        %v537 = vpack.c.b16 %v493, %v492
        %v538 = vpack.c.b16 %v495, %v494
        %v539 = vpack.c.b16 %v497, %v496
        %v540 = vpack.c.b16 %v499, %v498
        %v541 = vpack.c.b16 %v501, %v500
        %v542 = vpack.c.b16 %v503, %v502
        %v543 = vpack.c.b16 %v505, %v504
        %v544 = vpack.c.b16 %v507, %v506
        %v545 = vpack.c.b16 %v509, %v508
        %vm582 = vcmask 523264
        %v584 = vsel %vm582, %v361, 0
        %586 = vmatprep.subr.bf16.mxu0 0
        %587 = vmatpush1.bf16.msra.mxu0 %v517
        %588 = vmatprep.subr.bf16.mxu0 0
        %589 = vmatpush1.bf16.msra.mxu0 %v516
        %590 = vmatprep.subr.bf16.mxu0 0
        %591 = vmatpush1.bf16.msra.mxu0 %v515
        %592 = vmatprep.subr.bf16.mxu0 0
        %593 = vmatpush1.bf16.msra.mxu0 %v514
        %594 = vmatprep.subr.bf16.mxu0 0
        %595 = vmatpush1.bf16.msra.mxu0 %v513
        %596 = vmatprep.subr.bf16.mxu0 0
        %597 = vmatpush1.bf16.msra.mxu0 %v512
        %598 = vmatprep.subr.bf16.mxu0 0
        %599 = vmatpush1.bf16.msra.mxu0 %v511
        %600 = vmatprep.subr.bf16.mxu0 0
        %601 = vmatpush1.bf16.msra.mxu0 %v510
        %602 = vmatprep.subr.bf16.mxu0 0
        %603 = vmatpush2.bf16.msra.mxu0 %v525
        %604 = vmatprep.subr.bf16.mxu0 0
        %605 = vmatpush2.bf16.msra.mxu0 %v524
        %606 = vmatprep.subr.bf16.mxu0 0
        %607 = vmatpush2.bf16.msra.mxu0 %v523
        %608 = vmatprep.subr.bf16.mxu0 0
        %609 = vmatpush2.bf16.msra.mxu0 %v522
        %610 = vmatprep.subr.bf16.mxu0 0
        %611 = vmatpush2.bf16.msra.mxu0 %v521
        %612 = vmatprep.subr.bf16.mxu0 0
        %613 = vmatpush2.bf16.msra.mxu0 %v520
        %614 = vmatprep.subr.bf16.mxu0 0
        %615 = vmatpush2.bf16.msra.mxu0 %v519
        %616 = vmatprep.subr.bf16.mxu0 0
        %617 = vmatpush2.bf16.msra.mxu0 %v518
        %618 = vmatprep.mubr.bf16.mxu0 %v358
        %619 = vmatmul.mubr.bf16.gmra.mxu0 %v357
        %v620 = vpop.f32.mrf.mxu0
        %v621 = vadd.f32 0.0, %v620
        %v622 = vpop.f32.mrf.mxu0
        %v623 = vpop.f32.mrf.mxu0
        %v624 = vpop.f32.mrf.mxu0
        %625 = vdwg.mxu0
        %626 = vmatprep.subr.bf16.mxu0 0
        %627 = vmatpush1.bf16.msra.mxu0 %v533
        %628 = vmatprep.subr.bf16.mxu0 0
        %629 = vmatpush1.bf16.msra.mxu0 %v532
        %630 = vmatprep.subr.bf16.mxu0 0
        %631 = vmatpush1.bf16.msra.mxu0 %v531
        %632 = vmatprep.subr.bf16.mxu0 0
        %633 = vmatpush1.bf16.msra.mxu0 %v530
        %634 = vmatprep.subr.bf16.mxu0 0
        %635 = vmatpush1.bf16.msra.mxu0 %v529
        %636 = vmatprep.subr.bf16.mxu0 0
        %637 = vmatpush1.bf16.msra.mxu0 %v528
        %638 = vmatprep.subr.bf16.mxu0 0
        %639 = vmatpush1.bf16.msra.mxu0 %v527
        %640 = vmatprep.subr.bf16.mxu0 0
        %641 = vmatpush1.bf16.msra.mxu0 %v526
        %642 = vmatprep.subr.bf16.mxu0 0
        %643 = vmatpush2.bf16.msra.mxu0 %v541
        %644 = vmatprep.subr.bf16.mxu0 0
        %645 = vmatpush2.bf16.msra.mxu0 %v540
        %646 = vmatprep.subr.bf16.mxu0 0
        %647 = vmatpush2.bf16.msra.mxu0 %v539
        %648 = vmatprep.subr.bf16.mxu0 0
        %649 = vmatpush2.bf16.msra.mxu0 %v538
        %650 = vmatprep.subr.bf16.mxu0 0
        %651 = vmatpush2.bf16.msra.mxu0 %v537
        %652 = vmatprep.subr.bf16.mxu0 0
        %653 = vmatpush2.bf16.msra.mxu0 %v536
        %654 = vmatprep.subr.bf16.mxu0 0
        %655 = vmatpush2.bf16.msra.mxu0 %v535
        %656 = vmatprep.subr.bf16.mxu0 0
        %657 = vmatpush2.bf16.msra.mxu0 %v534
        %658 = vmatprep.mubr.bf16.mxu0 %v360
        %659 = vmatmul.mubr.bf16.gmra.mxu0 %v359
        %v660 = vpop.f32.mrf.mxu0
        %v661 = vadd.f32 %v621, %v660
        %v662 = vpop.f32.mrf.mxu0
        %v663 = vpop.f32.mrf.mxu0
        %v664 = vpop.f32.mrf.mxu0
        %665 = vdwg.mxu0
        %666 = vmatprep.subr.bf16.mxu0 0
        %667 = vmatpush1.bf16.msra.mxu0 0
        %668 = vmatprep.subr.bf16.mxu0 0
        %669 = vmatpush1.bf16.msra.mxu0 0
        %670 = vmatprep.subr.bf16.mxu0 0
        %671 = vmatpush1.bf16.msra.mxu0 0
        %672 = vmatprep.subr.bf16.mxu0 0
        %673 = vmatpush1.bf16.msra.mxu0 0
        %674 = vmatprep.subr.bf16.mxu0 0
        %675 = vmatpush1.bf16.msra.mxu0 %v545
        %676 = vmatprep.subr.bf16.mxu0 0
        %677 = vmatpush1.bf16.msra.mxu0 %v544
        %678 = vmatprep.subr.bf16.mxu0 0
        %679 = vmatpush1.bf16.msra.mxu0 %v543
        %680 = vmatprep.subr.bf16.mxu0 0
        %681 = vmatpush1.bf16.msra.mxu0 %v542
        %682 = vmatprep.subr.bf16.mxu0 0
        %683 = vmatpush2.bf16.msra.mxu0 0
        %684 = vmatprep.subr.bf16.mxu0 0
        %685 = vmatpush2.bf16.msra.mxu0 0
        %686 = vmatprep.subr.bf16.mxu0 0
        %687 = vmatpush2.bf16.msra.mxu0 0
        %688 = vmatprep.subr.bf16.mxu0 0
        %689 = vmatpush2.bf16.msra.mxu0 0
        %690 = vmatprep.subr.bf16.mxu0 0
        %691 = vmatpush2.bf16.msra.mxu0 0
        %692 = vmatprep.subr.bf16.mxu0 0
        %693 = vmatpush2.bf16.msra.mxu0 0
        %694 = vmatprep.subr.bf16.mxu0 0
        %695 = vmatpush2.bf16.msra.mxu0 0
        %696 = vmatprep.subr.bf16.mxu0 0
        %697 = vmatpush2.bf16.msra.mxu0 0
        %698 = vmatprep.mubr.bf16.mxu0 0
        %699 = vmatmul.mubr.bf16.gmra.mxu0 %v584
        %v700 = vpop.f32.mrf.mxu0
        %v701 = vadd.f32 %v661, %v700
        %v702 = vpop.f32.mrf.mxu0
        %v703 = vpop.f32.mrf.mxu0
        %v704 = vpop.f32.mrf.mxu0
        %705 = vdwg.mxu0
        %s706 = scalar_lea.vmem %s247, 20 [#allocation2]
        %v707 = vld [vmem:[%s706] sm:$0xff]
        %v708 = vld [vmem:[%s706 + $0x8] sm:$0xff]
        %v709 = vld [vmem:[%s706 + $0x10] sm:$0xf]
        %v713 = vunpack.c.l.b16 %v707
        %v714 = vunpack.c.h.b16 %v707
        %v715 = vunpack.c.l.b16 %v708
        %v716 = vunpack.c.h.b16 %v708
        %v717 = vunpack.c.l.b16 %v709
        %v718 = vpack.c.b16 %v713, %v713
        %v719 = vpack.c.b16 %v714, %v714
        %v720 = vpack.c.b16 %v715, %v715
        %v721 = vpack.c.b16 %v716, %v716
        %v722 = vpack.c.b16 %v717, %v717
        %v728 = vsel %vm582, %v722, 0
        %730 = vmatprep.subr.bf16.mxu0 0
        %731 = vmatpush1.bf16.msra.mxu0 %v517
        %732 = vmatprep.subr.bf16.mxu0 0
        %733 = vmatpush1.bf16.msra.mxu0 %v516
        %734 = vmatprep.subr.bf16.mxu0 0
        %735 = vmatpush1.bf16.msra.mxu0 %v515
        %736 = vmatprep.subr.bf16.mxu0 0
        %737 = vmatpush1.bf16.msra.mxu0 %v514
        %738 = vmatprep.subr.bf16.mxu0 0
        %739 = vmatpush1.bf16.msra.mxu0 %v513
        %740 = vmatprep.subr.bf16.mxu0 0
        %741 = vmatpush1.bf16.msra.mxu0 %v512
        %742 = vmatprep.subr.bf16.mxu0 0
        %743 = vmatpush1.bf16.msra.mxu0 %v511
        %744 = vmatprep.subr.bf16.mxu0 0
        %745 = vmatpush1.bf16.msra.mxu0 %v510
        %746 = vmatprep.subr.bf16.mxu0 0
        %747 = vmatpush2.bf16.msra.mxu0 %v525
        %748 = vmatprep.subr.bf16.mxu0 0
        %749 = vmatpush2.bf16.msra.mxu0 %v524
        %750 = vmatprep.subr.bf16.mxu0 0
        %751 = vmatpush2.bf16.msra.mxu0 %v523
        %752 = vmatprep.subr.bf16.mxu0 0
        %753 = vmatpush2.bf16.msra.mxu0 %v522
        %754 = vmatprep.subr.bf16.mxu0 0
        %755 = vmatpush2.bf16.msra.mxu0 %v521
        %756 = vmatprep.subr.bf16.mxu0 0
        %757 = vmatpush2.bf16.msra.mxu0 %v520
        %758 = vmatprep.subr.bf16.mxu0 0
        %759 = vmatpush2.bf16.msra.mxu0 %v519
        %760 = vmatprep.subr.bf16.mxu0 0
        %761 = vmatpush2.bf16.msra.mxu0 %v518
        %762 = vmatprep.mubr.bf16.mxu0 %v719
        %763 = vmatmul.mubr.bf16.gmra.mxu0 %v718
        %v764 = vpop.f32.mrf.mxu0
        %v765 = vadd.f32 0.0, %v764
        %v766 = vpop.f32.mrf.mxu0
        %v767 = vpop.f32.mrf.mxu0
        %v768 = vpop.f32.mrf.mxu0
        %769 = vdwg.mxu0
        %770 = vmatprep.subr.bf16.mxu0 0
        %771 = vmatpush1.bf16.msra.mxu0 %v533
        %772 = vmatprep.subr.bf16.mxu0 0
        %773 = vmatpush1.bf16.msra.mxu0 %v532
        %774 = vmatprep.subr.bf16.mxu0 0
        %775 = vmatpush1.bf16.msra.mxu0 %v531
        %776 = vmatprep.subr.bf16.mxu0 0
        %777 = vmatpush1.bf16.msra.mxu0 %v530
        %778 = vmatprep.subr.bf16.mxu0 0
        %779 = vmatpush1.bf16.msra.mxu0 %v529
        %780 = vmatprep.subr.bf16.mxu0 0
        %781 = vmatpush1.bf16.msra.mxu0 %v528
        %782 = vmatprep.subr.bf16.mxu0 0
        %783 = vmatpush1.bf16.msra.mxu0 %v527
        %784 = vmatprep.subr.bf16.mxu0 0
        %785 = vmatpush1.bf16.msra.mxu0 %v526
        %786 = vmatprep.subr.bf16.mxu0 0
        %787 = vmatpush2.bf16.msra.mxu0 %v541
        %788 = vmatprep.subr.bf16.mxu0 0
        %789 = vmatpush2.bf16.msra.mxu0 %v540
        %790 = vmatprep.subr.bf16.mxu0 0
        %791 = vmatpush2.bf16.msra.mxu0 %v539
        %792 = vmatprep.subr.bf16.mxu0 0
        %793 = vmatpush2.bf16.msra.mxu0 %v538
        %794 = vmatprep.subr.bf16.mxu0 0
        %795 = vmatpush2.bf16.msra.mxu0 %v537
        %796 = vmatprep.subr.bf16.mxu0 0
        %797 = vmatpush2.bf16.msra.mxu0 %v536
        %798 = vmatprep.subr.bf16.mxu0 0
        %799 = vmatpush2.bf16.msra.mxu0 %v535
        %800 = vmatprep.subr.bf16.mxu0 0
        %801 = vmatpush2.bf16.msra.mxu0 %v534
        %802 = vmatprep.mubr.bf16.mxu0 %v721
        %803 = vmatmul.mubr.bf16.gmra.mxu0 %v720
        %v804 = vpop.f32.mrf.mxu0
        %v805 = vadd.f32 %v765, %v804
        %v806 = vpop.f32.mrf.mxu0
        %v807 = vpop.f32.mrf.mxu0
        %v808 = vpop.f32.mrf.mxu0
        %809 = vdwg.mxu0
        %810 = vmatprep.subr.bf16.mxu0 0
        %811 = vmatpush1.bf16.msra.mxu0 0
        %812 = vmatprep.subr.bf16.mxu0 0
        %813 = vmatpush1.bf16.msra.mxu0 0
        %814 = vmatprep.subr.bf16.mxu0 0
        %815 = vmatpush1.bf16.msra.mxu0 0
        %816 = vmatprep.subr.bf16.mxu0 0
        %817 = vmatpush1.bf16.msra.mxu0 0
        %818 = vmatprep.subr.bf16.mxu0 0
        %819 = vmatpush1.bf16.msra.mxu0 %v545
        %820 = vmatprep.subr.bf16.mxu0 0
        %821 = vmatpush1.bf16.msra.mxu0 %v544
        %822 = vmatprep.subr.bf16.mxu0 0
        %823 = vmatpush1.bf16.msra.mxu0 %v543
        %824 = vmatprep.subr.bf16.mxu0 0
        %825 = vmatpush1.bf16.msra.mxu0 %v542
        %826 = vmatprep.subr.bf16.mxu0 0
        %827 = vmatpush2.bf16.msra.mxu0 0
        %828 = vmatprep.subr.bf16.mxu0 0
        %829 = vmatpush2.bf16.msra.mxu0 0
        %830 = vmatprep.subr.bf16.mxu0 0
        %831 = vmatpush2.bf16.msra.mxu0 0
        %832 = vmatprep.subr.bf16.mxu0 0
        %833 = vmatpush2.bf16.msra.mxu0 0
        %834 = vmatprep.subr.bf16.mxu0 0
        %835 = vmatpush2.bf16.msra.mxu0 0
        %836 = vmatprep.subr.bf16.mxu0 0
        %837 = vmatpush2.bf16.msra.mxu0 0
        %838 = vmatprep.subr.bf16.mxu0 0
        %839 = vmatpush2.bf16.msra.mxu0 0
        %840 = vmatprep.subr.bf16.mxu0 0
        %841 = vmatpush2.bf16.msra.mxu0 0
        %842 = vmatprep.mubr.bf16.mxu0 0
        %843 = vmatmul.mubr.bf16.gmra.mxu0 %v728
        %v844 = vpop.f32.mrf.mxu0
        %v845 = vadd.f32 %v805, %v844
        %v846 = vpop.f32.mrf.mxu0
        %v847 = vpop.f32.mrf.mxu0
        %v848 = vpop.f32.mrf.mxu0
        %849 = vdwg.mxu0
        %v850 = vmax.f32 %v701, %v845
        %s851 = scalar_lea.vmem %s247, 40 [#allocation2]
        %v852 = vld [vmem:[%s851] sm:$0xff]
        %v853 = vld [vmem:[%s851 + $0x8] sm:$0xff]
        %v854 = vld [vmem:[%s851 + $0x10] sm:$0xf]
        %v858 = vunpack.c.l.b16 %v852
        %v859 = vunpack.c.h.b16 %v852
        %v860 = vunpack.c.l.b16 %v853
        %v861 = vunpack.c.h.b16 %v853
        %v862 = vunpack.c.l.b16 %v854
        %v863 = vpack.c.b16 %v858, %v858
        %v864 = vpack.c.b16 %v859, %v859
        %v865 = vpack.c.b16 %v860, %v860
        %v866 = vpack.c.b16 %v861, %v861
        %v867 = vpack.c.b16 %v862, %v862
        %v873 = vsel %vm582, %v867, 0
        %875 = vmatprep.subr.bf16.mxu0 0
        %876 = vmatpush1.bf16.msra.mxu0 %v517
        %877 = vmatprep.subr.bf16.mxu0 0
        %878 = vmatpush1.bf16.msra.mxu0 %v516
        %879 = vmatprep.subr.bf16.mxu0 0
        %880 = vmatpush1.bf16.msra.mxu0 %v515
        %881 = vmatprep.subr.bf16.mxu0 0
        %882 = vmatpush1.bf16.msra.mxu0 %v514
        %883 = vmatprep.subr.bf16.mxu0 0
        %884 = vmatpush1.bf16.msra.mxu0 %v513
        %885 = vmatprep.subr.bf16.mxu0 0
        %886 = vmatpush1.bf16.msra.mxu0 %v512
        %887 = vmatprep.subr.bf16.mxu0 0
        %888 = vmatpush1.bf16.msra.mxu0 %v511
        %889 = vmatprep.subr.bf16.mxu0 0
        %890 = vmatpush1.bf16.msra.mxu0 %v510
        %891 = vmatprep.subr.bf16.mxu0 0
        %892 = vmatpush2.bf16.msra.mxu0 %v525
        %893 = vmatprep.subr.bf16.mxu0 0
        %894 = vmatpush2.bf16.msra.mxu0 %v524
        %895 = vmatprep.subr.bf16.mxu0 0
        %896 = vmatpush2.bf16.msra.mxu0 %v523
        %897 = vmatprep.subr.bf16.mxu0 0
        %898 = vmatpush2.bf16.msra.mxu0 %v522
        %899 = vmatprep.subr.bf16.mxu0 0
        %900 = vmatpush2.bf16.msra.mxu0 %v521
        %901 = vmatprep.subr.bf16.mxu0 0
        %902 = vmatpush2.bf16.msra.mxu0 %v520
        %903 = vmatprep.subr.bf16.mxu0 0
        %904 = vmatpush2.bf16.msra.mxu0 %v519
        %905 = vmatprep.subr.bf16.mxu0 0
        %906 = vmatpush2.bf16.msra.mxu0 %v518
        %907 = vmatprep.mubr.bf16.mxu0 %v864
        %908 = vmatmul.mubr.bf16.gmra.mxu0 %v863
        %v909 = vpop.f32.mrf.mxu0
        %v910 = vadd.f32 0.0, %v909
        %v911 = vpop.f32.mrf.mxu0
        %v912 = vpop.f32.mrf.mxu0
        %v913 = vpop.f32.mrf.mxu0
        %914 = vdwg.mxu0
        %915 = vmatprep.subr.bf16.mxu0 0
        %916 = vmatpush1.bf16.msra.mxu0 %v533
        %917 = vmatprep.subr.bf16.mxu0 0
        %918 = vmatpush1.bf16.msra.mxu0 %v532
        %919 = vmatprep.subr.bf16.mxu0 0
        %920 = vmatpush1.bf16.msra.mxu0 %v531
        %921 = vmatprep.subr.bf16.mxu0 0
        %922 = vmatpush1.bf16.msra.mxu0 %v530
        %923 = vmatprep.subr.bf16.mxu0 0
        %924 = vmatpush1.bf16.msra.mxu0 %v529
        %925 = vmatprep.subr.bf16.mxu0 0
        %926 = vmatpush1.bf16.msra.mxu0 %v528
        %927 = vmatprep.subr.bf16.mxu0 0
        %928 = vmatpush1.bf16.msra.mxu0 %v527
        %929 = vmatprep.subr.bf16.mxu0 0
        %930 = vmatpush1.bf16.msra.mxu0 %v526
        %931 = vmatprep.subr.bf16.mxu0 0
        %932 = vmatpush2.bf16.msra.mxu0 %v541
        %933 = vmatprep.subr.bf16.mxu0 0
        %934 = vmatpush2.bf16.msra.mxu0 %v540
        %935 = vmatprep.subr.bf16.mxu0 0
        %936 = vmatpush2.bf16.msra.mxu0 %v539
        %937 = vmatprep.subr.bf16.mxu0 0
        %938 = vmatpush2.bf16.msra.mxu0 %v538
        %939 = vmatprep.subr.bf16.mxu0 0
        %940 = vmatpush2.bf16.msra.mxu0 %v537
        %941 = vmatprep.subr.bf16.mxu0 0
        %942 = vmatpush2.bf16.msra.mxu0 %v536
        %943 = vmatprep.subr.bf16.mxu0 0
        %944 = vmatpush2.bf16.msra.mxu0 %v535
        %945 = vmatprep.subr.bf16.mxu0 0
        %946 = vmatpush2.bf16.msra.mxu0 %v534
        %947 = vmatprep.mubr.bf16.mxu0 %v866
        %948 = vmatmul.mubr.bf16.gmra.mxu0 %v865
        %v949 = vpop.f32.mrf.mxu0
        %v950 = vadd.f32 %v910, %v949
        %v951 = vpop.f32.mrf.mxu0
        %v952 = vpop.f32.mrf.mxu0
        %v953 = vpop.f32.mrf.mxu0
        %954 = vdwg.mxu0
        %955 = vmatprep.subr.bf16.mxu0 0
        %956 = vmatpush1.bf16.msra.mxu0 0
        %957 = vmatprep.subr.bf16.mxu0 0
        %958 = vmatpush1.bf16.msra.mxu0 0
        %959 = vmatprep.subr.bf16.mxu0 0
        %960 = vmatpush1.bf16.msra.mxu0 0
        %961 = vmatprep.subr.bf16.mxu0 0
        %962 = vmatpush1.bf16.msra.mxu0 0
        %963 = vmatprep.subr.bf16.mxu0 0
        %964 = vmatpush1.bf16.msra.mxu0 %v545
        %965 = vmatprep.subr.bf16.mxu0 0
        %966 = vmatpush1.bf16.msra.mxu0 %v544
        %967 = vmatprep.subr.bf16.mxu0 0
        %968 = vmatpush1.bf16.msra.mxu0 %v543
        %969 = vmatprep.subr.bf16.mxu0 0
        %970 = vmatpush1.bf16.msra.mxu0 %v542
        %971 = vmatprep.subr.bf16.mxu0 0
        %972 = vmatpush2.bf16.msra.mxu0 0
        %973 = vmatprep.subr.bf16.mxu0 0
        %974 = vmatpush2.bf16.msra.mxu0 0
        %975 = vmatprep.subr.bf16.mxu0 0
        %976 = vmatpush2.bf16.msra.mxu0 0
        %977 = vmatprep.subr.bf16.mxu0 0
        %978 = vmatpush2.bf16.msra.mxu0 0
        %979 = vmatprep.subr.bf16.mxu0 0
        %980 = vmatpush2.bf16.msra.mxu0 0
        %981 = vmatprep.subr.bf16.mxu0 0
        %982 = vmatpush2.bf16.msra.mxu0 0
        %983 = vmatprep.subr.bf16.mxu0 0
        %984 = vmatpush2.bf16.msra.mxu0 0
        %985 = vmatprep.subr.bf16.mxu0 0
        %986 = vmatpush2.bf16.msra.mxu0 0
        %987 = vmatprep.mubr.bf16.mxu0 0
        %988 = vmatmul.mubr.bf16.gmra.mxu0 %v873
        %v989 = vpop.f32.mrf.mxu0
        %v990 = vadd.f32 %v950, %v989
        %v991 = vpop.f32.mrf.mxu0
        %v992 = vpop.f32.mrf.mxu0
        %v993 = vpop.f32.mrf.mxu0
        %994 = vdwg.mxu0
        %v995 = vmax.f32 %v850, %v990
        %s996 = scalar_lea.vmem %s247, 60 [#allocation2]
        %v997 = vld [vmem:[%s996] sm:$0xff]
        %v998 = vld [vmem:[%s996 + $0x8] sm:$0xff]
        %v999 = vld [vmem:[%s996 + $0x10] sm:$0xf]
        %v1003 = vunpack.c.l.b16 %v997
        %v1004 = vunpack.c.h.b16 %v997
        %v1005 = vunpack.c.l.b16 %v998
        %v1006 = vunpack.c.h.b16 %v998
        %v1007 = vunpack.c.l.b16 %v999
        %v1008 = vpack.c.b16 %v1003, %v1003
        %v1009 = vpack.c.b16 %v1004, %v1004
        %v1010 = vpack.c.b16 %v1005, %v1005
        %v1011 = vpack.c.b16 %v1006, %v1006
        %v1012 = vpack.c.b16 %v1007, %v1007
        %v1018 = vsel %vm582, %v1012, 0
        %1020 = vmatprep.subr.bf16.mxu0 0
        %1021 = vmatpush1.bf16.msra.mxu0 %v517
        %1022 = vmatprep.subr.bf16.mxu0 0
        %1023 = vmatpush1.bf16.msra.mxu0 %v516
        %1024 = vmatprep.subr.bf16.mxu0 0
        %1025 = vmatpush1.bf16.msra.mxu0 %v515
        %1026 = vmatprep.subr.bf16.mxu0 0
        %1027 = vmatpush1.bf16.msra.mxu0 %v514
        %1028 = vmatprep.subr.bf16.mxu0 0
        %1029 = vmatpush1.bf16.msra.mxu0 %v513
        %1030 = vmatprep.subr.bf16.mxu0 0
        %1031 = vmatpush1.bf16.msra.mxu0 %v512
        %1032 = vmatprep.subr.bf16.mxu0 0
        %1033 = vmatpush1.bf16.msra.mxu0 %v511
        %1034 = vmatprep.subr.bf16.mxu0 0
        %1035 = vmatpush1.bf16.msra.mxu0 %v510
        %1036 = vmatprep.subr.bf16.mxu0 0
        %1037 = vmatpush2.bf16.msra.mxu0 %v525
        %1038 = vmatprep.subr.bf16.mxu0 0
        %1039 = vmatpush2.bf16.msra.mxu0 %v524
        %1040 = vmatprep.subr.bf16.mxu0 0
        %1041 = vmatpush2.bf16.msra.mxu0 %v523
        %1042 = vmatprep.subr.bf16.mxu0 0
        %1043 = vmatpush2.bf16.msra.mxu0 %v522
        %1044 = vmatprep.subr.bf16.mxu0 0
        %1045 = vmatpush2.bf16.msra.mxu0 %v521
        %1046 = vmatprep.subr.bf16.mxu0 0
        %1047 = vmatpush2.bf16.msra.mxu0 %v520
        %1048 = vmatprep.subr.bf16.mxu0 0
        %1049 = vmatpush2.bf16.msra.mxu0 %v519
        %1050 = vmatprep.subr.bf16.mxu0 0
        %1051 = vmatpush2.bf16.msra.mxu0 %v518
        %1052 = vmatprep.mubr.bf16.mxu0 %v1009
        %1053 = vmatmul.mubr.bf16.gmra.mxu0 %v1008
        %v1054 = vpop.f32.mrf.mxu0
        %v1055 = vadd.f32 0.0, %v1054
        %v1056 = vpop.f32.mrf.mxu0
        %v1057 = vpop.f32.mrf.mxu0
        %v1058 = vpop.f32.mrf.mxu0
        %1059 = vdwg.mxu0
        %1060 = vmatprep.subr.bf16.mxu0 0
        %1061 = vmatpush1.bf16.msra.mxu0 %v533
        %1062 = vmatprep.subr.bf16.mxu0 0
        %1063 = vmatpush1.bf16.msra.mxu0 %v532
        %1064 = vmatprep.subr.bf16.mxu0 0
        %1065 = vmatpush1.bf16.msra.mxu0 %v531
        %1066 = vmatprep.subr.bf16.mxu0 0
        %1067 = vmatpush1.bf16.msra.mxu0 %v530
        %1068 = vmatprep.subr.bf16.mxu0 0
        %1069 = vmatpush1.bf16.msra.mxu0 %v529
        %1070 = vmatprep.subr.bf16.mxu0 0
        %1071 = vmatpush1.bf16.msra.mxu0 %v528
        %1072 = vmatprep.subr.bf16.mxu0 0
        %1073 = vmatpush1.bf16.msra.mxu0 %v527
        %1074 = vmatprep.subr.bf16.mxu0 0
        %1075 = vmatpush1.bf16.msra.mxu0 %v526
        %1076 = vmatprep.subr.bf16.mxu0 0
        %1077 = vmatpush2.bf16.msra.mxu0 %v541
        %1078 = vmatprep.subr.bf16.mxu0 0
        %1079 = vmatpush2.bf16.msra.mxu0 %v540
        %1080 = vmatprep.subr.bf16.mxu0 0
        %1081 = vmatpush2.bf16.msra.mxu0 %v539
        %1082 = vmatprep.subr.bf16.mxu0 0
        %1083 = vmatpush2.bf16.msra.mxu0 %v538
        %1084 = vmatprep.subr.bf16.mxu0 0
        %1085 = vmatpush2.bf16.msra.mxu0 %v537
        %1086 = vmatprep.subr.bf16.mxu0 0
        %1087 = vmatpush2.bf16.msra.mxu0 %v536
        %1088 = vmatprep.subr.bf16.mxu0 0
        %1089 = vmatpush2.bf16.msra.mxu0 %v535
        %1090 = vmatprep.subr.bf16.mxu0 0
        %1091 = vmatpush2.bf16.msra.mxu0 %v534
        %1092 = vmatprep.mubr.bf16.mxu0 %v1011
        %1093 = vmatmul.mubr.bf16.gmra.mxu0 %v1010
        %v1094 = vpop.f32.mrf.mxu0
        %v1095 = vadd.f32 %v1055, %v1094
        %v1096 = vpop.f32.mrf.mxu0
        %v1097 = vpop.f32.mrf.mxu0
        %v1098 = vpop.f32.mrf.mxu0
        %1099 = vdwg.mxu0
        %1100 = vmatprep.subr.bf16.mxu0 0
        %1101 = vmatpush1.bf16.msra.mxu0 0
        %1102 = vmatprep.subr.bf16.mxu0 0
        %1103 = vmatpush1.bf16.msra.mxu0 0
        %1104 = vmatprep.subr.bf16.mxu0 0
        %1105 = vmatpush1.bf16.msra.mxu0 0
        %1106 = vmatprep.subr.bf16.mxu0 0
        %1107 = vmatpush1.bf16.msra.mxu0 0
        %1108 = vmatprep.subr.bf16.mxu0 0
        %1109 = vmatpush1.bf16.msra.mxu0 %v545
        %1110 = vmatprep.subr.bf16.mxu0 0
        %1111 = vmatpush1.bf16.msra.mxu0 %v544
        %1112 = vmatprep.subr.bf16.mxu0 0
        %1113 = vmatpush1.bf16.msra.mxu0 %v543
        %1114 = vmatprep.subr.bf16.mxu0 0
        %1115 = vmatpush1.bf16.msra.mxu0 %v542
        %1116 = vmatprep.subr.bf16.mxu0 0
        %1117 = vmatpush2.bf16.msra.mxu0 0
        %1118 = vmatprep.subr.bf16.mxu0 0
        %1119 = vmatpush2.bf16.msra.mxu0 0
        %1120 = vmatprep.subr.bf16.mxu0 0
        %1121 = vmatpush2.bf16.msra.mxu0 0
        %1122 = vmatprep.subr.bf16.mxu0 0
        %1123 = vmatpush2.bf16.msra.mxu0 0
        %1124 = vmatprep.subr.bf16.mxu0 0
        %1125 = vmatpush2.bf16.msra.mxu0 0
        %1126 = vmatprep.subr.bf16.mxu0 0
        %1127 = vmatpush2.bf16.msra.mxu0 0
        %1128 = vmatprep.subr.bf16.mxu0 0
        %1129 = vmatpush2.bf16.msra.mxu0 0
        %1130 = vmatprep.subr.bf16.mxu0 0
        %1131 = vmatpush2.bf16.msra.mxu0 0
        %1132 = vmatprep.mubr.bf16.mxu0 0
        %1133 = vmatmul.mubr.bf16.gmra.mxu0 %v1018
        %v1134 = vpop.f32.mrf.mxu0
        %v1135 = vadd.f32 %v1095, %v1134
        %v1136 = vpop.f32.mrf.mxu0
        %v1137 = vpop.f32.mrf.mxu0
        %v1138 = vpop.f32.mrf.mxu0
        %1139 = vdwg.mxu0
        %v1140 = vmax.f32 %v995, %v1135
        %v1141 = vld [vmem:[%s2] sm:$0x1]
        %v1143 = vlaneseq
        %v1144 = vshrl.u32 %v1143, 7
        %v1145 = vsub.s32 0, %v1144
        %v1146 = vrot.slane %v1141, %v1145
        %v1148 = vadd.f32 %v1140, %v1146
        %v1149 = vmax.f32 %v1148, 0.0
        %vm1150 = vcmask 1043456
        %v1151 = vsel %vm1150, %v1149, 0.0
        %v1152 = vrot.slane %v1151, 4
        %v1153 = vadd.f32 %v1151, %v1152
        %v1154 = vrot.slane %v1153, 2
        %v1155 = vadd.f32 %v1153, %v1154
        %v1156 = vrot.slane %v1155, 1
        %v1157 = vadd.f32 %v1155, %v1156
        %v1158 = vmul.f32 %v1157, 0.25
        %v1159 = vld [vmem:[%s3] sm:$0xff]
        %v1160 = vld [vmem:[%s3 + $0x8] sm:$0xff]
        %v1161 = vld [vmem:[%s3 + $0x10] sm:$0xff]
        %v1162 = vld [vmem:[%s3 + $0x18] sm:$0xff]
        %v1163 = vld [vmem:[%s3 + $0x20] sm:$0xff]
        %v1164 = vld [vmem:[%s3 + $0x28] sm:$0xff]
        %v1165 = vld [vmem:[%s3 + $0x30] sm:$0xff]
        %v1166 = vld [vmem:[%s3 + $0x38] sm:$0xff]
        %v1167 = vld [vmem:[%s3 + $0x40] sm:$0xff]
        %v1168 = vld [vmem:[%s3 + $0x48] sm:$0xff]
        %v1169 = vld [vmem:[%s3 + $0x50] sm:$0xff]
        %v1170 = vld [vmem:[%s3 + $0x58] sm:$0xff]
        %v1171 = vld [vmem:[%s3 + $0x60] sm:$0xff]
        %v1172 = vld [vmem:[%s3 + $0x68] sm:$0xff]
        %v1173 = vld [vmem:[%s3 + $0x70] sm:$0xff]
        %v1174 = vld [vmem:[%s3 + $0x78] sm:$0xff]
        %v1175 = vld [vmem:[%s4] sm:$0x1]
        %1176 = vmatprep.subr.mxu0 0.0
        %1177 = vmatpush1.msra.mxu0 %v1174
        %1178 = vmatprep.subr.mxu0 0.0
        %1179 = vmatpush1.msra.mxu0 %v1173
        %1180 = vmatprep.subr.mxu0 0.0
        %1181 = vmatpush1.msra.mxu0 %v1172
        %1182 = vmatprep.subr.mxu0 0.0
        %1183 = vmatpush1.msra.mxu0 %v1171
        %1184 = vmatprep.subr.mxu0 0.0
        %1185 = vmatpush1.msra.mxu0 %v1170
        %1186 = vmatprep.subr.mxu0 0.0
        %1187 = vmatpush1.msra.mxu0 %v1169
        %1188 = vmatprep.subr.mxu0 0.0
        %1189 = vmatpush1.msra.mxu0 %v1168
        %1190 = vmatprep.subr.mxu0 0.0
        %1191 = vmatpush1.msra.mxu0 %v1167
        %1192 = vmatprep.subr.mxu0 0.0
        %1193 = vmatpush1.msra.mxu0 %v1166
        %1194 = vmatprep.subr.mxu0 0.0
        %1195 = vmatpush1.msra.mxu0 %v1165
        %1196 = vmatprep.subr.mxu0 0.0
        %1197 = vmatpush1.msra.mxu0 %v1164
        %1198 = vmatprep.subr.mxu0 0.0
        %1199 = vmatpush1.msra.mxu0 %v1163
        %1200 = vmatprep.subr.mxu0 0.0
        %1201 = vmatpush1.msra.mxu0 %v1162
        %1202 = vmatprep.subr.mxu0 0.0
        %1203 = vmatpush1.msra.mxu0 %v1161
        %1204 = vmatprep.subr.mxu0 0.0
        %1205 = vmatpush1.msra.mxu0 %v1160
        %1206 = vmatprep.subr.mxu0 0.0
        %1207 = vmatpush1.msra.mxu0 %v1159
        %1208 = vmatprep.subr.mxu0 0.0
        %1209 = vmatpush2.msra.mxu0 0.0
        %1210 = vmatprep.subr.mxu0 0.0
        %1211 = vmatpush2.msra.mxu0 0.0
        %1212 = vmatprep.subr.mxu0 0.0
        %1213 = vmatpush2.msra.mxu0 0.0
        %1214 = vmatprep.subr.mxu0 0.0
        %1215 = vmatpush2.msra.mxu0 0.0
        %1216 = vmatprep.subr.mxu0 0.0
        %1217 = vmatpush2.msra.mxu0 0.0
        %1218 = vmatprep.subr.mxu0 0.0
        %1219 = vmatpush2.msra.mxu0 0.0
        %1220 = vmatprep.subr.mxu0 0.0
        %1221 = vmatpush2.msra.mxu0 0.0
        %1222 = vmatprep.subr.mxu0 0.0
        %1223 = vmatpush2.msra.mxu0 0.0
        %1224 = vmatprep.subr.mxu0 0.0
        %1225 = vmatpush2.msra.mxu0 0.0
        %1226 = vmatprep.subr.mxu0 0.0
        %1227 = vmatpush2.msra.mxu0 0.0
        %1228 = vmatprep.subr.mxu0 0.0
        %1229 = vmatpush2.msra.mxu0 0.0
        %1230 = vmatprep.subr.mxu0 0.0
        %1231 = vmatpush2.msra.mxu0 0.0
        %1232 = vmatprep.subr.mxu0 0.0
        %1233 = vmatpush2.msra.mxu0 0.0
        %1234 = vmatprep.subr.mxu0 0.0
        %1235 = vmatpush2.msra.mxu0 0.0
        %1236 = vmatprep.subr.mxu0 0.0
        %1237 = vmatpush2.msra.mxu0 0.0
        %1238 = vmatprep.subr.mxu0 0.0
        %1239 = vmatpush2.msra.mxu0 0.0
        %1240 = vmatprep.mubr.f32.mxu0 0.0
        %1241 = vmatmul.mubr.f32.gmra.mxu0 %v1158
        %v1242 = vpop.f32.mrf.mxu0
        %v1243 = vadd.f32 %v1175, %v1242
        %v1244 = vpop.f32.mrf.mxu0
        %1245 = vdwg.mxu0
        %1246 = vst [vmem:[%s272] sm:$0x1] %v1243
        %p1247 = scmp.lt.s32.totalorder %s16, 1
        %s1248 = scalar_select %p1247, %s16, 1
        %s1249 = scalar_lea.vmem %s5, %s1248
        // Predicated region
        $region67: #{custom_cnn_forward.7} parent=61 // pred_check
          %p1250 = pneg %p144
        $region68: #{custom_cnn_forward.7} parent=61 // pred_check_branch
          %1252 = sbr.rel (%p1250) target = $region70
        $region69: #{custom_cnn_forward.7} parent=61 // pred_region
          _
        $region70: #{custom_cnn_forward.7} parent=61 // pred_fallthru
          _
      $region62: #{custom_cnn_forward.7} parent=5 // pred_fallthru
        _
      %p1253 = scmp.le.s32.totalorder 2, %s11
      // Predicated region
      $region71: #{custom_cnn_forward.7} parent=5 // pred_check
        %p1254 = pneg %p1253
      $region72: #{custom_cnn_forward.7} parent=5 // pred_check_branch
        %1256 = sbr.rel (%p1254) target = $region74
      $region73: #{custom_cnn_forward.7} parent=5 // pred_region
        %s1257 = ssub.s32 %s11, 2
        // Predicated region
        $region75: #{custom_cnn_forward.7} parent=73 // pred_check
          %p1258 = pneg %p150
        $region76: #{custom_cnn_forward.7} parent=73 // pred_check_branch
          %1260 = sbr.rel (%p1258) target = $region78
        $region77: #{custom_cnn_forward.7} parent=73 // pred_region
          %p1261 = scmp.lt.s32.totalorder %s17, 1
          %s1262 = scalar_select %p1261, %s17, 1
          %s1263 = scalar_lea.vmem %s5, %s1262
        $region78: #{custom_cnn_forward.7} parent=73 // pred_fallthru
          _
      $region74: #{custom_cnn_forward.7} parent=5 // pred_fallthru
        _
    $region6: #{custom_cnn_forward.7} parent=1 // loop_footer
      %s15 = sadd.s32 1, %s11
    $region7: #{custom_cnn_forward.7} parent=1 // loop_footer_branch
      %10 = sbr.rel target = $region3
    $region8: #{custom_cnn_forward.7} parent=1 // loop_exit
      _

</llo_original>
